<compile_context>
chip_gen: v7x
topology: tpu7x:2x2x1
jax: 0.10.0
libtpu: 0.0.40
codegen_flags: <defaults>
</compile_context>

<pallas_src>
import jax
import jax.numpy as jnp
import numpy as np
from jax.experimental import pallas as pl
from jax.experimental.pallas import tpu as pltpu


# ----------------------------------------------------------------------------
# Per-generation scoped-VMEM limit.
# ----------------------------------------------------------------------------
def _vmem_limit_bytes(fallback=64 * 1024 * 1024):
    try:
        cap = getattr(pltpu.get_tpu_info(), "vmem_capacity_bytes", None)
    except Exception:
        cap = None
    if not cap:
        cap = fallback
    return int(cap) * 3 // 4


# ----------------------------------------------------------------------------
# Fused kernel: one (head, batch) grid point does the GCN step and the edge
# update for one layer, with adj kept edge-channel major (E, S, S) in VMEM.
# ----------------------------------------------------------------------------
def _make_fused_layer_kernel(n_prev, E):
    """Inputs (refs), in order:
         adj (1,1,E,S,S) | x0 (1,S,D0) | n_prev x g_j (1,1,S,Hd) | w0 (1,D0,Hd) |
         n_prev x wj (1,Hd,Hd) | b (1,1,Hd) | We (E,E) | Wn1^T (E,Hd) | Wn2 (Hd,E) | hw_b (1,E)
       Outputs: adj_next (1,1,E,S,S)  [aliased with adj's HBM buffer],  gAxW (1,1,S,Hd)."""

    def kernel(*refs):
        adj_ref = refs[0]
        x0_ref = refs[1]
        g_refs = refs[2:2 + n_prev]
        w0_ref = refs[2 + n_prev]
        w_refs = refs[3 + n_prev:3 + 2 * n_prev]
        b_ref, we_ref, wn1t_ref, wn2_ref, hwb_ref = refs[3 + 2 * n_prev:8 + 2 * n_prev]
        adj_out_ref = refs[8 + 2 * n_prev]
        g_out_ref = refs[9 + 2 * n_prev]

        f32 = jnp.float32
        adj3 = adj_ref[0, 0].astype(f32)            # (E, S, S) edge-channel slabs
        we = we_ref[...]                            # (E, E)
        hwb = hwb_ref[...]                          # (1, E)

        # ---- GCN step ------------------------------------------------------------
        # xw = [x0 | g_1 | ... | g_{l-1}] @ W, slab by slab: the concatenated activation
        # tensor is never materialised in HBM.
        xw = jnp.dot(x0_ref[0].astype(f32), w0_ref[0], preferred_element_type=f32)
        for j in range(n_prev):
            xw = xw + jnp.dot(g_refs[j][0, 0].astype(f32), w_refs[j][0],
                              preferred_element_type=f32)
        # adj_mean first (reassociated), then a single (S,S)@(S,Hd) MXU matmul.
        adj_mean = adj3[0]
        for e in range(1, E):
            adj_mean = adj_mean + adj3[e]
        adj_mean = adj_mean * (1.0 / E)
        ax = jnp.dot(adj_mean, xw, preferred_element_type=f32)
        # 2*b intentionally mirrors the two nn.Linear applications (bias added twice)
        # in the PyTorch module.
        g = jnp.maximum(ax + xw + 2.0 * b_ref[0], 0.0)          # (S, Hd) = gAxW
        g_out_ref[0, 0] = g.astype(g_out_ref.dtype)

        # ---- Edge update (highway), exact structure-aware form ---------------------
        # node1[s1,s2,:] = gAxW[s2,:]  -> values needed along lanes: gw1T = Wn1^T @ g^T.
        gw1t = jax.lax.dot_general(wn1t_ref[...], g, (((1,), (1,)), ((), ())),
                                   preferred_element_type=f32)  # (E, S)
        # node2[s1,s2,:] = gAxW[s1,:]  -> values stay along sublanes: gw2 = g @ Wn2.
        gw2 = jnp.dot(g, wn2_ref[...], preferred_element_type=f32)  # (S, E)
        for f in range(E):
            # Edge block of the highway Linear: adj'_f = sum_e We[e,f] * A_e
            # (no kron(I_S, We) selector, no (S*E)^2 operand, exact flop count).
            t = we[0:1, f:f + 1] * adj3[0]
            for e in range(1, E):
                t = t + we[e:e + 1, f:f + 1] * adj3[e]
            t = t + gw1t[f:f + 1, :]          # node1 @ Wn1   (row broadcast over s1)
            t = t + gw2[:, f:f + 1]           # node2 @ Wn2   (lane broadcast over s2)
            t = t + hwb[0:1, f:f + 1]         # highway bias
            adj_out_ref[0, 0, f] = t.astype(adj_out_ref.dtype)

    return kernel


def fused_gcn_edge_layer(adj_p, x0, g_prev, w0, w_prev, b, we, wn1t, wn2, hwb,
                         *, vmem_limit):
    """One fused GCN-step + edge-update layer over the (heads, batch) grid."""
    Hn, B, E, S, _ = adj_p.shape
    D0 = x0.shape[-1]
    Hd = w0.shape[-1]
    n_prev = len(g_prev)
    storage = adj_p.dtype

    in_specs = [
        pl.BlockSpec((1, 1, E, S, S), lambda h, bb: (h, bb, 0, 0, 0)),   # adj, edge-major
        pl.BlockSpec((1, S, D0), lambda h, bb: (bb, 0, 0)),              # x0 (shared by heads)
    ]
    in_specs += [pl.BlockSpec((1, 1, S, Hd), lambda h, bb: (h, bb, 0, 0))
                 for _ in range(n_prev)]                                 # earlier gAxW slabs
    in_specs += [pl.BlockSpec((1, D0, Hd), lambda h, bb: (h, 0, 0))]     # W rows for x0
    in_specs += [pl.BlockSpec((1, Hd, Hd), lambda h, bb: (h, 0, 0))
                 for _ in range(n_prev)]                                 # W rows for g_j
    in_specs += [
        pl.BlockSpec((1, 1, Hd), lambda h, bb: (h, 0, 0)),               # per-head bias
        pl.BlockSpec((E, E), lambda h, bb: (0, 0)),                      # We
        pl.BlockSpec((E, Hd), lambda h, bb: (0, 0)),                     # Wn1^T
        pl.BlockSpec((Hd, E), lambda h, bb: (0, 0)),                     # Wn2
        pl.BlockSpec((1, E), lambda h, bb: (0, 0)),                      # highway bias
    ]
    out_specs = (
        pl.BlockSpec((1, 1, E, S, S), lambda h, bb: (h, bb, 0, 0, 0)),
        pl.BlockSpec((1, 1, S, Hd), lambda h, bb: (h, bb, 0, 0)),
    )
    return pl.pallas_call(
        _make_fused_layer_kernel(n_prev, E),
        out_shape=(
            jax.ShapeDtypeStruct((Hn, B, E, S, S), storage),   # updated adj (in-place)
            jax.ShapeDtypeStruct((Hn, B, S, Hd), storage),     # gAxW
        ),
        grid=(Hn, B),
        in_specs=in_specs,
        out_specs=out_specs,
        input_output_aliases={0: 0},   # adj updated in the same HBM buffer every layer
        compiler_params=pltpu.CompilerParams(
            dimension_semantics=("parallel", "parallel"),
            vmem_limit_bytes=vmem_limit,
        ),
    )(adj_p, x0, *g_prev, w0, *w_prev, b, we, wn1t, wn2, hwb)


# ----------------------------------------------------------------------------
# Final output projection: row-tiled Linear(mem_dim*heads -> mem_dim).
# ----------------------------------------------------------------------------
def _linear_kernel(x_ref, w_ref, b_ref, o_ref):
    o_ref[...] = (jnp.dot(x_ref[...], w_ref[...], preferred_element_type=jnp.float32)
                  + b_ref[...])


def final_linear(x, w, b, *, vmem_limit, block_rows=128):
    B, S, Din = x.shape
    Dout = w.shape[-1]
    M = B * S
    x2 = x.reshape(M, Din)
    tm = block_rows
    n_blocks = pl.cdiv(M, tm)
    Mp = n_blocks * tm
    if Mp != M:                         # pad instead of collapsing to one giant block
        x2 = jnp.pad(x2, ((0, Mp - M), (0, 0)))
    out = pl.pallas_call(
        _linear_kernel,
        out_shape=jax.ShapeDtypeStruct((Mp, Dout), jnp.float32),
        grid=(n_blocks,),
        in_specs=[
            pl.BlockSpec((tm, Din), lambda i: (i, 0)),
            pl.BlockSpec((Din, Dout), lambda i: (0, 0)),
            pl.BlockSpec((1, Dout), lambda i: (0, 0)),
        ],
        out_specs=pl.BlockSpec((tm, Dout), lambda i: (i, 0)),
        compiler_params=pltpu.CompilerParams(
            dimension_semantics=("parallel",),
            vmem_limit_bytes=vmem_limit,
        ),
    )(x2, w, b)
    return out[:M].reshape(B, S, Dout)


# ----------------------------------------------------------------------------
# Module forward (plain-JAX glue mirroring the PyTorch control flow).
# ----------------------------------------------------------------------------
def multi_graph_conv_forward(params, adj_list, gcn_inputs, storage_dtype=jnp.float32):
    heads = params["heads"]
    layers = params["layers"]
    B, S, D0 = gcn_inputs.shape
    E = adj_list[0].shape[-1]
    Hd = params["weight_list"][0][0].shape[-1]
    vmem_limit = _vmem_limit_bytes()

    # Edge tensor repacked ONCE, edge-channel major: (heads, B, E, S, S).
    adj_p = jnp.stack([jnp.transpose(a, (0, 3, 1, 2)) for a in adj_list], axis=0)
    adj_p = adj_p.astype(storage_dtype)

    x0 = gcn_inputs.astype(jnp.float32)
    we = params["hw_we"]                  # (E, E)
    wn1t = params["hw_wn1"].T             # (E, Hd)
    wn2 = params["hw_wn2"]                # (Hd, E)
    hwb = params["hw_b"]                  # (1, E)

    g_slabs = []
    for l in range(layers):
        w_full = [params["weight_list"][i * layers + l][0] for i in range(heads)]
        b_l = jnp.stack([params["weight_list"][i * layers + l][1] for i in range(heads)])
        w0_l = jnp.stack([w[:D0] for w in w_full])                       # (heads, D0, Hd)
        w_prev = [jnp.stack([w[D0 + Hd * j:D0 + Hd * (j + 1)] for w in w_full])
                  for j in range(l)]                                     # each (heads, Hd, Hd)
        adj_p, g_l = fused_gcn_edge_layer(
            adj_p, x0, g_slabs, w0_l, w_prev, b_l, we, wn1t, wn2, hwb,
            vmem_limit=vmem_limit)
        # TODO(synk): gcn_drop (nn.Dropout) treated as identity (eval-mode semantics).
        g_slabs.append(g_l)

    # Final assembly: per head  concat_l gAxW_l + gcn_inputs,  then concat over heads.
    stacked = jnp.stack(g_slabs, axis=0).astype(jnp.float32)       # (layers, heads, B, S, Hd)
    per_head = jnp.transpose(stacked, (1, 2, 3, 0, 4)).reshape(heads, B, S, layers * Hd)
    per_head = per_head + gcn_inputs[None]
    final = jnp.transpose(per_head, (1, 2, 0, 3)).reshape(B, S, heads * layers * Hd)
    return final_linear(final, params["lin_w"], params["lin_b"], vmem_limit=vmem_limit)


# ----------------------------------------------------------------------------
# Pure-JAX reference (same math, no Pallas) for correctness check.
# ----------------------------------------------------------------------------
def reference_forward(params, adj_list, gcn_inputs):
    heads = params["heads"]
    layers = params["layers"]
    multi_head_list = []
    for i in range(heads):
        adj = adj_list[i]
        outputs = gcn_inputs
        cache_list = [outputs]
        output_list = []
        for l in range(layers):
            w, b = params["weight_list"][i * layers + l]
            adj_t = jnp.transpose(adj, (0, 3, 1, 2))                 # [B, E, S, S]
            ax = jnp.einsum("best,btd->besd", adj_t, outputs).mean(axis=1)
            axw = ax @ w + b + outputs @ w + b
            gAxW = jnp.maximum(axw, 0.0)
            cache_list.append(gAxW)
            n1 = gAxW[:, None, :, :]                                 # node1[b,s1,s2]=gAxW[b,s2]
            n2 = gAxW[:, :, None, :]                                 # node2[b,s1,s2]=gAxW[b,s1]
            adj = (adj @ params["hw_we"]
                   + n1 @ params["hw_wn1"]
                   + n2 @ params["hw_wn2"]
                   + params["hw_b"][None, :, :])
            outputs = jnp.concatenate(cache_list, axis=2)
            output_list.append(gAxW)
        gcn_outputs = jnp.concatenate(output_list, axis=2) + gcn_inputs
        multi_head_list.append(gcn_outputs)
    final_output = jnp.concatenate(multi_head_list, axis=2)
    B, S, Din = final_output.shape
    return (final_output.reshape(B * S, Din) @ params["lin_w"]
            + params["lin_b"]).reshape(B, S, -1)


# ----------------------------------------------------------------------------
# Deterministic parameter construction (shapes from __init__).
# ----------------------------------------------------------------------------
def make_params(key, mem_dim, dep_embed_dim, layers, heads):
    head_dim = mem_dim // layers
    params = {"heads": heads, "layers": layers}
    keys = jax.random.split(key, heads * layers * 2 + 6)
    ki = 0
    weight_list = []
    for i in range(heads):
        for j in range(layers):
            din = mem_dim + head_dim * j
            w = 0.1 * jax.random.normal(keys[ki], (din, head_dim), jnp.float32); ki += 1
            b = 0.1 * jax.random.normal(keys[ki], (1, head_dim), jnp.float32); ki += 1
            weight_list.append((w, b))
    params["weight_list"] = weight_list
    # Edgeupdate highway: Linear(2*head_dim + dep_embed_dim -> dep_embed_dim), split into
    # [edge | node1 | node2] blocks (right-multiply form), matching the PyTorch concat order.
    params["hw_we"] = 0.1 * jax.random.normal(keys[ki], (dep_embed_dim, dep_embed_dim), jnp.float32); ki += 1
    params["hw_wn1"] = 0.1 * jax.random.normal(keys[ki], (head_dim, dep_embed_dim), jnp.float32); ki += 1
    params["hw_wn2"] = 0.1 * jax.random.normal(keys[ki], (head_dim, dep_embed_dim), jnp.float32); ki += 1
    params["hw_b"] = 0.1 * jax.random.normal(keys[ki], (1, dep_embed_dim), jnp.float32); ki += 1
    # Final projection: Linear(mem_dim*heads -> mem_dim)
    params["lin_w"] = 0.1 * jax.random.normal(keys[ki], (mem_dim * heads, mem_dim), jnp.float32); ki += 1
    params["lin_b"] = 0.1 * jax.random.normal(keys[ki], (1, mem_dim), jnp.float32); ki += 1
    return params


if __name__ == "__main__":
    B, S = 2, 8
    mem_dim, layers, heads, dep_embed_dim = 32, 2, 2, 8

    root = jax.random.PRNGKey(0)
    k_par, k_x, k_adj = jax.random.split(root, 3)
    params = make_params(k_par, mem_dim, dep_embed_dim, layers, heads)

    gcn_inputs = jax.random.normal(k_x, (B, S, mem_dim), jnp.float32)
    adj_keys = jax.random.split(k_adj, heads)
    adj_list = [
        jax.random.uniform(adj_keys[i], (B, S, S, dep_embed_dim), jnp.float32)
        for i in range(heads)
    ]

    # --- f32 storage: exact correctness check ---
    fwd_f32 = jax.jit(lambda a, x: multi_graph_conv_forward(params, a, x, jnp.float32))
    out = jax.block_until_ready(fwd_f32(adj_list, gcn_inputs))

    ref = reference_forward(params, adj_list, gcn_inputs)
    np.testing.assert_allclose(np.asarray(out), np.asarray(ref), rtol=3e-4, atol=3e-4)
    assert out.shape == (B, S, mem_dim)

    # --- bf16 storage path (halves adj/gAxW HBM traffic; f32 accumulation): smoke test ---
    fwd_bf16 = jax.jit(lambda a, x: multi_graph_conv_forward(params, a, x, jnp.bfloat16))
    out_bf16 = jax.block_until_ready(fwd_bf16(adj_list, gcn_inputs))
    assert out_bf16.shape == (B, S, mem_dim)
    assert bool(jnp.all(jnp.isfinite(out_bf16.astype(jnp.float32))))

    print("KERNEL_OK")
</pallas_src>

<mosaic_0001>
module attributes {stable_mosaic.version = 11 : i64} {
  func.func @kernel(%arg0: i32, %arg1: i32, %arg2: memref<1x1x8x8x8xf32, #tpu.memory_space<vmem>>, %arg3: memref<1x8x32xf32, #tpu.memory_space<vmem>>, %arg4: memref<1x32x16xf32, #tpu.memory_space<vmem>>, %arg5: memref<1x1x16xf32, #tpu.memory_space<vmem>>, %arg6: memref<8x8xf32, #tpu.memory_space<vmem>>, %arg7: memref<8x16xf32, #tpu.memory_space<vmem>>, %arg8: memref<16x8xf32, #tpu.memory_space<vmem>>, %arg9: memref<1x8xf32, #tpu.memory_space<vmem>>, %arg10: memref<1x1x8x8x8xf32, #tpu.memory_space<vmem>>, %arg11: memref<1x1x8x16xf32, #tpu.memory_space<vmem>>) attributes {dimension_semantics = [#tpu.dimension_semantics<parallel>, #tpu.dimension_semantics<parallel>], iteration_bounds = array<i64: 2, 2>, scalar_prefetch = 0 : i64, scratch_operands = 0 : i64, tpu.core_type = #tpu.core_type<tc>, window_params = [{transform_indices = @transform_0, window_bounds = array<i64: 1, 1, 8, 8, 8>}, {transform_indices = @transform_1, window_bounds = array<i64: 1, 8, 32>}, {transform_indices = @transform_2, window_bounds = array<i64: 1, 32, 16>}, {transform_indices = @transform_3, window_bounds = array<i64: 1, 1, 16>}, {pipeline_mode = #tpu.pipeline_mode<synchronous>, transform_indices = @transform_4, window_bounds = array<i64: 8, 8>}, {pipeline_mode = #tpu.pipeline_mode<synchronous>, transform_indices = @transform_5, window_bounds = array<i64: 8, 16>}, {pipeline_mode = #tpu.pipeline_mode<synchronous>, transform_indices = @transform_6, window_bounds = array<i64: 16, 8>}, {pipeline_mode = #tpu.pipeline_mode<synchronous>, transform_indices = @transform_7, window_bounds = array<i64: 1, 8>}, {transform_indices = @transform_8, window_bounds = array<i64: 1, 1, 8, 8, 8>}, {transform_indices = @transform_9, window_bounds = array<i64: 1, 1, 8, 16>}]} {
    %c0 = arith.constant 0 : index
    %c0_0 = arith.constant 0 : index
    %c0_1 = arith.constant 0 : index
    %c0_2 = arith.constant 0 : index
    %c0_3 = arith.constant 0 : index
    %0 = vector.load %arg2[%c0, %c0_0, %c0_1, %c0_2, %c0_3] : memref<1x1x8x8x8xf32, #tpu.memory_space<vmem>>, vector<1x1x8x8x8xf32>
    %1 = vector.shape_cast %0 : vector<1x1x8x8x8xf32> to vector<8x8x8xf32>
    %c0_4 = arith.constant 0 : index
    %c0_5 = arith.constant 0 : index
    %2 = vector.load %arg6[%c0_4, %c0_5] : memref<8x8xf32, #tpu.memory_space<vmem>>, vector<8x8xf32>
    %c0_6 = arith.constant 0 : index
    %c0_7 = arith.constant 0 : index
    %3 = vector.load %arg9[%c0_6, %c0_7] : memref<1x8xf32, #tpu.memory_space<vmem>>, vector<1x8xf32>
    %c0_8 = arith.constant 0 : index
    %c0_9 = arith.constant 0 : index
    %c0_10 = arith.constant 0 : index
    %4 = vector.load %arg3[%c0_8, %c0_9, %c0_10] : memref<1x8x32xf32, #tpu.memory_space<vmem>>, vector<1x8x32xf32>
    %5 = vector.shape_cast %4 : vector<1x8x32xf32> to vector<8x32xf32>
    %c0_11 = arith.constant 0 : index
    %c0_12 = arith.constant 0 : index
    %c0_13 = arith.constant 0 : index
    %6 = vector.load %arg4[%c0_11, %c0_12, %c0_13] : memref<1x32x16xf32, #tpu.memory_space<vmem>>, vector<1x32x16xf32>
    %7 = vector.shape_cast %6 : vector<1x32x16xf32> to vector<32x16xf32>
    %cst = arith.constant dense<0.000000e+00> : vector<8x16xf32>
    %8 = tpu.matmul %5, %7, %cst {dimension_numbers = #tpu.dot_dimension_numbers<[1], [0], [0], [1], [0, 0, 1, 1], [], []>} : vector<8x32xf32>, vector<32x16xf32>, vector<8x16xf32> -> vector<8x16xf32>
    %9 = vector.extract_strided_slice %1 {offsets = [0, 0, 0], sizes = [1, 8, 8], strides = [1, 1, 1]} : vector<8x8x8xf32> to vector<1x8x8xf32>
    %10 = vector.shape_cast %9 : vector<1x8x8xf32> to vector<8x8xf32>
    %11 = vector.extract_strided_slice %1 {offsets = [1, 0, 0], sizes = [1, 8, 8], strides = [1, 1, 1]} : vector<8x8x8xf32> to vector<1x8x8xf32>
    %12 = vector.shape_cast %11 : vector<1x8x8xf32> to vector<8x8xf32>
    %13 = arith.addf %10, %12 : vector<8x8xf32>
    %14 = vector.extract_strided_slice %1 {offsets = [2, 0, 0], sizes = [1, 8, 8], strides = [1, 1, 1]} : vector<8x8x8xf32> to vector<1x8x8xf32>
    %15 = vector.shape_cast %14 : vector<1x8x8xf32> to vector<8x8xf32>
    %16 = arith.addf %13, %15 : vector<8x8xf32>
    %17 = vector.extract_strided_slice %1 {offsets = [3, 0, 0], sizes = [1, 8, 8], strides = [1, 1, 1]} : vector<8x8x8xf32> to vector<1x8x8xf32>
    %18 = vector.shape_cast %17 : vector<1x8x8xf32> to vector<8x8xf32>
    %19 = arith.addf %16, %18 : vector<8x8xf32>
    %20 = vector.extract_strided_slice %1 {offsets = [4, 0, 0], sizes = [1, 8, 8], strides = [1, 1, 1]} : vector<8x8x8xf32> to vector<1x8x8xf32>
    %21 = vector.shape_cast %20 : vector<1x8x8xf32> to vector<8x8xf32>
    %22 = arith.addf %19, %21 : vector<8x8xf32>
    %23 = vector.extract_strided_slice %1 {offsets = [5, 0, 0], sizes = [1, 8, 8], strides = [1, 1, 1]} : vector<8x8x8xf32> to vector<1x8x8xf32>
    %24 = vector.shape_cast %23 : vector<1x8x8xf32> to vector<8x8xf32>
    %25 = arith.addf %22, %24 : vector<8x8xf32>
    %26 = vector.extract_strided_slice %1 {offsets = [6, 0, 0], sizes = [1, 8, 8], strides = [1, 1, 1]} : vector<8x8x8xf32> to vector<1x8x8xf32>
    %27 = vector.shape_cast %26 : vector<1x8x8xf32> to vector<8x8xf32>
    %28 = arith.addf %25, %27 : vector<8x8xf32>
    %29 = vector.extract_strided_slice %1 {offsets = [7, 0, 0], sizes = [1, 8, 8], strides = [1, 1, 1]} : vector<8x8x8xf32> to vector<1x8x8xf32>
    %30 = vector.shape_cast %29 : vector<1x8x8xf32> to vector<8x8xf32>
    %31 = arith.addf %28, %30 : vector<8x8xf32>
    %cst_14 = arith.constant 1.250000e-01 : f32
    %32 = vector.broadcast %cst_14 : f32 to vector<8x8xf32>
    %33 = arith.mulf %31, %32 : vector<8x8xf32>
    %cst_15 = arith.constant dense<0.000000e+00> : vector<8x16xf32>
    %34 = tpu.matmul %33, %8, %cst_15 {dimension_numbers = #tpu.dot_dimension_numbers<[1], [0], [0], [1], [0, 0, 1, 1], [], []>} : vector<8x8xf32>, vector<8x16xf32>, vector<8x16xf32> -> vector<8x16xf32>
    %35 = arith.addf %34, %8 : vector<8x16xf32>
    %c0_16 = arith.constant 0 : index
    %c0_17 = arith.constant 0 : index
    %c0_18 = arith.constant 0 : index
    %36 = vector.load %arg5[%c0_16, %c0_17, %c0_18] : memref<1x1x16xf32, #tpu.memory_space<vmem>>, vector<1x1x16xf32>
    %37 = vector.shape_cast %36 : vector<1x1x16xf32> to vector<1x16xf32>
    %cst_19 = arith.constant 2.000000e+00 : f32
    %38 = vector.broadcast %cst_19 : f32 to vector<1x16xf32>
    %39 = arith.mulf %38, %37 : vector<1x16xf32>
    %40 = vector.broadcast %39 : vector<1x16xf32> to vector<8x16xf32>
    %41 = arith.addf %35, %40 : vector<8x16xf32>
    %cst_20 = arith.constant 0.000000e+00 : f32
    %42 = vector.broadcast %cst_20 : f32 to vector<8x16xf32>
    %43 = arith.maximumf %41, %42 : vector<8x16xf32>
    %c0_21 = arith.constant 0 : index
    %c0_22 = arith.constant 0 : index
    %c0_23 = arith.constant 0 : index
    %c0_24 = arith.constant 0 : index
    %44 = vector.load %arg11[%c0_21, %c0_22, %c0_23, %c0_24] : memref<1x1x8x16xf32, #tpu.memory_space<vmem>>, vector<1x1x8x16xf32>
    %45 = vector.shape_cast %44 : vector<1x1x8x16xf32> to vector<8x16xf32>
    %46 = vector.shape_cast %43 : vector<8x16xf32> to vector<1x1x8x16xf32>
    tpu.vector_store %arg11[%c0_21, %c0_22, %c0_23, %c0_24], %46 {strides = array<i32>} : memref<1x1x8x16xf32, #tpu.memory_space<vmem>>, vector<1x1x8x16xf32>,
    %c0_25 = arith.constant 0 : index
    %c0_26 = arith.constant 0 : index
    %47 = vector.load %arg7[%c0_25, %c0_26] : memref<8x16xf32, #tpu.memory_space<vmem>>, vector<8x16xf32>
    %cst_27 = arith.constant dense<0.000000e+00> : vector<8x8xf32>
    %48 = tpu.matmul %47, %43, %cst_27 {dimension_numbers = #tpu.dot_dimension_numbers<[1], [1], [0], [0], [0, 0, 1, 0], [], []>} : vector<8x16xf32>, vector<8x16xf32>, vector<8x8xf32> -> vector<8x8xf32>
    %c0_28 = arith.constant 0 : index
    %c0_29 = arith.constant 0 : index
    %49 = vector.load %arg8[%c0_28, %c0_29] : memref<16x8xf32, #tpu.memory_space<vmem>>, vector<16x8xf32>
    %cst_30 = arith.constant dense<0.000000e+00> : vector<8x8xf32>
    %50 = tpu.matmul %43, %49, %cst_30 {dimension_numbers = #tpu.dot_dimension_numbers<[1], [0], [0], [1], [0, 0, 1, 1], [], []>} : vector<8x16xf32>, vector<16x8xf32>, vector<8x8xf32> -> vector<8x8xf32>
    %51 = vector.extract_strided_slice %2 {offsets = [0, 0], sizes = [1, 1], strides = [1, 1]} : vector<8x8xf32> to vector<1x1xf32>
    %52 = vector.extract_strided_slice %1 {offsets = [0, 0, 0], sizes = [1, 8, 8], strides = [1, 1, 1]} : vector<8x8x8xf32> to vector<1x8x8xf32>
    %53 = vector.shape_cast %52 : vector<1x8x8xf32> to vector<8x8xf32>
    %54 = vector.broadcast %51 : vector<1x1xf32> to vector<8x8xf32>
    %55 = arith.mulf %54, %53 : vector<8x8xf32>
    %56 = vector.extract_strided_slice %2 {offsets = [1, 0], sizes = [1, 1], strides = [1, 1]} : vector<8x8xf32> to vector<1x1xf32>
    %57 = vector.extract_strided_slice %1 {offsets = [1, 0, 0], sizes = [1, 8, 8], strides = [1, 1, 1]} : vector<8x8x8xf32> to vector<1x8x8xf32>
    %58 = vector.shape_cast %57 : vector<1x8x8xf32> to vector<8x8xf32>
    %59 = vector.broadcast %56 : vector<1x1xf32> to vector<8x8xf32>
    %60 = arith.mulf %59, %58 : vector<8x8xf32>
    %61 = arith.addf %55, %60 : vector<8x8xf32>
    %62 = vector.extract_strided_slice %2 {offsets = [2, 0], sizes = [1, 1], strides = [1, 1]} : vector<8x8xf32> to vector<1x1xf32>
    %63 = vector.extract_strided_slice %1 {offsets = [2, 0, 0], sizes = [1, 8, 8], strides = [1, 1, 1]} : vector<8x8x8xf32> to vector<1x8x8xf32>
    %64 = vector.shape_cast %63 : vector<1x8x8xf32> to vector<8x8xf32>
    %65 = vector.broadcast %62 : vector<1x1xf32> to vector<8x8xf32>
    %66 = arith.mulf %65, %64 : vector<8x8xf32>
    %67 = arith.addf %61, %66 : vector<8x8xf32>
    %68 = vector.extract_strided_slice %2 {offsets = [3, 0], sizes = [1, 1], strides = [1, 1]} : vector<8x8xf32> to vector<1x1xf32>
    %69 = vector.extract_strided_slice %1 {offsets = [3, 0, 0], sizes = [1, 8, 8], strides = [1, 1, 1]} : vector<8x8x8xf32> to vector<1x8x8xf32>
    %70 = vector.shape_cast %69 : vector<1x8x8xf32> to vector<8x8xf32>
    %71 = vector.broadcast %68 : vector<1x1xf32> to vector<8x8xf32>
    %72 = arith.mulf %71, %70 : vector<8x8xf32>
    %73 = arith.addf %67, %72 : vector<8x8xf32>
    %74 = vector.extract_strided_slice %2 {offsets = [4, 0], sizes = [1, 1], strides = [1, 1]} : vector<8x8xf32> to vector<1x1xf32>
    %75 = vector.extract_strided_slice %1 {offsets = [4, 0, 0], sizes = [1, 8, 8], strides = [1, 1, 1]} : vector<8x8x8xf32> to vector<1x8x8xf32>
    %76 = vector.shape_cast %75 : vector<1x8x8xf32> to vector<8x8xf32>
    %77 = vector.broadcast %74 : vector<1x1xf32> to vector<8x8xf32>
    %78 = arith.mulf %77, %76 : vector<8x8xf32>
    %79 = arith.addf %73, %78 : vector<8x8xf32>
    %80 = vector.extract_strided_slice %2 {offsets = [5, 0], sizes = [1, 1], strides = [1, 1]} : vector<8x8xf32> to vector<1x1xf32>
    %81 = vector.extract_strided_slice %1 {offsets = [5, 0, 0], sizes = [1, 8, 8], strides = [1, 1, 1]} : vector<8x8x8xf32> to vector<1x8x8xf32>
    %82 = vector.shape_cast %81 : vector<1x8x8xf32> to vector<8x8xf32>
    %83 = vector.broadcast %80 : vector<1x1xf32> to vector<8x8xf32>
    %84 = arith.mulf %83, %82 : vector<8x8xf32>
    %85 = arith.addf %79, %84 : vector<8x8xf32>
    %86 = vector.extract_strided_slice %2 {offsets = [6, 0], sizes = [1, 1], strides = [1, 1]} : vector<8x8xf32> to vector<1x1xf32>
    %87 = vector.extract_strided_slice %1 {offsets = [6, 0, 0], sizes = [1, 8, 8], strides = [1, 1, 1]} : vector<8x8x8xf32> to vector<1x8x8xf32>
    %88 = vector.shape_cast %87 : vector<1x8x8xf32> to vector<8x8xf32>
    %89 = vector.broadcast %86 : vector<1x1xf32> to vector<8x8xf32>
    %90 = arith.mulf %89, %88 : vector<8x8xf32>
    %91 = arith.addf %85, %90 : vector<8x8xf32>
    %92 = vector.extract_strided_slice %2 {offsets = [7, 0], sizes = [1, 1], strides = [1, 1]} : vector<8x8xf32> to vector<1x1xf32>
    %93 = vector.extract_strided_slice %1 {offsets = [7, 0, 0], sizes = [1, 8, 8], strides = [1, 1, 1]} : vector<8x8x8xf32> to vector<1x8x8xf32>
    %94 = vector.shape_cast %93 : vector<1x8x8xf32> to vector<8x8xf32>
    %95 = vector.broadcast %92 : vector<1x1xf32> to vector<8x8xf32>
    %96 = arith.mulf %95, %94 : vector<8x8xf32>
    %97 = arith.addf %91, %96 : vector<8x8xf32>
    %98 = vector.extract_strided_slice %48 {offsets = [0, 0], sizes = [1, 8], strides = [1, 1]} : vector<8x8xf32> to vector<1x8xf32>
    %99 = vector.broadcast %98 : vector<1x8xf32> to vector<8x8xf32>
    %100 = arith.addf %97, %99 : vector<8x8xf32>
    %101 = vector.extract_strided_slice %50 {offsets = [0, 0], sizes = [8, 1], strides = [1, 1]} : vector<8x8xf32> to vector<8x1xf32>
    %102 = vector.broadcast %101 : vector<8x1xf32> to vector<8x8xf32>
    %103 = arith.addf %100, %102 : vector<8x8xf32>
    %104 = vector.extract_strided_slice %3 {offsets = [0, 0], sizes = [1, 1], strides = [1, 1]} : vector<1x8xf32> to vector<1x1xf32>
    %105 = vector.broadcast %104 : vector<1x1xf32> to vector<8x8xf32>
    %106 = arith.addf %103, %105 : vector<8x8xf32>
    %c0_31 = arith.constant 0 : index
    %c0_32 = arith.constant 0 : index
    %c0_33 = arith.constant 0 : index
    %c0_34 = arith.constant 0 : index
    %c0_35 = arith.constant 0 : index
    %107 = vector.load %arg10[%c0_31, %c0_32, %c0_33, %c0_34, %c0_35] : memref<1x1x8x8x8xf32, #tpu.memory_space<vmem>>, vector<1x1x1x8x8xf32>
    %108 = vector.shape_cast %107 : vector<1x1x1x8x8xf32> to vector<8x8xf32>
    %109 = vector.shape_cast %106 : vector<8x8xf32> to vector<1x1x1x8x8xf32>
    tpu.vector_store %arg10[%c0_31, %c0_32, %c0_33, %c0_34, %c0_35], %109 {strides = array<i32>} : memref<1x1x8x8x8xf32, #tpu.memory_space<vmem>>, vector<1x1x1x8x8xf32>,
    %110 = vector.extract_strided_slice %2 {offsets = [0, 1], sizes = [1, 1], strides = [1, 1]} : vector<8x8xf32> to vector<1x1xf32>
    %111 = vector.extract_strided_slice %1 {offsets = [0, 0, 0], sizes = [1, 8, 8], strides = [1, 1, 1]} : vector<8x8x8xf32> to vector<1x8x8xf32>
    %112 = vector.shape_cast %111 : vector<1x8x8xf32> to vector<8x8xf32>
    %113 = vector.broadcast %110 : vector<1x1xf32> to vector<8x8xf32>
    %114 = arith.mulf %113, %112 : vector<8x8xf32>
    %115 = vector.extract_strided_slice %2 {offsets = [1, 1], sizes = [1, 1], strides = [1, 1]} : vector<8x8xf32> to vector<1x1xf32>
    %116 = vector.extract_strided_slice %1 {offsets = [1, 0, 0], sizes = [1, 8, 8], strides = [1, 1, 1]} : vector<8x8x8xf32> to vector<1x8x8xf32>
    %117 = vector.shape_cast %116 : vector<1x8x8xf32> to vector<8x8xf32>
    %118 = vector.broadcast %115 : vector<1x1xf32> to vector<8x8xf32>
    %119 = arith.mulf %118, %117 : vector<8x8xf32>
    %120 = arith.addf %114, %119 : vector<8x8xf32>
    %121 = vector.extract_strided_slice %2 {offsets = [2, 1], sizes = [1, 1], strides = [1, 1]} : vector<8x8xf32> to vector<1x1xf32>
    %122 = vector.extract_strided_slice %1 {offsets = [2, 0, 0], sizes = [1, 8, 8], strides = [1, 1, 1]} : vector<8x8x8xf32> to vector<1x8x8xf32>
    %123 = vector.shape_cast %122 : vector<1x8x8xf32> to vector<8x8xf32>
    %124 = vector.broadcast %121 : vector<1x1xf32> to vector<8x8xf32>
    %125 = arith.mulf %124, %123 : vector<8x8xf32>
    %126 = arith.addf %120, %125 : vector<8x8xf32>
    %127 = vector.extract_strided_slice %2 {offsets = [3, 1], sizes = [1, 1], strides = [1, 1]} : vector<8x8xf32> to vector<1x1xf32>
    %128 = vector.extract_strided_slice %1 {offsets = [3, 0, 0], sizes = [1, 8, 8], strides = [1, 1, 1]} : vector<8x8x8xf32> to vector<1x8x8xf32>
    %129 = vector.shape_cast %128 : vector<1x8x8xf32> to vector<8x8xf32>
    %130 = vector.broadcast %127 : vector<1x1xf32> to vector<8x8xf32>
    %131 = arith.mulf %130, %129 : vector<8x8xf32>
    %132 = arith.addf %126, %131 : vector<8x8xf32>
    %133 = vector.extract_strided_slice %2 {offsets = [4, 1], sizes = [1, 1], strides = [1, 1]} : vector<8x8xf32> to vector<1x1xf32>
    %134 = vector.extract_strided_slice %1 {offsets = [4, 0, 0], sizes = [1, 8, 8], strides = [1, 1, 1]} : vector<8x8x8xf32> to vector<1x8x8xf32>
    %135 = vector.shape_cast %134 : vector<1x8x8xf32> to vector<8x8xf32>
    %136 = vector.broadcast %133 : vector<1x1xf32> to vector<8x8xf32>
    %137 = arith.mulf %136, %135 : vector<8x8xf32>
    %138 = arith.addf %132, %137 : vector<8x8xf32>
    %139 = vector.extract_strided_slice %2 {offsets = [5, 1], sizes = [1, 1], strides = [1, 1]} : vector<8x8xf32> to vector<1x1xf32>
    %140 = vector.extract_strided_slice %1 {offsets = [5, 0, 0], sizes = [1, 8, 8], strides = [1, 1, 1]} : vector<8x8x8xf32> to vector<1x8x8xf32>
    %141 = vector.shape_cast %140 : vector<1x8x8xf32> to vector<8x8xf32>
    %142 = vector.broadcast %139 : vector<1x1xf32> to vector<8x8xf32>
    %143 = arith.mulf %142, %141 : vector<8x8xf32>
    %144 = arith.addf %138, %143 : vector<8x8xf32>
    %145 = vector.extract_strided_slice %2 {offsets = [6, 1], sizes = [1, 1], strides = [1, 1]} : vector<8x8xf32> to vector<1x1xf32>
    %146 = vector.extract_strided_slice %1 {offsets = [6, 0, 0], sizes = [1, 8, 8], strides = [1, 1, 1]} : vector<8x8x8xf32> to vector<1x8x8xf32>
    %147 = vector.shape_cast %146 : vector<1x8x8xf32> to vector<8x8xf32>
    %148 = vector.broadcast %145 : vector<1x1xf32> to vector<8x8xf32>
    %149 = arith.mulf %148, %147 : vector<8x8xf32>
    %150 = arith.addf %144, %149 : vector<8x8xf32>
    %151 = vector.extract_strided_slice %2 {offsets = [7, 1], sizes = [1, 1], strides = [1, 1]} : vector<8x8xf32> to vector<1x1xf32>
    %152 = vector.extract_strided_slice %1 {offsets = [7, 0, 0], sizes = [1, 8, 8], strides = [1, 1, 1]} : vector<8x8x8xf32> to vector<1x8x8xf32>
    %153 = vector.shape_cast %152 : vector<1x8x8xf32> to vector<8x8xf32>
    %154 = vector.broadcast %151 : vector<1x1xf32> to vector<8x8xf32>
    %155 = arith.mulf %154, %153 : vector<8x8xf32>
    %156 = arith.addf %150, %155 : vector<8x8xf32>
    %157 = vector.extract_strided_slice %48 {offsets = [1, 0], sizes = [1, 8], strides = [1, 1]} : vector<8x8xf32> to vector<1x8xf32>
    %158 = vector.broadcast %157 : vector<1x8xf32> to vector<8x8xf32>
    %159 = arith.addf %156, %158 : vector<8x8xf32>
    %160 = vector.extract_strided_slice %50 {offsets = [0, 1], sizes = [8, 1], strides = [1, 1]} : vector<8x8xf32> to vector<8x1xf32>
    %161 = vector.broadcast %160 : vector<8x1xf32> to vector<8x8xf32>
    %162 = arith.addf %159, %161 : vector<8x8xf32>
    %163 = vector.extract_strided_slice %3 {offsets = [0, 1], sizes = [1, 1], strides = [1, 1]} : vector<1x8xf32> to vector<1x1xf32>
    %164 = vector.broadcast %163 : vector<1x1xf32> to vector<8x8xf32>
    %165 = arith.addf %162, %164 : vector<8x8xf32>
    %c0_36 = arith.constant 0 : index
    %c0_37 = arith.constant 0 : index
    %c1 = arith.constant 1 : index
    %c0_38 = arith.constant 0 : index
    %c0_39 = arith.constant 0 : index
    %166 = vector.load %arg10[%c0_36, %c0_37, %c1, %c0_38, %c0_39] : memref<1x1x8x8x8xf32, #tpu.memory_space<vmem>>, vector<1x1x1x8x8xf32>
    %167 = vector.shape_cast %166 : vector<1x1x1x8x8xf32> to vector<8x8xf32>
    %168 = vector.shape_cast %165 : vector<8x8xf32> to vector<1x1x1x8x8xf32>
    tpu.vector_store %arg10[%c0_36, %c0_37, %c1, %c0_38, %c0_39], %168 {strides = array<i32>} : memref<1x1x8x8x8xf32, #tpu.memory_space<vmem>>, vector<1x1x1x8x8xf32>,
    %169 = vector.extract_strided_slice %2 {offsets = [0, 2], sizes = [1, 1], strides = [1, 1]} : vector<8x8xf32> to vector<1x1xf32>
    %170 = vector.extract_strided_slice %1 {offsets = [0, 0, 0], sizes = [1, 8, 8], strides = [1, 1, 1]} : vector<8x8x8xf32> to vector<1x8x8xf32>
    %171 = vector.shape_cast %170 : vector<1x8x8xf32> to vector<8x8xf32>
    %172 = vector.broadcast %169 : vector<1x1xf32> to vector<8x8xf32>
    %173 = arith.mulf %172, %171 : vector<8x8xf32>
    %174 = vector.extract_strided_slice %2 {offsets = [1, 2], sizes = [1, 1], strides = [1, 1]} : vector<8x8xf32> to vector<1x1xf32>
    %175 = vector.extract_strided_slice %1 {offsets = [1, 0, 0], sizes = [1, 8, 8], strides = [1, 1, 1]} : vector<8x8x8xf32> to vector<1x8x8xf32>
    %176 = vector.shape_cast %175 : vector<1x8x8xf32> to vector<8x8xf32>
    %177 = vector.broadcast %174 : vector<1x1xf32> to vector<8x8xf32>
    %178 = arith.mulf %177, %176 : vector<8x8xf32>
    %179 = arith.addf %173, %178 : vector<8x8xf32>
    %180 = vector.extract_strided_slice %2 {offsets = [2, 2], sizes = [1, 1], strides = [1, 1]} : vector<8x8xf32> to vector<1x1xf32>
    %181 = vector.extract_strided_slice %1 {offsets = [2, 0, 0], sizes = [1, 8, 8], strides = [1, 1, 1]} : vector<8x8x8xf32> to vector<1x8x8xf32>
    %182 = vector.shape_cast %181 : vector<1x8x8xf32> to vector<8x8xf32>
    %183 = vector.broadcast %180 : vector<1x1xf32> to vector<8x8xf32>
    %184 = arith.mulf %183, %182 : vector<8x8xf32>
    %185 = arith.addf %179, %184 : vector<8x8xf32>
    %186 = vector.extract_strided_slice %2 {offsets = [3, 2], sizes = [1, 1], strides = [1, 1]} : vector<8x8xf32> to vector<1x1xf32>
    %187 = vector.extract_strided_slice %1 {offsets = [3, 0, 0], sizes = [1, 8, 8], strides = [1, 1, 1]} : vector<8x8x8xf32> to vector<1x8x8xf32>
    %188 = vector.shape_cast %187 : vector<1x8x8xf32> to vector<8x8xf32>
    %189 = vector.broadcast %186 : vector<1x1xf32> to vector<8x8xf32>
    %190 = arith.mulf %189, %188 : vector<8x8xf32>
    %191 = arith.addf %185, %190 : vector<8x8xf32>
    %192 = vector.extract_strided_slice %2 {offsets = [4, 2], sizes = [1, 1], strides = [1, 1]} : vector<8x8xf32> to vector<1x1xf32>
    %193 = vector.extract_strided_slice %1 {offsets = [4, 0, 0], sizes = [1, 8, 8], strides = [1, 1, 1]} : vector<8x8x8xf32> to vector<1x8x8xf32>
    %194 = vector.shape_cast %193 : vector<1x8x8xf32> to vector<8x8xf32>
    %195 = vector.broadcast %192 : vector<1x1xf32> to vector<8x8xf32>
    %196 = arith.mulf %195, %194 : vector<8x8xf32>
    %197 = arith.addf %191, %196 : vector<8x8xf32>
    %198 = vector.extract_strided_slice %2 {offsets = [5, 2], sizes = [1, 1], strides = [1, 1]} : vector<8x8xf32> to vector<1x1xf32>
    %199 = vector.extract_strided_slice %1 {offsets = [5, 0, 0], sizes = [1, 8, 8], strides = [1, 1, 1]} : vector<8x8x8xf32> to vector<1x8x8xf32>
    %200 = vector.shape_cast %199 : vector<1x8x8xf32> to vector<8x8xf32>
    %201 = vector.broadcast %198 : vector<1x1xf32> to vector<8x8xf32>
    %202 = arith.mulf %201, %200 : vector<8x8xf32>
    %203 = arith.addf %197, %202 : vector<8x8xf32>
    %204 = vector.extract_strided_slice %2 {offsets = [6, 2], sizes = [1, 1], strides = [1, 1]} : vector<8x8xf32> to vector<1x1xf32>
    %205 = vector.extract_strided_slice %1 {offsets = [6, 0, 0], sizes = [1, 8, 8], strides = [1, 1, 1]} : vector<8x8x8xf32> to vector<1x8x8xf32>
    %206 = vector.shape_cast %205 : vector<1x8x8xf32> to vector<8x8xf32>
    %207 = vector.broadcast %204 : vector<1x1xf32> to vector<8x8xf32>
    %208 = arith.mulf %207, %206 : vector<8x8xf32>
    %209 = arith.addf %203, %208 : vector<8x8xf32>
    %210 = vector.extract_strided_slice %2 {offsets = [7, 2], sizes = [1, 1], strides = [1, 1]} : vector<8x8xf32> to vector<1x1xf32>
    %211 = vector.extract_strided_slice %1 {offsets = [7, 0, 0], sizes = [1, 8, 8], strides = [1, 1, 1]} : vector<8x8x8xf32> to vector<1x8x8xf32>
    %212 = vector.shape_cast %211 : vector<1x8x8xf32> to vector<8x8xf32>
    %213 = vector.broadcast %210 : vector<1x1xf32> to vector<8x8xf32>
    %214 = arith.mulf %213, %212 : vector<8x8xf32>
    %215 = arith.addf %209, %214 : vector<8x8xf32>
    %216 = vector.extract_strided_slice %48 {offsets = [2, 0], sizes = [1, 8], strides = [1, 1]} : vector<8x8xf32> to vector<1x8xf32>
    %217 = vector.broadcast %216 : vector<1x8xf32> to vector<8x8xf32>
    %218 = arith.addf %215, %217 : vector<8x8xf32>
    %219 = vector.extract_strided_slice %50 {offsets = [0, 2], sizes = [8, 1], strides = [1, 1]} : vector<8x8xf32> to vector<8x1xf32>
    %220 = vector.broadcast %219 : vector<8x1xf32> to vector<8x8xf32>
    %221 = arith.addf %218, %220 : vector<8x8xf32>
    %222 = vector.extract_strided_slice %3 {offsets = [0, 2], sizes = [1, 1], strides = [1, 1]} : vector<1x8xf32> to vector<1x1xf32>
    %223 = vector.broadcast %222 : vector<1x1xf32> to vector<8x8xf32>
    %224 = arith.addf %221, %223 : vector<8x8xf32>
    %c0_40 = arith.constant 0 : index
    %c0_41 = arith.constant 0 : index
    %c2 = arith.constant 2 : index
    %c0_42 = arith.constant 0 : index
    %c0_43 = arith.constant 0 : index
    %225 = vector.load %arg10[%c0_40, %c0_41, %c2, %c0_42, %c0_43] : memref<1x1x8x8x8xf32, #tpu.memory_space<vmem>>, vector<1x1x1x8x8xf32>
    %226 = vector.shape_cast %225 : vector<1x1x1x8x8xf32> to vector<8x8xf32>
    %227 = vector.shape_cast %224 : vector<8x8xf32> to vector<1x1x1x8x8xf32>
    tpu.vector_store %arg10[%c0_40, %c0_41, %c2, %c0_42, %c0_43], %227 {strides = array<i32>} : memref<1x1x8x8x8xf32, #tpu.memory_space<vmem>>, vector<1x1x1x8x8xf32>,
    %228 = vector.extract_strided_slice %2 {offsets = [0, 3], sizes = [1, 1], strides = [1, 1]} : vector<8x8xf32> to vector<1x1xf32>
    %229 = vector.extract_strided_slice %1 {offsets = [0, 0, 0], sizes = [1, 8, 8], strides = [1, 1, 1]} : vector<8x8x8xf32> to vector<1x8x8xf32>
    %230 = vector.shape_cast %229 : vector<1x8x8xf32> to vector<8x8xf32>
    %231 = vector.broadcast %228 : vector<1x1xf32> to vector<8x8xf32>
    %232 = arith.mulf %231, %230 : vector<8x8xf32>
    %233 = vector.extract_strided_slice %2 {offsets = [1, 3], sizes = [1, 1], strides = [1, 1]} : vector<8x8xf32> to vector<1x1xf32>
    %234 = vector.extract_strided_slice %1 {offsets = [1, 0, 0], sizes = [1, 8, 8], strides = [1, 1, 1]} : vector<8x8x8xf32> to vector<1x8x8xf32>
    %235 = vector.shape_cast %234 : vector<1x8x8xf32> to vector<8x8xf32>
    %236 = vector.broadcast %233 : vector<1x1xf32> to vector<8x8xf32>
    %237 = arith.mulf %236, %235 : vector<8x8xf32>
    %238 = arith.addf %232, %237 : vector<8x8xf32>
    %239 = vector.extract_strided_slice %2 {offsets = [2, 3], sizes = [1, 1], strides = [1, 1]} : vector<8x8xf32> to vector<1x1xf32>
    %240 = vector.extract_strided_slice %1 {offsets = [2, 0, 0], sizes = [1, 8, 8], strides = [1, 1, 1]} : vector<8x8x8xf32> to vector<1x8x8xf32>
    %241 = vector.shape_cast %240 : vector<1x8x8xf32> to vector<8x8xf32>
    %242 = vector.broadcast %239 : vector<1x1xf32> to vector<8x8xf32>
    %243 = arith.mulf %242, %241 : vector<8x8xf32>
    %244 = arith.addf %238, %243 : vector<8x8xf32>
    %245 = vector.extract_strided_slice %2 {offsets = [3, 3], sizes = [1, 1], strides = [1, 1]} : vector<8x8xf32> to vector<1x1xf32>
    %246 = vector.extract_strided_slice %1 {offsets = [3, 0, 0], sizes = [1, 8, 8], strides = [1, 1, 1]} : vector<8x8x8xf32> to vector<1x8x8xf32>
    %247 = vector.shape_cast %246 : vector<1x8x8xf32> to vector<8x8xf32>
    %248 = vector.broadcast %245 : vector<1x1xf32> to vector<8x8xf32>
    %249 = arith.mulf %248, %247 : vector<8x8xf32>
    %250 = arith.addf %244, %249 : vector<8x8xf32>
    %251 = vector.extract_strided_slice %2 {offsets = [4, 3], sizes = [1, 1], strides = [1, 1]} : vector<8x8xf32> to vector<1x1xf32>
    %252 = vector.extract_strided_slice %1 {offsets = [4, 0, 0], sizes = [1, 8, 8], strides = [1, 1, 1]} : vector<8x8x8xf32> to vector<1x8x8xf32>
    %253 = vector.shape_cast %252 : vector<1x8x8xf32> to vector<8x8xf32>
    %254 = vector.broadcast %251 : vector<1x1xf32> to vector<8x8xf32>
    %255 = arith.mulf %254, %253 : vector<8x8xf32>
    %256 = arith.addf %250, %255 : vector<8x8xf32>
    %257 = vector.extract_strided_slice %2 {offsets = [5, 3], sizes = [1, 1], strides = [1, 1]} : vector<8x8xf32> to vector<1x1xf32>
    %258 = vector.extract_strided_slice %1 {offsets = [5, 0, 0], sizes = [1, 8, 8], strides = [1, 1, 1]} : vector<8x8x8xf32> to vector<1x8x8xf32>
    %259 = vector.shape_cast %258 : vector<1x8x8xf32> to vector<8x8xf32>
    %260 = vector.broadcast %257 : vector<1x1xf32> to vector<8x8xf32>
    %261 = arith.mulf %260, %259 : vector<8x8xf32>
    %262 = arith.addf %256, %261 : vector<8x8xf32>
    %263 = vector.extract_strided_slice %2 {offsets = [6, 3], sizes = [1, 1], strides = [1, 1]} : vector<8x8xf32> to vector<1x1xf32>
    %264 = vector.extract_strided_slice %1 {offsets = [6, 0, 0], sizes = [1, 8, 8], strides = [1, 1, 1]} : vector<8x8x8xf32> to vector<1x8x8xf32>
    %265 = vector.shape_cast %264 : vector<1x8x8xf32> to vector<8x8xf32>
    %266 = vector.broadcast %263 : vector<1x1xf32> to vector<8x8xf32>
    %267 = arith.mulf %266, %265 : vector<8x8xf32>
    %268 = arith.addf %262, %267 : vector<8x8xf32>
    %269 = vector.extract_strided_slice %2 {offsets = [7, 3], sizes = [1, 1], strides = [1, 1]} : vector<8x8xf32> to vector<1x1xf32>
    %270 = vector.extract_strided_slice %1 {offsets = [7, 0, 0], sizes = [1, 8, 8], strides = [1, 1, 1]} : vector<8x8x8xf32> to vector<1x8x8xf32>
    %271 = vector.shape_cast %270 : vector<1x8x8xf32> to vector<8x8xf32>
    %272 = vector.broadcast %269 : vector<1x1xf32> to vector<8x8xf32>
    %273 = arith.mulf %272, %271 : vector<8x8xf32>
    %274 = arith.addf %268, %273 : vector<8x8xf32>
    %275 = vector.extract_strided_slice %48 {offsets = [3, 0], sizes = [1, 8], strides = [1, 1]} : vector<8x8xf32> to vector<1x8xf32>
    %276 = vector.broadcast %275 : vector<1x8xf32> to vector<8x8xf32>
    %277 = arith.addf %274, %276 : vector<8x8xf32>
    %278 = vector.extract_strided_slice %50 {offsets = [0, 3], sizes = [8, 1], strides = [1, 1]} : vector<8x8xf32> to vector<8x1xf32>
    %279 = vector.broadcast %278 : vector<8x1xf32> to vector<8x8xf32>
    %280 = arith.addf %277, %279 : vector<8x8xf32>
    %281 = vector.extract_strided_slice %3 {offsets = [0, 3], sizes = [1, 1], strides = [1, 1]} : vector<1x8xf32> to vector<1x1xf32>
    %282 = vector.broadcast %281 : vector<1x1xf32> to vector<8x8xf32>
    %283 = arith.addf %280, %282 : vector<8x8xf32>
    %c0_44 = arith.constant 0 : index
    %c0_45 = arith.constant 0 : index
    %c3 = arith.constant 3 : index
    %c0_46 = arith.constant 0 : index
    %c0_47 = arith.constant 0 : index
    %284 = vector.load %arg10[%c0_44, %c0_45, %c3, %c0_46, %c0_47] : memref<1x1x8x8x8xf32, #tpu.memory_space<vmem>>, vector<1x1x1x8x8xf32>
    %285 = vector.shape_cast %284 : vector<1x1x1x8x8xf32> to vector<8x8xf32>
    %286 = vector.shape_cast %283 : vector<8x8xf32> to vector<1x1x1x8x8xf32>
    tpu.vector_store %arg10[%c0_44, %c0_45, %c3, %c0_46, %c0_47], %286 {strides = array<i32>} : memref<1x1x8x8x8xf32, #tpu.memory_space<vmem>>, vector<1x1x1x8x8xf32>,
    %287 = vector.extract_strided_slice %2 {offsets = [0, 4], sizes = [1, 1], strides = [1, 1]} : vector<8x8xf32> to vector<1x1xf32>
    %288 = vector.extract_strided_slice %1 {offsets = [0, 0, 0], sizes = [1, 8, 8], strides = [1, 1, 1]} : vector<8x8x8xf32> to vector<1x8x8xf32>
    %289 = vector.shape_cast %288 : vector<1x8x8xf32> to vector<8x8xf32>
    %290 = vector.broadcast %287 : vector<1x1xf32> to vector<8x8xf32>
    %291 = arith.mulf %290, %289 : vector<8x8xf32>
    %292 = vector.extract_strided_slice %2 {offsets = [1, 4], sizes = [1, 1], strides = [1, 1]} : vector<8x8xf32> to vector<1x1xf32>
    %293 = vector.extract_strided_slice %1 {offsets = [1, 0, 0], sizes = [1, 8, 8], strides = [1, 1, 1]} : vector<8x8x8xf32> to vector<1x8x8xf32>
    %294 = vector.shape_cast %293 : vector<1x8x8xf32> to vector<8x8xf32>
    %295 = vector.broadcast %292 : vector<1x1xf32> to vector<8x8xf32>
    %296 = arith.mulf %295, %294 : vector<8x8xf32>
    %297 = arith.addf %291, %296 : vector<8x8xf32>
    %298 = vector.extract_strided_slice %2 {offsets = [2, 4], sizes = [1, 1], strides = [1, 1]} : vector<8x8xf32> to vector<1x1xf32>
    %299 = vector.extract_strided_slice %1 {offsets = [2, 0, 0], sizes = [1, 8, 8], strides = [1, 1, 1]} : vector<8x8x8xf32> to vector<1x8x8xf32>
    %300 = vector.shape_cast %299 : vector<1x8x8xf32> to vector<8x8xf32>
    %301 = vector.broadcast %298 : vector<1x1xf32> to vector<8x8xf32>
    %302 = arith.mulf %301, %300 : vector<8x8xf32>
    %303 = arith.addf %297, %302 : vector<8x8xf32>
    %304 = vector.extract_strided_slice %2 {offsets = [3, 4], sizes = [1, 1], strides = [1, 1]} : vector<8x8xf32> to vector<1x1xf32>
    %305 = vector.extract_strided_slice %1 {offsets = [3, 0, 0], sizes = [1, 8, 8], strides = [1, 1, 1]} : vector<8x8x8xf32> to vector<1x8x8xf32>
    %306 = vector.shape_cast %305 : vector<1x8x8xf32> to vector<8x8xf32>
    %307 = vector.broadcast %304 : vector<1x1xf32> to vector<8x8xf32>
    %308 = arith.mulf %307, %306 : vector<8x8xf32>
    %309 = arith.addf %303, %308 : vector<8x8xf32>
    %310 = vector.extract_strided_slice %2 {offsets = [4, 4], sizes = [1, 1], strides = [1, 1]} : vector<8x8xf32> to vector<1x1xf32>
    %311 = vector.extract_strided_slice %1 {offsets = [4, 0, 0], sizes = [1, 8, 8], strides = [1, 1, 1]} : vector<8x8x8xf32> to vector<1x8x8xf32>
    %312 = vector.shape_cast %311 : vector<1x8x8xf32> to vector<8x8xf32>
    %313 = vector.broadcast %310 : vector<1x1xf32> to vector<8x8xf32>
    %314 = arith.mulf %313, %312 : vector<8x8xf32>
    %315 = arith.addf %309, %314 : vector<8x8xf32>
    %316 = vector.extract_strided_slice %2 {offsets = [5, 4], sizes = [1, 1], strides = [1, 1]} : vector<8x8xf32> to vector<1x1xf32>
    %317 = vector.extract_strided_slice %1 {offsets = [5, 0, 0], sizes = [1, 8, 8], strides = [1, 1, 1]} : vector<8x8x8xf32> to vector<1x8x8xf32>
    %318 = vector.shape_cast %317 : vector<1x8x8xf32> to vector<8x8xf32>
    %319 = vector.broadcast %316 : vector<1x1xf32> to vector<8x8xf32>
    %320 = arith.mulf %319, %318 : vector<8x8xf32>
    %321 = arith.addf %315, %320 : vector<8x8xf32>
    %322 = vector.extract_strided_slice %2 {offsets = [6, 4], sizes = [1, 1], strides = [1, 1]} : vector<8x8xf32> to vector<1x1xf32>
    %323 = vector.extract_strided_slice %1 {offsets = [6, 0, 0], sizes = [1, 8, 8], strides = [1, 1, 1]} : vector<8x8x8xf32> to vector<1x8x8xf32>
    %324 = vector.shape_cast %323 : vector<1x8x8xf32> to vector<8x8xf32>
    %325 = vector.broadcast %322 : vector<1x1xf32> to vector<8x8xf32>
    %326 = arith.mulf %325, %324 : vector<8x8xf32>
    %327 = arith.addf %321, %326 : vector<8x8xf32>
    %328 = vector.extract_strided_slice %2 {offsets = [7, 4], sizes = [1, 1], strides = [1, 1]} : vector<8x8xf32> to vector<1x1xf32>
    %329 = vector.extract_strided_slice %1 {offsets = [7, 0, 0], sizes = [1, 8, 8], strides = [1, 1, 1]} : vector<8x8x8xf32> to vector<1x8x8xf32>
    %330 = vector.shape_cast %329 : vector<1x8x8xf32> to vector<8x8xf32>
    %331 = vector.broadcast %328 : vector<1x1xf32> to vector<8x8xf32>
    %332 = arith.mulf %331, %330 : vector<8x8xf32>
    %333 = arith.addf %327, %332 : vector<8x8xf32>
    %334 = vector.extract_strided_slice %48 {offsets = [4, 0], sizes = [1, 8], strides = [1, 1]} : vector<8x8xf32> to vector<1x8xf32>
    %335 = vector.broadcast %334 : vector<1x8xf32> to vector<8x8xf32>
    %336 = arith.addf %333, %335 : vector<8x8xf32>
    %337 = vector.extract_strided_slice %50 {offsets = [0, 4], sizes = [8, 1], strides = [1, 1]} : vector<8x8xf32> to vector<8x1xf32>
    %338 = vector.broadcast %337 : vector<8x1xf32> to vector<8x8xf32>
    %339 = arith.addf %336, %338 : vector<8x8xf32>
    %340 = vector.extract_strided_slice %3 {offsets = [0, 4], sizes = [1, 1], strides = [1, 1]} : vector<1x8xf32> to vector<1x1xf32>
    %341 = vector.broadcast %340 : vector<1x1xf32> to vector<8x8xf32>
    %342 = arith.addf %339, %341 : vector<8x8xf32>
    %c0_48 = arith.constant 0 : index
    %c0_49 = arith.constant 0 : index
    %c4 = arith.constant 4 : index
    %c0_50 = arith.constant 0 : index
    %c0_51 = arith.constant 0 : index
    %343 = vector.load %arg10[%c0_48, %c0_49, %c4, %c0_50, %c0_51] : memref<1x1x8x8x8xf32, #tpu.memory_space<vmem>>, vector<1x1x1x8x8xf32>
    %344 = vector.shape_cast %343 : vector<1x1x1x8x8xf32> to vector<8x8xf32>
    %345 = vector.shape_cast %342 : vector<8x8xf32> to vector<1x1x1x8x8xf32>
    tpu.vector_store %arg10[%c0_48, %c0_49, %c4, %c0_50, %c0_51], %345 {strides = array<i32>} : memref<1x1x8x8x8xf32, #tpu.memory_space<vmem>>, vector<1x1x1x8x8xf32>,
    %346 = vector.extract_strided_slice %2 {offsets = [0, 5], sizes = [1, 1], strides = [1, 1]} : vector<8x8xf32> to vector<1x1xf32>
    %347 = vector.extract_strided_slice %1 {offsets = [0, 0, 0], sizes = [1, 8, 8], strides = [1, 1, 1]} : vector<8x8x8xf32> to vector<1x8x8xf32>
    %348 = vector.shape_cast %347 : vector<1x8x8xf32> to vector<8x8xf32>
    %349 = vector.broadcast %346 : vector<1x1xf32> to vector<8x8xf32>
    %350 = arith.mulf %349, %348 : vector<8x8xf32>
    %351 = vector.extract_strided_slice %2 {offsets = [1, 5], sizes = [1, 1], strides = [1, 1]} : vector<8x8xf32> to vector<1x1xf32>
    %352 = vector.extract_strided_slice %1 {offsets = [1, 0, 0], sizes = [1, 8, 8], strides = [1, 1, 1]} : vector<8x8x8xf32> to vector<1x8x8xf32>
    %353 = vector.shape_cast %352 : vector<1x8x8xf32> to vector<8x8xf32>
    %354 = vector.broadcast %351 : vector<1x1xf32> to vector<8x8xf32>
    %355 = arith.mulf %354, %353 : vector<8x8xf32>
    %356 = arith.addf %350, %355 : vector<8x8xf32>
    %357 = vector.extract_strided_slice %2 {offsets = [2, 5], sizes = [1, 1], strides = [1, 1]} : vector<8x8xf32> to vector<1x1xf32>
    %358 = vector.extract_strided_slice %1 {offsets = [2, 0, 0], sizes = [1, 8, 8], strides = [1, 1, 1]} : vector<8x8x8xf32> to vector<1x8x8xf32>
    %359 = vector.shape_cast %358 : vector<1x8x8xf32> to vector<8x8xf32>
    %360 = vector.broadcast %357 : vector<1x1xf32> to vector<8x8xf32>
    %361 = arith.mulf %360, %359 : vector<8x8xf32>
    %362 = arith.addf %356, %361 : vector<8x8xf32>
    %363 = vector.extract_strided_slice %2 {offsets = [3, 5], sizes = [1, 1], strides = [1, 1]} : vector<8x8xf32> to vector<1x1xf32>
    %364 = vector.extract_strided_slice %1 {offsets = [3, 0, 0], sizes = [1, 8, 8], strides = [1, 1, 1]} : vector<8x8x8xf32> to vector<1x8x8xf32>
    %365 = vector.shape_cast %364 : vector<1x8x8xf32> to vector<8x8xf32>
    %366 = vector.broadcast %363 : vector<1x1xf32> to vector<8x8xf32>
    %367 = arith.mulf %366, %365 : vector<8x8xf32>
    %368 = arith.addf %362, %367 : vector<8x8xf32>
    %369 = vector.extract_strided_slice %2 {offsets = [4, 5], sizes = [1, 1], strides = [1, 1]} : vector<8x8xf32> to vector<1x1xf32>
    %370 = vector.extract_strided_slice %1 {offsets = [4, 0, 0], sizes = [1, 8, 8], strides = [1, 1, 1]} : vector<8x8x8xf32> to vector<1x8x8xf32>
    %371 = vector.shape_cast %370 : vector<1x8x8xf32> to vector<8x8xf32>
    %372 = vector.broadcast %369 : vector<1x1xf32> to vector<8x8xf32>
    %373 = arith.mulf %372, %371 : vector<8x8xf32>
    %374 = arith.addf %368, %373 : vector<8x8xf32>
    %375 = vector.extract_strided_slice %2 {offsets = [5, 5], sizes = [1, 1], strides = [1, 1]} : vector<8x8xf32> to vector<1x1xf32>
    %376 = vector.extract_strided_slice %1 {offsets = [5, 0, 0], sizes = [1, 8, 8], strides = [1, 1, 1]} : vector<8x8x8xf32> to vector<1x8x8xf32>
    %377 = vector.shape_cast %376 : vector<1x8x8xf32> to vector<8x8xf32>
    %378 = vector.broadcast %375 : vector<1x1xf32> to vector<8x8xf32>
    %379 = arith.mulf %378, %377 : vector<8x8xf32>
    %380 = arith.addf %374, %379 : vector<8x8xf32>
    %381 = vector.extract_strided_slice %2 {offsets = [6, 5], sizes = [1, 1], strides = [1, 1]} : vector<8x8xf32> to vector<1x1xf32>
    %382 = vector.extract_strided_slice %1 {offsets = [6, 0, 0], sizes = [1, 8, 8], strides = [1, 1, 1]} : vector<8x8x8xf32> to vector<1x8x8xf32>
    %383 = vector.shape_cast %382 : vector<1x8x8xf32> to vector<8x8xf32>
    %384 = vector.broadcast %381 : vector<1x1xf32> to vector<8x8xf32>
    %385 = arith.mulf %384, %383 : vector<8x8xf32>
    %386 = arith.addf %380, %385 : vector<8x8xf32>
    %387 = vector.extract_strided_slice %2 {offsets = [7, 5], sizes = [1, 1], strides = [1, 1]} : vector<8x8xf32> to vector<1x1xf32>
    %388 = vector.extract_strided_slice %1 {offsets = [7, 0, 0], sizes = [1, 8, 8], strides = [1, 1, 1]} : vector<8x8x8xf32> to vector<1x8x8xf32>
    %389 = vector.shape_cast %388 : vector<1x8x8xf32> to vector<8x8xf32>
    %390 = vector.broadcast %387 : vector<1x1xf32> to vector<8x8xf32>
    %391 = arith.mulf %390, %389 : vector<8x8xf32>
    %392 = arith.addf %386, %391 : vector<8x8xf32>
    %393 = vector.extract_strided_slice %48 {offsets = [5, 0], sizes = [1, 8], strides = [1, 1]} : vector<8x8xf32> to vector<1x8xf32>
    %394 = vector.broadcast %393 : vector<1x8xf32> to vector<8x8xf32>
    %395 = arith.addf %392, %394 : vector<8x8xf32>
    %396 = vector.extract_strided_slice %50 {offsets = [0, 5], sizes = [8, 1], strides = [1, 1]} : vector<8x8xf32> to vector<8x1xf32>
    %397 = vector.broadcast %396 : vector<8x1xf32> to vector<8x8xf32>
    %398 = arith.addf %395, %397 : vector<8x8xf32>
    %399 = vector.extract_strided_slice %3 {offsets = [0, 5], sizes = [1, 1], strides = [1, 1]} : vector<1x8xf32> to vector<1x1xf32>
    %400 = vector.broadcast %399 : vector<1x1xf32> to vector<8x8xf32>
    %401 = arith.addf %398, %400 : vector<8x8xf32>
    %c0_52 = arith.constant 0 : index
    %c0_53 = arith.constant 0 : index
    %c5 = arith.constant 5 : index
    %c0_54 = arith.constant 0 : index
    %c0_55 = arith.constant 0 : index
    %402 = vector.load %arg10[%c0_52, %c0_53, %c5, %c0_54, %c0_55] : memref<1x1x8x8x8xf32, #tpu.memory_space<vmem>>, vector<1x1x1x8x8xf32>
    %403 = vector.shape_cast %402 : vector<1x1x1x8x8xf32> to vector<8x8xf32>
    %404 = vector.shape_cast %401 : vector<8x8xf32> to vector<1x1x1x8x8xf32>
    tpu.vector_store %arg10[%c0_52, %c0_53, %c5, %c0_54, %c0_55], %404 {strides = array<i32>} : memref<1x1x8x8x8xf32, #tpu.memory_space<vmem>>, vector<1x1x1x8x8xf32>,
    %405 = vector.extract_strided_slice %2 {offsets = [0, 6], sizes = [1, 1], strides = [1, 1]} : vector<8x8xf32> to vector<1x1xf32>
    %406 = vector.extract_strided_slice %1 {offsets = [0, 0, 0], sizes = [1, 8, 8], strides = [1, 1, 1]} : vector<8x8x8xf32> to vector<1x8x8xf32>
    %407 = vector.shape_cast %406 : vector<1x8x8xf32> to vector<8x8xf32>
    %408 = vector.broadcast %405 : vector<1x1xf32> to vector<8x8xf32>
    %409 = arith.mulf %408, %407 : vector<8x8xf32>
    %410 = vector.extract_strided_slice %2 {offsets = [1, 6], sizes = [1, 1], strides = [1, 1]} : vector<8x8xf32> to vector<1x1xf32>
    %411 = vector.extract_strided_slice %1 {offsets = [1, 0, 0], sizes = [1, 8, 8], strides = [1, 1, 1]} : vector<8x8x8xf32> to vector<1x8x8xf32>
    %412 = vector.shape_cast %411 : vector<1x8x8xf32> to vector<8x8xf32>
    %413 = vector.broadcast %410 : vector<1x1xf32> to vector<8x8xf32>
    %414 = arith.mulf %413, %412 : vector<8x8xf32>
    %415 = arith.addf %409, %414 : vector<8x8xf32>
    %416 = vector.extract_strided_slice %2 {offsets = [2, 6], sizes = [1, 1], strides = [1, 1]} : vector<8x8xf32> to vector<1x1xf32>
    %417 = vector.extract_strided_slice %1 {offsets = [2, 0, 0], sizes = [1, 8, 8], strides = [1, 1, 1]} : vector<8x8x8xf32> to vector<1x8x8xf32>
    %418 = vector.shape_cast %417 : vector<1x8x8xf32> to vector<8x8xf32>
    %419 = vector.broadcast %416 : vector<1x1xf32> to vector<8x8xf32>
    %420 = arith.mulf %419, %418 : vector<8x8xf32>
    %421 = arith.addf %415, %420 : vector<8x8xf32>
    %422 = vector.extract_strided_slice %2 {offsets = [3, 6], sizes = [1, 1], strides = [1, 1]} : vector<8x8xf32> to vector<1x1xf32>
    %423 = vector.extract_strided_slice %1 {offsets = [3, 0, 0], sizes = [1, 8, 8], strides = [1, 1, 1]} : vector<8x8x8xf32> to vector<1x8x8xf32>
    %424 = vector.shape_cast %423 : vector<1x8x8xf32> to vector<8x8xf32>
    %425 = vector.broadcast %422 : vector<1x1xf32> to vector<8x8xf32>
    %426 = arith.mulf %425, %424 : vector<8x8xf32>
    %427 = arith.addf %421, %426 : vector<8x8xf32>
    %428 = vector.extract_strided_slice %2 {offsets = [4, 6], sizes = [1, 1], strides = [1, 1]} : vector<8x8xf32> to vector<1x1xf32>
    %429 = vector.extract_strided_slice %1 {offsets = [4, 0, 0], sizes = [1, 8, 8], strides = [1, 1, 1]} : vector<8x8x8xf32> to vector<1x8x8xf32>
    %430 = vector.shape_cast %429 : vector<1x8x8xf32> to vector<8x8xf32>
    %431 = vector.broadcast %428 : vector<1x1xf32> to vector<8x8xf32>
    %432 = arith.mulf %431, %430 : vector<8x8xf32>
    %433 = arith.addf %427, %432 : vector<8x8xf32>
    %434 = vector.extract_strided_slice %2 {offsets = [5, 6], sizes = [1, 1], strides = [1, 1]} : vector<8x8xf32> to vector<1x1xf32>
    %435 = vector.extract_strided_slice %1 {offsets = [5, 0, 0], sizes = [1, 8, 8], strides = [1, 1, 1]} : vector<8x8x8xf32> to vector<1x8x8xf32>
    %436 = vector.shape_cast %435 : vector<1x8x8xf32> to vector<8x8xf32>
    %437 = vector.broadcast %434 : vector<1x1xf32> to vector<8x8xf32>
    %438 = arith.mulf %437, %436 : vector<8x8xf32>
    %439 = arith.addf %433, %438 : vector<8x8xf32>
    %440 = vector.extract_strided_slice %2 {offsets = [6, 6], sizes = [1, 1], strides = [1, 1]} : vector<8x8xf32> to vector<1x1xf32>
    %441 = vector.extract_strided_slice %1 {offsets = [6, 0, 0], sizes = [1, 8, 8], strides = [1, 1, 1]} : vector<8x8x8xf32> to vector<1x8x8xf32>
    %442 = vector.shape_cast %441 : vector<1x8x8xf32> to vector<8x8xf32>
    %443 = vector.broadcast %440 : vector<1x1xf32> to vector<8x8xf32>
    %444 = arith.mulf %443, %442 : vector<8x8xf32>
    %445 = arith.addf %439, %444 : vector<8x8xf32>
    %446 = vector.extract_strided_slice %2 {offsets = [7, 6], sizes = [1, 1], strides = [1, 1]} : vector<8x8xf32> to vector<1x1xf32>
    %447 = vector.extract_strided_slice %1 {offsets = [7, 0, 0], sizes = [1, 8, 8], strides = [1, 1, 1]} : vector<8x8x8xf32> to vector<1x8x8xf32>
    %448 = vector.shape_cast %447 : vector<1x8x8xf32> to vector<8x8xf32>
    %449 = vector.broadcast %446 : vector<1x1xf32> to vector<8x8xf32>
    %450 = arith.mulf %449, %448 : vector<8x8xf32>
    %451 = arith.addf %445, %450 : vector<8x8xf32>
    %452 = vector.extract_strided_slice %48 {offsets = [6, 0], sizes = [1, 8], strides = [1, 1]} : vector<8x8xf32> to vector<1x8xf32>
    %453 = vector.broadcast %452 : vector<1x8xf32> to vector<8x8xf32>
    %454 = arith.addf %451, %453 : vector<8x8xf32>
    %455 = vector.extract_strided_slice %50 {offsets = [0, 6], sizes = [8, 1], strides = [1, 1]} : vector<8x8xf32> to vector<8x1xf32>
    %456 = vector.broadcast %455 : vector<8x1xf32> to vector<8x8xf32>
    %457 = arith.addf %454, %456 : vector<8x8xf32>
    %458 = vector.extract_strided_slice %3 {offsets = [0, 6], sizes = [1, 1], strides = [1, 1]} : vector<1x8xf32> to vector<1x1xf32>
    %459 = vector.broadcast %458 : vector<1x1xf32> to vector<8x8xf32>
    %460 = arith.addf %457, %459 : vector<8x8xf32>
    %c0_56 = arith.constant 0 : index
    %c0_57 = arith.constant 0 : index
    %c6 = arith.constant 6 : index
    %c0_58 = arith.constant 0 : index
    %c0_59 = arith.constant 0 : index
    %461 = vector.load %arg10[%c0_56, %c0_57, %c6, %c0_58, %c0_59] : memref<1x1x8x8x8xf32, #tpu.memory_space<vmem>>, vector<1x1x1x8x8xf32>
    %462 = vector.shape_cast %461 : vector<1x1x1x8x8xf32> to vector<8x8xf32>
    %463 = vector.shape_cast %460 : vector<8x8xf32> to vector<1x1x1x8x8xf32>
    tpu.vector_store %arg10[%c0_56, %c0_57, %c6, %c0_58, %c0_59], %463 {strides = array<i32>} : memref<1x1x8x8x8xf32, #tpu.memory_space<vmem>>, vector<1x1x1x8x8xf32>,
    %464 = vector.extract_strided_slice %2 {offsets = [0, 7], sizes = [1, 1], strides = [1, 1]} : vector<8x8xf32> to vector<1x1xf32>
    %465 = vector.extract_strided_slice %1 {offsets = [0, 0, 0], sizes = [1, 8, 8], strides = [1, 1, 1]} : vector<8x8x8xf32> to vector<1x8x8xf32>
    %466 = vector.shape_cast %465 : vector<1x8x8xf32> to vector<8x8xf32>
    %467 = vector.broadcast %464 : vector<1x1xf32> to vector<8x8xf32>
    %468 = arith.mulf %467, %466 : vector<8x8xf32>
    %469 = vector.extract_strided_slice %2 {offsets = [1, 7], sizes = [1, 1], strides = [1, 1]} : vector<8x8xf32> to vector<1x1xf32>
    %470 = vector.extract_strided_slice %1 {offsets = [1, 0, 0], sizes = [1, 8, 8], strides = [1, 1, 1]} : vector<8x8x8xf32> to vector<1x8x8xf32>
    %471 = vector.shape_cast %470 : vector<1x8x8xf32> to vector<8x8xf32>
    %472 = vector.broadcast %469 : vector<1x1xf32> to vector<8x8xf32>
    %473 = arith.mulf %472, %471 : vector<8x8xf32>
    %474 = arith.addf %468, %473 : vector<8x8xf32>
    %475 = vector.extract_strided_slice %2 {offsets = [2, 7], sizes = [1, 1], strides = [1, 1]} : vector<8x8xf32> to vector<1x1xf32>
    %476 = vector.extract_strided_slice %1 {offsets = [2, 0, 0], sizes = [1, 8, 8], strides = [1, 1, 1]} : vector<8x8x8xf32> to vector<1x8x8xf32>
    %477 = vector.shape_cast %476 : vector<1x8x8xf32> to vector<8x8xf32>
    %478 = vector.broadcast %475 : vector<1x1xf32> to vector<8x8xf32>
    %479 = arith.mulf %478, %477 : vector<8x8xf32>
    %480 = arith.addf %474, %479 : vector<8x8xf32>
    %481 = vector.extract_strided_slice %2 {offsets = [3, 7], sizes = [1, 1], strides = [1, 1]} : vector<8x8xf32> to vector<1x1xf32>
    %482 = vector.extract_strided_slice %1 {offsets = [3, 0, 0], sizes = [1, 8, 8], strides = [1, 1, 1]} : vector<8x8x8xf32> to vector<1x8x8xf32>
    %483 = vector.shape_cast %482 : vector<1x8x8xf32> to vector<8x8xf32>
    %484 = vector.broadcast %481 : vector<1x1xf32> to vector<8x8xf32>
    %485 = arith.mulf %484, %483 : vector<8x8xf32>
    %486 = arith.addf %480, %485 : vector<8x8xf32>
    %487 = vector.extract_strided_slice %2 {offsets = [4, 7], sizes = [1, 1], strides = [1, 1]} : vector<8x8xf32> to vector<1x1xf32>
    %488 = vector.extract_strided_slice %1 {offsets = [4, 0, 0], sizes = [1, 8, 8], strides = [1, 1, 1]} : vector<8x8x8xf32> to vector<1x8x8xf32>
    %489 = vector.shape_cast %488 : vector<1x8x8xf32> to vector<8x8xf32>
    %490 = vector.broadcast %487 : vector<1x1xf32> to vector<8x8xf32>
    %491 = arith.mulf %490, %489 : vector<8x8xf32>
    %492 = arith.addf %486, %491 : vector<8x8xf32>
    %493 = vector.extract_strided_slice %2 {offsets = [5, 7], sizes = [1, 1], strides = [1, 1]} : vector<8x8xf32> to vector<1x1xf32>
    %494 = vector.extract_strided_slice %1 {offsets = [5, 0, 0], sizes = [1, 8, 8], strides = [1, 1, 1]} : vector<8x8x8xf32> to vector<1x8x8xf32>
    %495 = vector.shape_cast %494 : vector<1x8x8xf32> to vector<8x8xf32>
    %496 = vector.broadcast %493 : vector<1x1xf32> to vector<8x8xf32>
    %497 = arith.mulf %496, %495 : vector<8x8xf32>
    %498 = arith.addf %492, %497 : vector<8x8xf32>
    %499 = vector.extract_strided_slice %2 {offsets = [6, 7], sizes = [1, 1], strides = [1, 1]} : vector<8x8xf32> to vector<1x1xf32>
    %500 = vector.extract_strided_slice %1 {offsets = [6, 0, 0], sizes = [1, 8, 8], strides = [1, 1, 1]} : vector<8x8x8xf32> to vector<1x8x8xf32>
    %501 = vector.shape_cast %500 : vector<1x8x8xf32> to vector<8x8xf32>
    %502 = vector.broadcast %499 : vector<1x1xf32> to vector<8x8xf32>
    %503 = arith.mulf %502, %501 : vector<8x8xf32>
    %504 = arith.addf %498, %503 : vector<8x8xf32>
    %505 = vector.extract_strided_slice %2 {offsets = [7, 7], sizes = [1, 1], strides = [1, 1]} : vector<8x8xf32> to vector<1x1xf32>
    %506 = vector.extract_strided_slice %1 {offsets = [7, 0, 0], sizes = [1, 8, 8], strides = [1, 1, 1]} : vector<8x8x8xf32> to vector<1x8x8xf32>
    %507 = vector.shape_cast %506 : vector<1x8x8xf32> to vector<8x8xf32>
    %508 = vector.broadcast %505 : vector<1x1xf32> to vector<8x8xf32>
    %509 = arith.mulf %508, %507 : vector<8x8xf32>
    %510 = arith.addf %504, %509 : vector<8x8xf32>
    %511 = vector.extract_strided_slice %48 {offsets = [7, 0], sizes = [1, 8], strides = [1, 1]} : vector<8x8xf32> to vector<1x8xf32>
    %512 = vector.broadcast %511 : vector<1x8xf32> to vector<8x8xf32>
    %513 = arith.addf %510, %512 : vector<8x8xf32>
    %514 = vector.extract_strided_slice %50 {offsets = [0, 7], sizes = [8, 1], strides = [1, 1]} : vector<8x8xf32> to vector<8x1xf32>
    %515 = vector.broadcast %514 : vector<8x1xf32> to vector<8x8xf32>
    %516 = arith.addf %513, %515 : vector<8x8xf32>
    %517 = vector.extract_strided_slice %3 {offsets = [0, 7], sizes = [1, 1], strides = [1, 1]} : vector<1x8xf32> to vector<1x1xf32>
    %518 = vector.broadcast %517 : vector<1x1xf32> to vector<8x8xf32>
    %519 = arith.addf %516, %518 : vector<8x8xf32>
    %c0_60 = arith.constant 0 : index
    %c0_61 = arith.constant 0 : index
    %c7 = arith.constant 7 : index
    %c0_62 = arith.constant 0 : index
    %c0_63 = arith.constant 0 : index
    %520 = vector.load %arg10[%c0_60, %c0_61, %c7, %c0_62, %c0_63] : memref<1x1x8x8x8xf32, #tpu.memory_space<vmem>>, vector<1x1x1x8x8xf32>
    %521 = vector.shape_cast %520 : vector<1x1x1x8x8xf32> to vector<8x8xf32>
    %522 = vector.shape_cast %519 : vector<8x8xf32> to vector<1x1x1x8x8xf32>
    tpu.vector_store %arg10[%c0_60, %c0_61, %c7, %c0_62, %c0_63], %522 {strides = array<i32>} : memref<1x1x8x8x8xf32, #tpu.memory_space<vmem>>, vector<1x1x1x8x8xf32>,
    return
  }
  func.func @transform_0(%arg0: i32, %arg1: i32) -> (i32, i32, i32, i32, i32) {
    %c0_i32 = arith.constant 0 : i32
    %c0_i32_0 = arith.constant 0 : i32
    %c0_i32_1 = arith.constant 0 : i32
    %c0_i32_2 = arith.constant 0 : i32
    return %arg0, %arg1, %c0_i32, %c0_i32_0, %c0_i32_1 : i32, i32, i32, i32, i32
  }
  func.func @transform_1(%arg0: i32, %arg1: i32) -> (i32, i32, i32) {
    %c0_i32 = arith.constant 0 : i32
    %c0_i32_0 = arith.constant 0 : i32
    %c0_i32_1 = arith.constant 0 : i32
    return %arg1, %c0_i32, %c0_i32_0 : i32, i32, i32
  }
  func.func @transform_2(%arg0: i32, %arg1: i32) -> (i32, i32, i32) {
    %c0_i32 = arith.constant 0 : i32
    %c0_i32_0 = arith.constant 0 : i32
    %c0_i32_1 = arith.constant 0 : i32
    return %arg0, %c0_i32, %c0_i32_0 : i32, i32, i32
  }
  func.func @transform_3(%arg0: i32, %arg1: i32) -> (i32, i32, i32) {
    %c0_i32 = arith.constant 0 : i32
    %c0_i32_0 = arith.constant 0 : i32
    %c0_i32_1 = arith.constant 0 : i32
    return %arg0, %c0_i32, %c0_i32_0 : i32, i32, i32
  }
  func.func @transform_4(%arg0: i32, %arg1: i32) -> (i32, i32) {
    %c0_i32 = arith.constant 0 : i32
    %c0_i32_0 = arith.constant 0 : i32
    %c0_i32_1 = arith.constant 0 : i32
    return %c0_i32, %c0_i32_0 : i32, i32
  }
  func.func @transform_5(%arg0: i32, %arg1: i32) -> (i32, i32) {
    %c0_i32 = arith.constant 0 : i32
    %c0_i32_0 = arith.constant 0 : i32
    %c0_i32_1 = arith.constant 0 : i32
    return %c0_i32, %c0_i32_0 : i32, i32
  }
  func.func @transform_6(%arg0: i32, %arg1: i32) -> (i32, i32) {
    %c0_i32 = arith.constant 0 : i32
    %c0_i32_0 = arith.constant 0 : i32
    %c0_i32_1 = arith.constant 0 : i32
    return %c0_i32, %c0_i32_0 : i32, i32
  }
  func.func @transform_7(%arg0: i32, %arg1: i32) -> (i32, i32) {
    %c0_i32 = arith.constant 0 : i32
    %c0_i32_0 = arith.constant 0 : i32
    %c0_i32_1 = arith.constant 0 : i32
    return %c0_i32, %c0_i32_0 : i32, i32
  }
  func.func @transform_8(%arg0: i32, %arg1: i32) -> (i32, i32, i32, i32, i32) {
    %c0_i32 = arith.constant 0 : i32
    %c0_i32_0 = arith.constant 0 : i32
    %c0_i32_1 = arith.constant 0 : i32
    %c0_i32_2 = arith.constant 0 : i32
    return %arg0, %arg1, %c0_i32, %c0_i32_0, %c0_i32_1 : i32, i32, i32, i32, i32
  }
  func.func @transform_9(%arg0: i32, %arg1: i32) -> (i32, i32, i32, i32) {
    %c0_i32 = arith.constant 0 : i32
    %c0_i32_0 = arith.constant 0 : i32
    %c0_i32_1 = arith.constant 0 : i32
    return %arg0, %arg1, %c0_i32, %c0_i32_0 : i32, i32, i32, i32
  }
}

module attributes {stable_mosaic.version = 11 : i64} {
  func.func @kernel(%arg0: i32, %arg1: i32, %arg2: memref<1x1x8x8x8xf32, #tpu.memory_space<vmem>>, %arg3: memref<1x8x32xf32, #tpu.memory_space<vmem>>, %arg4: memref<1x1x8x16xf32, #tpu.memory_space<vmem>>, %arg5: memref<1x32x16xf32, #tpu.memory_space<vmem>>, %arg6: memref<1x16x16xf32, #tpu.memory_space<vmem>>, %arg7: memref<1x1x16xf32, #tpu.memory_space<vmem>>, %arg8: memref<8x8xf32, #tpu.memory_space<vmem>>, %arg9: memref<8x16xf32, #tpu.memory_space<vmem>>, %arg10: memref<16x8xf32, #tpu.memory_space<vmem>>, %arg11: memref<1x8xf32, #tpu.memory_space<vmem>>, %arg12: memref<1x1x8x8x8xf32, #tpu.memory_space<vmem>>, %arg13: memref<1x1x8x16xf32, #tpu.memory_space<vmem>>) attributes {dimension_semantics = [#tpu.dimension_semantics<parallel>, #tpu.dimension_semantics<parallel>], iteration_bounds = array<i64: 2, 2>, scalar_prefetch = 0 : i64, scratch_operands = 0 : i64, tpu.core_type = #tpu.core_type<tc>, window_params = [{transform_indices = @transform_0, window_bounds = array<i64: 1, 1, 8, 8, 8>}, {transform_indices = @transform_1, window_bounds = array<i64: 1, 8, 32>}, {transform_indices = @transform_2, window_bounds = array<i64: 1, 1, 8, 16>}, {transform_indices = @transform_3, window_bounds = array<i64: 1, 32, 16>}, {transform_indices = @transform_4, window_bounds = array<i64: 1, 16, 16>}, {transform_indices = @transform_5, window_bounds = array<i64: 1, 1, 16>}, {pipeline_mode = #tpu.pipeline_mode<synchronous>, transform_indices = @transform_6, window_bounds = array<i64: 8, 8>}, {pipeline_mode = #tpu.pipeline_mode<synchronous>, transform_indices = @transform_7, window_bounds = array<i64: 8, 16>}, {pipeline_mode = #tpu.pipeline_mode<synchronous>, transform_indices = @transform_8, window_bounds = array<i64: 16, 8>}, {pipeline_mode = #tpu.pipeline_mode<synchronous>, transform_indices = @transform_9, window_bounds = array<i64: 1, 8>}, {transform_indices = @transform_10, window_bounds = array<i64: 1, 1, 8, 8, 8>}, {transform_indices = @transform_11, window_bounds = array<i64: 1, 1, 8, 16>}]} {
    %c0 = arith.constant 0 : index
    %c0_0 = arith.constant 0 : index
    %c0_1 = arith.constant 0 : index
    %c0_2 = arith.constant 0 : index
    %c0_3 = arith.constant 0 : index
    %0 = vector.load %arg2[%c0, %c0_0, %c0_1, %c0_2, %c0_3] : memref<1x1x8x8x8xf32, #tpu.memory_space<vmem>>, vector<1x1x8x8x8xf32>
    %1 = vector.shape_cast %0 : vector<1x1x8x8x8xf32> to vector<8x8x8xf32>
    %c0_4 = arith.constant 0 : index
    %c0_5 = arith.constant 0 : index
    %2 = vector.load %arg8[%c0_4, %c0_5] : memref<8x8xf32, #tpu.memory_space<vmem>>, vector<8x8xf32>
    %c0_6 = arith.constant 0 : index
    %c0_7 = arith.constant 0 : index
    %3 = vector.load %arg11[%c0_6, %c0_7] : memref<1x8xf32, #tpu.memory_space<vmem>>, vector<1x8xf32>
    %c0_8 = arith.constant 0 : index
    %c0_9 = arith.constant 0 : index
    %c0_10 = arith.constant 0 : index
    %4 = vector.load %arg3[%c0_8, %c0_9, %c0_10] : memref<1x8x32xf32, #tpu.memory_space<vmem>>, vector<1x8x32xf32>
    %5 = vector.shape_cast %4 : vector<1x8x32xf32> to vector<8x32xf32>
    %c0_11 = arith.constant 0 : index
    %c0_12 = arith.constant 0 : index
    %c0_13 = arith.constant 0 : index
    %6 = vector.load %arg5[%c0_11, %c0_12, %c0_13] : memref<1x32x16xf32, #tpu.memory_space<vmem>>, vector<1x32x16xf32>
    %7 = vector.shape_cast %6 : vector<1x32x16xf32> to vector<32x16xf32>
    %cst = arith.constant dense<0.000000e+00> : vector<8x16xf32>
    %8 = tpu.matmul %5, %7, %cst {dimension_numbers = #tpu.dot_dimension_numbers<[1], [0], [0], [1], [0, 0, 1, 1], [], []>} : vector<8x32xf32>, vector<32x16xf32>, vector<8x16xf32> -> vector<8x16xf32>
    %c0_14 = arith.constant 0 : index
    %c0_15 = arith.constant 0 : index
    %c0_16 = arith.constant 0 : index
    %c0_17 = arith.constant 0 : index
    %9 = vector.load %arg4[%c0_14, %c0_15, %c0_16, %c0_17] : memref<1x1x8x16xf32, #tpu.memory_space<vmem>>, vector<1x1x8x16xf32>
    %10 = vector.shape_cast %9 : vector<1x1x8x16xf32> to vector<8x16xf32>
    %c0_18 = arith.constant 0 : index
    %c0_19 = arith.constant 0 : index
    %c0_20 = arith.constant 0 : index
    %11 = vector.load %arg6[%c0_18, %c0_19, %c0_20] : memref<1x16x16xf32, #tpu.memory_space<vmem>>, vector<1x16x16xf32>
    %12 = vector.shape_cast %11 : vector<1x16x16xf32> to vector<16x16xf32>
    %cst_21 = arith.constant dense<0.000000e+00> : vector<8x16xf32>
    %13 = tpu.matmul %10, %12, %cst_21 {dimension_numbers = #tpu.dot_dimension_numbers<[1], [0], [0], [1], [0, 0, 1, 1], [], []>} : vector<8x16xf32>, vector<16x16xf32>, vector<8x16xf32> -> vector<8x16xf32>
    %14 = arith.addf %8, %13 : vector<8x16xf32>
    %15 = vector.extract_strided_slice %1 {offsets = [0, 0, 0], sizes = [1, 8, 8], strides = [1, 1, 1]} : vector<8x8x8xf32> to vector<1x8x8xf32>
    %16 = vector.shape_cast %15 : vector<1x8x8xf32> to vector<8x8xf32>
    %17 = vector.extract_strided_slice %1 {offsets = [1, 0, 0], sizes = [1, 8, 8], strides = [1, 1, 1]} : vector<8x8x8xf32> to vector<1x8x8xf32>
    %18 = vector.shape_cast %17 : vector<1x8x8xf32> to vector<8x8xf32>
    %19 = arith.addf %16, %18 : vector<8x8xf32>
    %20 = vector.extract_strided_slice %1 {offsets = [2, 0, 0], sizes = [1, 8, 8], strides = [1, 1, 1]} : vector<8x8x8xf32> to vector<1x8x8xf32>
    %21 = vector.shape_cast %20 : vector<1x8x8xf32> to vector<8x8xf32>
    %22 = arith.addf %19, %21 : vector<8x8xf32>
    %23 = vector.extract_strided_slice %1 {offsets = [3, 0, 0], sizes = [1, 8, 8], strides = [1, 1, 1]} : vector<8x8x8xf32> to vector<1x8x8xf32>
    %24 = vector.shape_cast %23 : vector<1x8x8xf32> to vector<8x8xf32>
    %25 = arith.addf %22, %24 : vector<8x8xf32>
    %26 = vector.extract_strided_slice %1 {offsets = [4, 0, 0], sizes = [1, 8, 8], strides = [1, 1, 1]} : vector<8x8x8xf32> to vector<1x8x8xf32>
    %27 = vector.shape_cast %26 : vector<1x8x8xf32> to vector<8x8xf32>
    %28 = arith.addf %25, %27 : vector<8x8xf32>
    %29 = vector.extract_strided_slice %1 {offsets = [5, 0, 0], sizes = [1, 8, 8], strides = [1, 1, 1]} : vector<8x8x8xf32> to vector<1x8x8xf32>
    %30 = vector.shape_cast %29 : vector<1x8x8xf32> to vector<8x8xf32>
    %31 = arith.addf %28, %30 : vector<8x8xf32>
    %32 = vector.extract_strided_slice %1 {offsets = [6, 0, 0], sizes = [1, 8, 8], strides = [1, 1, 1]} : vector<8x8x8xf32> to vector<1x8x8xf32>
    %33 = vector.shape_cast %32 : vector<1x8x8xf32> to vector<8x8xf32>
    %34 = arith.addf %31, %33 : vector<8x8xf32>
    %35 = vector.extract_strided_slice %1 {offsets = [7, 0, 0], sizes = [1, 8, 8], strides = [1, 1, 1]} : vector<8x8x8xf32> to vector<1x8x8xf32>
    %36 = vector.shape_cast %35 : vector<1x8x8xf32> to vector<8x8xf32>
    %37 = arith.addf %34, %36 : vector<8x8xf32>
    %cst_22 = arith.constant 1.250000e-01 : f32
    %38 = vector.broadcast %cst_22 : f32 to vector<8x8xf32>
    %39 = arith.mulf %37, %38 : vector<8x8xf32>
    %cst_23 = arith.constant dense<0.000000e+00> : vector<8x16xf32>
    %40 = tpu.matmul %39, %14, %cst_23 {dimension_numbers = #tpu.dot_dimension_numbers<[1], [0], [0], [1], [0, 0, 1, 1], [], []>} : vector<8x8xf32>, vector<8x16xf32>, vector<8x16xf32> -> vector<8x16xf32>
    %41 = arith.addf %40, %14 : vector<8x16xf32>
    %c0_24 = arith.constant 0 : index
    %c0_25 = arith.constant 0 : index
    %c0_26 = arith.constant 0 : index
    %42 = vector.load %arg7[%c0_24, %c0_25, %c0_26] : memref<1x1x16xf32, #tpu.memory_space<vmem>>, vector<1x1x16xf32>
    %43 = vector.shape_cast %42 : vector<1x1x16xf32> to vector<1x16xf32>
    %cst_27 = arith.constant 2.000000e+00 : f32
    %44 = vector.broadcast %cst_27 : f32 to vector<1x16xf32>
    %45 = arith.mulf %44, %43 : vector<1x16xf32>
    %46 = vector.broadcast %45 : vector<1x16xf32> to vector<8x16xf32>
    %47 = arith.addf %41, %46 : vector<8x16xf32>
    %cst_28 = arith.constant 0.000000e+00 : f32
    %48 = vector.broadcast %cst_28 : f32 to vector<8x16xf32>
    %49 = arith.maximumf %47, %48 : vector<8x16xf32>
    %c0_29 = arith.constant 0 : index
    %c0_30 = arith.constant 0 : index
    %c0_31 = arith.constant 0 : index
    %c0_32 = arith.constant 0 : index
    %50 = vector.load %arg13[%c0_29, %c0_30, %c0_31, %c0_32] : memref<1x1x8x16xf32, #tpu.memory_space<vmem>>, vector<1x1x8x16xf32>
    %51 = vector.shape_cast %50 : vector<1x1x8x16xf32> to vector<8x16xf32>
    %52 = vector.shape_cast %49 : vector<8x16xf32> to vector<1x1x8x16xf32>
    tpu.vector_store %arg13[%c0_29, %c0_30, %c0_31, %c0_32], %52 {strides = array<i32>} : memref<1x1x8x16xf32, #tpu.memory_space<vmem>>, vector<1x1x8x16xf32>,
    %c0_33 = arith.constant 0 : index
    %c0_34 = arith.constant 0 : index
    %53 = vector.load %arg9[%c0_33, %c0_34] : memref<8x16xf32, #tpu.memory_space<vmem>>, vector<8x16xf32>
    %cst_35 = arith.constant dense<0.000000e+00> : vector<8x8xf32>
    %54 = tpu.matmul %53, %49, %cst_35 {dimension_numbers = #tpu.dot_dimension_numbers<[1], [1], [0], [0], [0, 0, 1, 0], [], []>} : vector<8x16xf32>, vector<8x16xf32>, vector<8x8xf32> -> vector<8x8xf32>
    %c0_36 = arith.constant 0 : index
    %c0_37 = arith.constant 0 : index
    %55 = vector.load %arg10[%c0_36, %c0_37] : memref<16x8xf32, #tpu.memory_space<vmem>>, vector<16x8xf32>
    %cst_38 = arith.constant dense<0.000000e+00> : vector<8x8xf32>
    %56 = tpu.matmul %49, %55, %cst_38 {dimension_numbers = #tpu.dot_dimension_numbers<[1], [0], [0], [1], [0, 0, 1, 1], [], []>} : vector<8x16xf32>, vector<16x8xf32>, vector<8x8xf32> -> vector<8x8xf32>
    %57 = vector.extract_strided_slice %2 {offsets = [0, 0], sizes = [1, 1], strides = [1, 1]} : vector<8x8xf32> to vector<1x1xf32>
    %58 = vector.extract_strided_slice %1 {offsets = [0, 0, 0], sizes = [1, 8, 8], strides = [1, 1, 1]} : vector<8x8x8xf32> to vector<1x8x8xf32>
    %59 = vector.shape_cast %58 : vector<1x8x8xf32> to vector<8x8xf32>
    %60 = vector.broadcast %57 : vector<1x1xf32> to vector<8x8xf32>
    %61 = arith.mulf %60, %59 : vector<8x8xf32>
    %62 = vector.extract_strided_slice %2 {offsets = [1, 0], sizes = [1, 1], strides = [1, 1]} : vector<8x8xf32> to vector<1x1xf32>
    %63 = vector.extract_strided_slice %1 {offsets = [1, 0, 0], sizes = [1, 8, 8], strides = [1, 1, 1]} : vector<8x8x8xf32> to vector<1x8x8xf32>
    %64 = vector.shape_cast %63 : vector<1x8x8xf32> to vector<8x8xf32>
    %65 = vector.broadcast %62 : vector<1x1xf32> to vector<8x8xf32>
    %66 = arith.mulf %65, %64 : vector<8x8xf32>
    %67 = arith.addf %61, %66 : vector<8x8xf32>
    %68 = vector.extract_strided_slice %2 {offsets = [2, 0], sizes = [1, 1], strides = [1, 1]} : vector<8x8xf32> to vector<1x1xf32>
    %69 = vector.extract_strided_slice %1 {offsets = [2, 0, 0], sizes = [1, 8, 8], strides = [1, 1, 1]} : vector<8x8x8xf32> to vector<1x8x8xf32>
    %70 = vector.shape_cast %69 : vector<1x8x8xf32> to vector<8x8xf32>
    %71 = vector.broadcast %68 : vector<1x1xf32> to vector<8x8xf32>
    %72 = arith.mulf %71, %70 : vector<8x8xf32>
    %73 = arith.addf %67, %72 : vector<8x8xf32>
    %74 = vector.extract_strided_slice %2 {offsets = [3, 0], sizes = [1, 1], strides = [1, 1]} : vector<8x8xf32> to vector<1x1xf32>
    %75 = vector.extract_strided_slice %1 {offsets = [3, 0, 0], sizes = [1, 8, 8], strides = [1, 1, 1]} : vector<8x8x8xf32> to vector<1x8x8xf32>
    %76 = vector.shape_cast %75 : vector<1x8x8xf32> to vector<8x8xf32>
    %77 = vector.broadcast %74 : vector<1x1xf32> to vector<8x8xf32>
    %78 = arith.mulf %77, %76 : vector<8x8xf32>
    %79 = arith.addf %73, %78 : vector<8x8xf32>
    %80 = vector.extract_strided_slice %2 {offsets = [4, 0], sizes = [1, 1], strides = [1, 1]} : vector<8x8xf32> to vector<1x1xf32>
    %81 = vector.extract_strided_slice %1 {offsets = [4, 0, 0], sizes = [1, 8, 8], strides = [1, 1, 1]} : vector<8x8x8xf32> to vector<1x8x8xf32>
    %82 = vector.shape_cast %81 : vector<1x8x8xf32> to vector<8x8xf32>
    %83 = vector.broadcast %80 : vector<1x1xf32> to vector<8x8xf32>
    %84 = arith.mulf %83, %82 : vector<8x8xf32>
    %85 = arith.addf %79, %84 : vector<8x8xf32>
    %86 = vector.extract_strided_slice %2 {offsets = [5, 0], sizes = [1, 1], strides = [1, 1]} : vector<8x8xf32> to vector<1x1xf32>
    %87 = vector.extract_strided_slice %1 {offsets = [5, 0, 0], sizes = [1, 8, 8], strides = [1, 1, 1]} : vector<8x8x8xf32> to vector<1x8x8xf32>
    %88 = vector.shape_cast %87 : vector<1x8x8xf32> to vector<8x8xf32>
    %89 = vector.broadcast %86 : vector<1x1xf32> to vector<8x8xf32>
    %90 = arith.mulf %89, %88 : vector<8x8xf32>
    %91 = arith.addf %85, %90 : vector<8x8xf32>
    %92 = vector.extract_strided_slice %2 {offsets = [6, 0], sizes = [1, 1], strides = [1, 1]} : vector<8x8xf32> to vector<1x1xf32>
    %93 = vector.extract_strided_slice %1 {offsets = [6, 0, 0], sizes = [1, 8, 8], strides = [1, 1, 1]} : vector<8x8x8xf32> to vector<1x8x8xf32>
    %94 = vector.shape_cast %93 : vector<1x8x8xf32> to vector<8x8xf32>
    %95 = vector.broadcast %92 : vector<1x1xf32> to vector<8x8xf32>
    %96 = arith.mulf %95, %94 : vector<8x8xf32>
    %97 = arith.addf %91, %96 : vector<8x8xf32>
    %98 = vector.extract_strided_slice %2 {offsets = [7, 0], sizes = [1, 1], strides = [1, 1]} : vector<8x8xf32> to vector<1x1xf32>
    %99 = vector.extract_strided_slice %1 {offsets = [7, 0, 0], sizes = [1, 8, 8], strides = [1, 1, 1]} : vector<8x8x8xf32> to vector<1x8x8xf32>
    %100 = vector.shape_cast %99 : vector<1x8x8xf32> to vector<8x8xf32>
    %101 = vector.broadcast %98 : vector<1x1xf32> to vector<8x8xf32>
    %102 = arith.mulf %101, %100 : vector<8x8xf32>
    %103 = arith.addf %97, %102 : vector<8x8xf32>
    %104 = vector.extract_strided_slice %54 {offsets = [0, 0], sizes = [1, 8], strides = [1, 1]} : vector<8x8xf32> to vector<1x8xf32>
    %105 = vector.broadcast %104 : vector<1x8xf32> to vector<8x8xf32>
    %106 = arith.addf %103, %105 : vector<8x8xf32>
    %107 = vector.extract_strided_slice %56 {offsets = [0, 0], sizes = [8, 1], strides = [1, 1]} : vector<8x8xf32> to vector<8x1xf32>
    %108 = vector.broadcast %107 : vector<8x1xf32> to vector<8x8xf32>
    %109 = arith.addf %106, %108 : vector<8x8xf32>
    %110 = vector.extract_strided_slice %3 {offsets = [0, 0], sizes = [1, 1], strides = [1, 1]} : vector<1x8xf32> to vector<1x1xf32>
    %111 = vector.broadcast %110 : vector<1x1xf32> to vector<8x8xf32>
    %112 = arith.addf %109, %111 : vector<8x8xf32>
    %c0_39 = arith.constant 0 : index
    %c0_40 = arith.constant 0 : index
    %c0_41 = arith.constant 0 : index
    %c0_42 = arith.constant 0 : index
    %c0_43 = arith.constant 0 : index
    %113 = vector.load %arg12[%c0_39, %c0_40, %c0_41, %c0_42, %c0_43] : memref<1x1x8x8x8xf32, #tpu.memory_space<vmem>>, vector<1x1x1x8x8xf32>
    %114 = vector.shape_cast %113 : vector<1x1x1x8x8xf32> to vector<8x8xf32>
    %115 = vector.shape_cast %112 : vector<8x8xf32> to vector<1x1x1x8x8xf32>
    tpu.vector_store %arg12[%c0_39, %c0_40, %c0_41, %c0_42, %c0_43], %115 {strides = array<i32>} : memref<1x1x8x8x8xf32, #tpu.memory_space<vmem>>, vector<1x1x1x8x8xf32>,
    %116 = vector.extract_strided_slice %2 {offsets = [0, 1], sizes = [1, 1], strides = [1, 1]} : vector<8x8xf32> to vector<1x1xf32>
    %117 = vector.extract_strided_slice %1 {offsets = [0, 0, 0], sizes = [1, 8, 8], strides = [1, 1, 1]} : vector<8x8x8xf32> to vector<1x8x8xf32>
    %118 = vector.shape_cast %117 : vector<1x8x8xf32> to vector<8x8xf32>
    %119 = vector.broadcast %116 : vector<1x1xf32> to vector<8x8xf32>
    %120 = arith.mulf %119, %118 : vector<8x8xf32>
    %121 = vector.extract_strided_slice %2 {offsets = [1, 1], sizes = [1, 1], strides = [1, 1]} : vector<8x8xf32> to vector<1x1xf32>
    %122 = vector.extract_strided_slice %1 {offsets = [1, 0, 0], sizes = [1, 8, 8], strides = [1, 1, 1]} : vector<8x8x8xf32> to vector<1x8x8xf32>
    %123 = vector.shape_cast %122 : vector<1x8x8xf32> to vector<8x8xf32>
    %124 = vector.broadcast %121 : vector<1x1xf32> to vector<8x8xf32>
    %125 = arith.mulf %124, %123 : vector<8x8xf32>
    %126 = arith.addf %120, %125 : vector<8x8xf32>
    %127 = vector.extract_strided_slice %2 {offsets = [2, 1], sizes = [1, 1], strides = [1, 1]} : vector<8x8xf32> to vector<1x1xf32>
    %128 = vector.extract_strided_slice %1 {offsets = [2, 0, 0], sizes = [1, 8, 8], strides = [1, 1, 1]} : vector<8x8x8xf32> to vector<1x8x8xf32>
    %129 = vector.shape_cast %128 : vector<1x8x8xf32> to vector<8x8xf32>
    %130 = vector.broadcast %127 : vector<1x1xf32> to vector<8x8xf32>
    %131 = arith.mulf %130, %129 : vector<8x8xf32>
    %132 = arith.addf %126, %131 : vector<8x8xf32>
    %133 = vector.extract_strided_slice %2 {offsets = [3, 1], sizes = [1, 1], strides = [1, 1]} : vector<8x8xf32> to vector<1x1xf32>
    %134 = vector.extract_strided_slice %1 {offsets = [3, 0, 0], sizes = [1, 8, 8], strides = [1, 1, 1]} : vector<8x8x8xf32> to vector<1x8x8xf32>
    %135 = vector.shape_cast %134 : vector<1x8x8xf32> to vector<8x8xf32>
    %136 = vector.broadcast %133 : vector<1x1xf32> to vector<8x8xf32>
    %137 = arith.mulf %136, %135 : vector<8x8xf32>
    %138 = arith.addf %132, %137 : vector<8x8xf32>
    %139 = vector.extract_strided_slice %2 {offsets = [4, 1], sizes = [1, 1], strides = [1, 1]} : vector<8x8xf32> to vector<1x1xf32>
    %140 = vector.extract_strided_slice %1 {offsets = [4, 0, 0], sizes = [1, 8, 8], strides = [1, 1, 1]} : vector<8x8x8xf32> to vector<1x8x8xf32>
    %141 = vector.shape_cast %140 : vector<1x8x8xf32> to vector<8x8xf32>
    %142 = vector.broadcast %139 : vector<1x1xf32> to vector<8x8xf32>
    %143 = arith.mulf %142, %141 : vector<8x8xf32>
    %144 = arith.addf %138, %143 : vector<8x8xf32>
    %145 = vector.extract_strided_slice %2 {offsets = [5, 1], sizes = [1, 1], strides = [1, 1]} : vector<8x8xf32> to vector<1x1xf32>
    %146 = vector.extract_strided_slice %1 {offsets = [5, 0, 0], sizes = [1, 8, 8], strides = [1, 1, 1]} : vector<8x8x8xf32> to vector<1x8x8xf32>
    %147 = vector.shape_cast %146 : vector<1x8x8xf32> to vector<8x8xf32>
    %148 = vector.broadcast %145 : vector<1x1xf32> to vector<8x8xf32>
    %149 = arith.mulf %148, %147 : vector<8x8xf32>
    %150 = arith.addf %144, %149 : vector<8x8xf32>
    %151 = vector.extract_strided_slice %2 {offsets = [6, 1], sizes = [1, 1], strides = [1, 1]} : vector<8x8xf32> to vector<1x1xf32>
    %152 = vector.extract_strided_slice %1 {offsets = [6, 0, 0], sizes = [1, 8, 8], strides = [1, 1, 1]} : vector<8x8x8xf32> to vector<1x8x8xf32>
    %153 = vector.shape_cast %152 : vector<1x8x8xf32> to vector<8x8xf32>
    %154 = vector.broadcast %151 : vector<1x1xf32> to vector<8x8xf32>
    %155 = arith.mulf %154, %153 : vector<8x8xf32>
    %156 = arith.addf %150, %155 : vector<8x8xf32>
    %157 = vector.extract_strided_slice %2 {offsets = [7, 1], sizes = [1, 1], strides = [1, 1]} : vector<8x8xf32> to vector<1x1xf32>
    %158 = vector.extract_strided_slice %1 {offsets = [7, 0, 0], sizes = [1, 8, 8], strides = [1, 1, 1]} : vector<8x8x8xf32> to vector<1x8x8xf32>
    %159 = vector.shape_cast %158 : vector<1x8x8xf32> to vector<8x8xf32>
    %160 = vector.broadcast %157 : vector<1x1xf32> to vector<8x8xf32>
    %161 = arith.mulf %160, %159 : vector<8x8xf32>
    %162 = arith.addf %156, %161 : vector<8x8xf32>
    %163 = vector.extract_strided_slice %54 {offsets = [1, 0], sizes = [1, 8], strides = [1, 1]} : vector<8x8xf32> to vector<1x8xf32>
    %164 = vector.broadcast %163 : vector<1x8xf32> to vector<8x8xf32>
    %165 = arith.addf %162, %164 : vector<8x8xf32>
    %166 = vector.extract_strided_slice %56 {offsets = [0, 1], sizes = [8, 1], strides = [1, 1]} : vector<8x8xf32> to vector<8x1xf32>
    %167 = vector.broadcast %166 : vector<8x1xf32> to vector<8x8xf32>
    %168 = arith.addf %165, %167 : vector<8x8xf32>
    %169 = vector.extract_strided_slice %3 {offsets = [0, 1], sizes = [1, 1], strides = [1, 1]} : vector<1x8xf32> to vector<1x1xf32>
    %170 = vector.broadcast %169 : vector<1x1xf32> to vector<8x8xf32>
    %171 = arith.addf %168, %170 : vector<8x8xf32>
    %c0_44 = arith.constant 0 : index
    %c0_45 = arith.constant 0 : index
    %c1 = arith.constant 1 : index
    %c0_46 = arith.constant 0 : index
    %c0_47 = arith.constant 0 : index
    %172 = vector.load %arg12[%c0_44, %c0_45, %c1, %c0_46, %c0_47] : memref<1x1x8x8x8xf32, #tpu.memory_space<vmem>>, vector<1x1x1x8x8xf32>
    %173 = vector.shape_cast %172 : vector<1x1x1x8x8xf32> to vector<8x8xf32>
    %174 = vector.shape_cast %171 : vector<8x8xf32> to vector<1x1x1x8x8xf32>
    tpu.vector_store %arg12[%c0_44, %c0_45, %c1, %c0_46, %c0_47], %174 {strides = array<i32>} : memref<1x1x8x8x8xf32, #tpu.memory_space<vmem>>, vector<1x1x1x8x8xf32>,
    %175 = vector.extract_strided_slice %2 {offsets = [0, 2], sizes = [1, 1], strides = [1, 1]} : vector<8x8xf32> to vector<1x1xf32>
    %176 = vector.extract_strided_slice %1 {offsets = [0, 0, 0], sizes = [1, 8, 8], strides = [1, 1, 1]} : vector<8x8x8xf32> to vector<1x8x8xf32>
    %177 = vector.shape_cast %176 : vector<1x8x8xf32> to vector<8x8xf32>
    %178 = vector.broadcast %175 : vector<1x1xf32> to vector<8x8xf32>
    %179 = arith.mulf %178, %177 : vector<8x8xf32>
    %180 = vector.extract_strided_slice %2 {offsets = [1, 2], sizes = [1, 1], strides = [1, 1]} : vector<8x8xf32> to vector<1x1xf32>
    %181 = vector.extract_strided_slice %1 {offsets = [1, 0, 0], sizes = [1, 8, 8], strides = [1, 1, 1]} : vector<8x8x8xf32> to vector<1x8x8xf32>
    %182 = vector.shape_cast %181 : vector<1x8x8xf32> to vector<8x8xf32>
    %183 = vector.broadcast %180 : vector<1x1xf32> to vector<8x8xf32>
    %184 = arith.mulf %183, %182 : vector<8x8xf32>
    %185 = arith.addf %179, %184 : vector<8x8xf32>
    %186 = vector.extract_strided_slice %2 {offsets = [2, 2], sizes = [1, 1], strides = [1, 1]} : vector<8x8xf32> to vector<1x1xf32>
    %187 = vector.extract_strided_slice %1 {offsets = [2, 0, 0], sizes = [1, 8, 8], strides = [1, 1, 1]} : vector<8x8x8xf32> to vector<1x8x8xf32>
    %188 = vector.shape_cast %187 : vector<1x8x8xf32> to vector<8x8xf32>
    %189 = vector.broadcast %186 : vector<1x1xf32> to vector<8x8xf32>
    %190 = arith.mulf %189, %188 : vector<8x8xf32>
    %191 = arith.addf %185, %190 : vector<8x8xf32>
    %192 = vector.extract_strided_slice %2 {offsets = [3, 2], sizes = [1, 1], strides = [1, 1]} : vector<8x8xf32> to vector<1x1xf32>
    %193 = vector.extract_strided_slice %1 {offsets = [3, 0, 0], sizes = [1, 8, 8], strides = [1, 1, 1]} : vector<8x8x8xf32> to vector<1x8x8xf32>
    %194 = vector.shape_cast %193 : vector<1x8x8xf32> to vector<8x8xf32>
    %195 = vector.broadcast %192 : vector<1x1xf32> to vector<8x8xf32>
    %196 = arith.mulf %195, %194 : vector<8x8xf32>
    %197 = arith.addf %191, %196 : vector<8x8xf32>
    %198 = vector.extract_strided_slice %2 {offsets = [4, 2], sizes = [1, 1], strides = [1, 1]} : vector<8x8xf32> to vector<1x1xf32>
    %199 = vector.extract_strided_slice %1 {offsets = [4, 0, 0], sizes = [1, 8, 8], strides = [1, 1, 1]} : vector<8x8x8xf32> to vector<1x8x8xf32>
    %200 = vector.shape_cast %199 : vector<1x8x8xf32> to vector<8x8xf32>
    %201 = vector.broadcast %198 : vector<1x1xf32> to vector<8x8xf32>
    %202 = arith.mulf %201, %200 : vector<8x8xf32>
    %203 = arith.addf %197, %202 : vector<8x8xf32>
    %204 = vector.extract_strided_slice %2 {offsets = [5, 2], sizes = [1, 1], strides = [1, 1]} : vector<8x8xf32> to vector<1x1xf32>
    %205 = vector.extract_strided_slice %1 {offsets = [5, 0, 0], sizes = [1, 8, 8], strides = [1, 1, 1]} : vector<8x8x8xf32> to vector<1x8x8xf32>
    %206 = vector.shape_cast %205 : vector<1x8x8xf32> to vector<8x8xf32>
    %207 = vector.broadcast %204 : vector<1x1xf32> to vector<8x8xf32>
    %208 = arith.mulf %207, %206 : vector<8x8xf32>
    %209 = arith.addf %203, %208 : vector<8x8xf32>
    %210 = vector.extract_strided_slice %2 {offsets = [6, 2], sizes = [1, 1], strides = [1, 1]} : vector<8x8xf32> to vector<1x1xf32>
    %211 = vector.extract_strided_slice %1 {offsets = [6, 0, 0], sizes = [1, 8, 8], strides = [1, 1, 1]} : vector<8x8x8xf32> to vector<1x8x8xf32>
    %212 = vector.shape_cast %211 : vector<1x8x8xf32> to vector<8x8xf32>
    %213 = vector.broadcast %210 : vector<1x1xf32> to vector<8x8xf32>
    %214 = arith.mulf %213, %212 : vector<8x8xf32>
    %215 = arith.addf %209, %214 : vector<8x8xf32>
    %216 = vector.extract_strided_slice %2 {offsets = [7, 2], sizes = [1, 1], strides = [1, 1]} : vector<8x8xf32> to vector<1x1xf32>
    %217 = vector.extract_strided_slice %1 {offsets = [7, 0, 0], sizes = [1, 8, 8], strides = [1, 1, 1]} : vector<8x8x8xf32> to vector<1x8x8xf32>
    %218 = vector.shape_cast %217 : vector<1x8x8xf32> to vector<8x8xf32>
    %219 = vector.broadcast %216 : vector<1x1xf32> to vector<8x8xf32>
    %220 = arith.mulf %219, %218 : vector<8x8xf32>
    %221 = arith.addf %215, %220 : vector<8x8xf32>
    %222 = vector.extract_strided_slice %54 {offsets = [2, 0], sizes = [1, 8], strides = [1, 1]} : vector<8x8xf32> to vector<1x8xf32>
    %223 = vector.broadcast %222 : vector<1x8xf32> to vector<8x8xf32>
    %224 = arith.addf %221, %223 : vector<8x8xf32>
    %225 = vector.extract_strided_slice %56 {offsets = [0, 2], sizes = [8, 1], strides = [1, 1]} : vector<8x8xf32> to vector<8x1xf32>
    %226 = vector.broadcast %225 : vector<8x1xf32> to vector<8x8xf32>
    %227 = arith.addf %224, %226 : vector<8x8xf32>
    %228 = vector.extract_strided_slice %3 {offsets = [0, 2], sizes = [1, 1], strides = [1, 1]} : vector<1x8xf32> to vector<1x1xf32>
    %229 = vector.broadcast %228 : vector<1x1xf32> to vector<8x8xf32>
    %230 = arith.addf %227, %229 : vector<8x8xf32>
    %c0_48 = arith.constant 0 : index
    %c0_49 = arith.constant 0 : index
    %c2 = arith.constant 2 : index
    %c0_50 = arith.constant 0 : index
    %c0_51 = arith.constant 0 : index
    %231 = vector.load %arg12[%c0_48, %c0_49, %c2, %c0_50, %c0_51] : memref<1x1x8x8x8xf32, #tpu.memory_space<vmem>>, vector<1x1x1x8x8xf32>
    %232 = vector.shape_cast %231 : vector<1x1x1x8x8xf32> to vector<8x8xf32>
    %233 = vector.shape_cast %230 : vector<8x8xf32> to vector<1x1x1x8x8xf32>
    tpu.vector_store %arg12[%c0_48, %c0_49, %c2, %c0_50, %c0_51], %233 {strides = array<i32>} : memref<1x1x8x8x8xf32, #tpu.memory_space<vmem>>, vector<1x1x1x8x8xf32>,
    %234 = vector.extract_strided_slice %2 {offsets = [0, 3], sizes = [1, 1], strides = [1, 1]} : vector<8x8xf32> to vector<1x1xf32>
    %235 = vector.extract_strided_slice %1 {offsets = [0, 0, 0], sizes = [1, 8, 8], strides = [1, 1, 1]} : vector<8x8x8xf32> to vector<1x8x8xf32>
    %236 = vector.shape_cast %235 : vector<1x8x8xf32> to vector<8x8xf32>
    %237 = vector.broadcast %234 : vector<1x1xf32> to vector<8x8xf32>
    %238 = arith.mulf %237, %236 : vector<8x8xf32>
    %239 = vector.extract_strided_slice %2 {offsets = [1, 3], sizes = [1, 1], strides = [1, 1]} : vector<8x8xf32> to vector<1x1xf32>
    %240 = vector.extract_strided_slice %1 {offsets = [1, 0, 0], sizes = [1, 8, 8], strides = [1, 1, 1]} : vector<8x8x8xf32> to vector<1x8x8xf32>
    %241 = vector.shape_cast %240 : vector<1x8x8xf32> to vector<8x8xf32>
    %242 = vector.broadcast %239 : vector<1x1xf32> to vector<8x8xf32>
    %243 = arith.mulf %242, %241 : vector<8x8xf32>
    %244 = arith.addf %238, %243 : vector<8x8xf32>
    %245 = vector.extract_strided_slice %2 {offsets = [2, 3], sizes = [1, 1], strides = [1, 1]} : vector<8x8xf32> to vector<1x1xf32>
    %246 = vector.extract_strided_slice %1 {offsets = [2, 0, 0], sizes = [1, 8, 8], strides = [1, 1, 1]} : vector<8x8x8xf32> to vector<1x8x8xf32>
    %247 = vector.shape_cast %246 : vector<1x8x8xf32> to vector<8x8xf32>
    %248 = vector.broadcast %245 : vector<1x1xf32> to vector<8x8xf32>
    %249 = arith.mulf %248, %247 : vector<8x8xf32>
    %250 = arith.addf %244, %249 : vector<8x8xf32>
    %251 = vector.extract_strided_slice %2 {offsets = [3, 3], sizes = [1, 1], strides = [1, 1]} : vector<8x8xf32> to vector<1x1xf32>
    %252 = vector.extract_strided_slice %1 {offsets = [3, 0, 0], sizes = [1, 8, 8], strides = [1, 1, 1]} : vector<8x8x8xf32> to vector<1x8x8xf32>
    %253 = vector.shape_cast %252 : vector<1x8x8xf32> to vector<8x8xf32>
    %254 = vector.broadcast %251 : vector<1x1xf32> to vector<8x8xf32>
    %255 = arith.mulf %254, %253 : vector<8x8xf32>
    %256 = arith.addf %250, %255 : vector<8x8xf32>
    %257 = vector.extract_strided_slice %2 {offsets = [4, 3], sizes = [1, 1], strides = [1, 1]} : vector<8x8xf32> to vector<1x1xf32>
    %258 = vector.extract_strided_slice %1 {offsets = [4, 0, 0], sizes = [1, 8, 8], strides = [1, 1, 1]} : vector<8x8x8xf32> to vector<1x8x8xf32>
    %259 = vector.shape_cast %258 : vector<1x8x8xf32> to vector<8x8xf32>
    %260 = vector.broadcast %257 : vector<1x1xf32> to vector<8x8xf32>
    %261 = arith.mulf %260, %259 : vector<8x8xf32>
    %262 = arith.addf %256, %261 : vector<8x8xf32>
    %263 = vector.extract_strided_slice %2 {offsets = [5, 3], sizes = [1, 1], strides = [1, 1]} : vector<8x8xf32> to vector<1x1xf32>
    %264 = vector.extract_strided_slice %1 {offsets = [5, 0, 0], sizes = [1, 8, 8], strides = [1, 1, 1]} : vector<8x8x8xf32> to vector<1x8x8xf32>
    %265 = vector.shape_cast %264 : vector<1x8x8xf32> to vector<8x8xf32>
    %266 = vector.broadcast %263 : vector<1x1xf32> to vector<8x8xf32>
    %267 = arith.mulf %266, %265 : vector<8x8xf32>
    %268 = arith.addf %262, %267 : vector<8x8xf32>
    %269 = vector.extract_strided_slice %2 {offsets = [6, 3], sizes = [1, 1], strides = [1, 1]} : vector<8x8xf32> to vector<1x1xf32>
    %270 = vector.extract_strided_slice %1 {offsets = [6, 0, 0], sizes = [1, 8, 8], strides = [1, 1, 1]} : vector<8x8x8xf32> to vector<1x8x8xf32>
    %271 = vector.shape_cast %270 : vector<1x8x8xf32> to vector<8x8xf32>
    %272 = vector.broadcast %269 : vector<1x1xf32> to vector<8x8xf32>
    %273 = arith.mulf %272, %271 : vector<8x8xf32>
    %274 = arith.addf %268, %273 : vector<8x8xf32>
    %275 = vector.extract_strided_slice %2 {offsets = [7, 3], sizes = [1, 1], strides = [1, 1]} : vector<8x8xf32> to vector<1x1xf32>
    %276 = vector.extract_strided_slice %1 {offsets = [7, 0, 0], sizes = [1, 8, 8], strides = [1, 1, 1]} : vector<8x8x8xf32> to vector<1x8x8xf32>
    %277 = vector.shape_cast %276 : vector<1x8x8xf32> to vector<8x8xf32>
    %278 = vector.broadcast %275 : vector<1x1xf32> to vector<8x8xf32>
    %279 = arith.mulf %278, %277 : vector<8x8xf32>
    %280 = arith.addf %274, %279 : vector<8x8xf32>
    %281 = vector.extract_strided_slice %54 {offsets = [3, 0], sizes = [1, 8], strides = [1, 1]} : vector<8x8xf32> to vector<1x8xf32>
    %282 = vector.broadcast %281 : vector<1x8xf32> to vector<8x8xf32>
    %283 = arith.addf %280, %282 : vector<8x8xf32>
    %284 = vector.extract_strided_slice %56 {offsets = [0, 3], sizes = [8, 1], strides = [1, 1]} : vector<8x8xf32> to vector<8x1xf32>
    %285 = vector.broadcast %284 : vector<8x1xf32> to vector<8x8xf32>
    %286 = arith.addf %283, %285 : vector<8x8xf32>
    %287 = vector.extract_strided_slice %3 {offsets = [0, 3], sizes = [1, 1], strides = [1, 1]} : vector<1x8xf32> to vector<1x1xf32>
    %288 = vector.broadcast %287 : vector<1x1xf32> to vector<8x8xf32>
    %289 = arith.addf %286, %288 : vector<8x8xf32>
    %c0_52 = arith.constant 0 : index
    %c0_53 = arith.constant 0 : index
    %c3 = arith.constant 3 : index
    %c0_54 = arith.constant 0 : index
    %c0_55 = arith.constant 0 : index
    %290 = vector.load %arg12[%c0_52, %c0_53, %c3, %c0_54, %c0_55] : memref<1x1x8x8x8xf32, #tpu.memory_space<vmem>>, vector<1x1x1x8x8xf32>
    %291 = vector.shape_cast %290 : vector<1x1x1x8x8xf32> to vector<8x8xf32>
    %292 = vector.shape_cast %289 : vector<8x8xf32> to vector<1x1x1x8x8xf32>
    tpu.vector_store %arg12[%c0_52, %c0_53, %c3, %c0_54, %c0_55], %292 {strides = array<i32>} : memref<1x1x8x8x8xf32, #tpu.memory_space<vmem>>, vector<1x1x1x8x8xf32>,
    %293 = vector.extract_strided_slice %2 {offsets = [0, 4], sizes = [1, 1], strides = [1, 1]} : vector<8x8xf32> to vector<1x1xf32>
    %294 = vector.extract_strided_slice %1 {offsets = [0, 0, 0], sizes = [1, 8, 8], strides = [1, 1, 1]} : vector<8x8x8xf32> to vector<1x8x8xf32>
    %295 = vector.shape_cast %294 : vector<1x8x8xf32> to vector<8x8xf32>
    %296 = vector.broadcast %293 : vector<1x1xf32> to vector<8x8xf32>
    %297 = arith.mulf %296, %295 : vector<8x8xf32>
    %298 = vector.extract_strided_slice %2 {offsets = [1, 4], sizes = [1, 1], strides = [1, 1]} : vector<8x8xf32> to vector<1x1xf32>
    %299 = vector.extract_strided_slice %1 {offsets = [1, 0, 0], sizes = [1, 8, 8], strides = [1, 1, 1]} : vector<8x8x8xf32> to vector<1x8x8xf32>
    %300 = vector.shape_cast %299 : vector<1x8x8xf32> to vector<8x8xf32>
    %301 = vector.broadcast %298 : vector<1x1xf32> to vector<8x8xf32>
    %302 = arith.mulf %301, %300 : vector<8x8xf32>
    %303 = arith.addf %297, %302 : vector<8x8xf32>
    %304 = vector.extract_strided_slice %2 {offsets = [2, 4], sizes = [1, 1], strides = [1, 1]} : vector<8x8xf32> to vector<1x1xf32>
    %305 = vector.extract_strided_slice %1 {offsets = [2, 0, 0], sizes = [1, 8, 8], strides = [1, 1, 1]} : vector<8x8x8xf32> to vector<1x8x8xf32>
    %306 = vector.shape_cast %305 : vector<1x8x8xf32> to vector<8x8xf32>
    %307 = vector.broadcast %304 : vector<1x1xf32> to vector<8x8xf32>
    %308 = arith.mulf %307, %306 : vector<8x8xf32>
    %309 = arith.addf %303, %308 : vector<8x8xf32>
    %310 = vector.extract_strided_slice %2 {offsets = [3, 4], sizes = [1, 1], strides = [1, 1]} : vector<8x8xf32> to vector<1x1xf32>
    %311 = vector.extract_strided_slice %1 {offsets = [3, 0, 0], sizes = [1, 8, 8], strides = [1, 1, 1]} : vector<8x8x8xf32> to vector<1x8x8xf32>
    %312 = vector.shape_cast %311 : vector<1x8x8xf32> to vector<8x8xf32>
    %313 = vector.broadcast %310 : vector<1x1xf32> to vector<8x8xf32>
    %314 = arith.mulf %313, %312 : vector<8x8xf32>
    %315 = arith.addf %309, %314 : vector<8x8xf32>
    %316 = vector.extract_strided_slice %2 {offsets = [4, 4], sizes = [1, 1], strides = [1, 1]} : vector<8x8xf32> to vector<1x1xf32>
    %317 = vector.extract_strided_slice %1 {offsets = [4, 0, 0], sizes = [1, 8, 8], strides = [1, 1, 1]} : vector<8x8x8xf32> to vector<1x8x8xf32>
    %318 = vector.shape_cast %317 : vector<1x8x8xf32> to vector<8x8xf32>
    %319 = vector.broadcast %316 : vector<1x1xf32> to vector<8x8xf32>
    %320 = arith.mulf %319, %318 : vector<8x8xf32>
    %321 = arith.addf %315, %320 : vector<8x8xf32>
    %322 = vector.extract_strided_slice %2 {offsets = [5, 4], sizes = [1, 1], strides = [1, 1]} : vector<8x8xf32> to vector<1x1xf32>
    %323 = vector.extract_strided_slice %1 {offsets = [5, 0, 0], sizes = [1, 8, 8], strides = [1, 1, 1]} : vector<8x8x8xf32> to vector<1x8x8xf32>
    %324 = vector.shape_cast %323 : vector<1x8x8xf32> to vector<8x8xf32>
    %325 = vector.broadcast %322 : vector<1x1xf32> to vector<8x8xf32>
    %326 = arith.mulf %325, %324 : vector<8x8xf32>
    %327 = arith.addf %321, %326 : vector<8x8xf32>
    %328 = vector.extract_strided_slice %2 {offsets = [6, 4], sizes = [1, 1], strides = [1, 1]} : vector<8x8xf32> to vector<1x1xf32>
    %329 = vector.extract_strided_slice %1 {offsets = [6, 0, 0], sizes = [1, 8, 8], strides = [1, 1, 1]} : vector<8x8x8xf32> to vector<1x8x8xf32>
    %330 = vector.shape_cast %329 : vector<1x8x8xf32> to vector<8x8xf32>
    %331 = vector.broadcast %328 : vector<1x1xf32> to vector<8x8xf32>
    %332 = arith.mulf %331, %330 : vector<8x8xf32>
    %333 = arith.addf %327, %332 : vector<8x8xf32>
    %334 = vector.extract_strided_slice %2 {offsets = [7, 4], sizes = [1, 1], strides = [1, 1]} : vector<8x8xf32> to vector<1x1xf32>
    %335 = vector.extract_strided_slice %1 {offsets = [7, 0, 0], sizes = [1, 8, 8], strides = [1, 1, 1]} : vector<8x8x8xf32> to vector<1x8x8xf32>
    %336 = vector.shape_cast %335 : vector<1x8x8xf32> to vector<8x8xf32>
    %337 = vector.broadcast %334 : vector<1x1xf32> to vector<8x8xf32>
    %338 = arith.mulf %337, %336 : vector<8x8xf32>
    %339 = arith.addf %333, %338 : vector<8x8xf32>
    %340 = vector.extract_strided_slice %54 {offsets = [4, 0], sizes = [1, 8], strides = [1, 1]} : vector<8x8xf32> to vector<1x8xf32>
    %341 = vector.broadcast %340 : vector<1x8xf32> to vector<8x8xf32>
    %342 = arith.addf %339, %341 : vector<8x8xf32>
    %343 = vector.extract_strided_slice %56 {offsets = [0, 4], sizes = [8, 1], strides = [1, 1]} : vector<8x8xf32> to vector<8x1xf32>
    %344 = vector.broadcast %343 : vector<8x1xf32> to vector<8x8xf32>
    %345 = arith.addf %342, %344 : vector<8x8xf32>
    %346 = vector.extract_strided_slice %3 {offsets = [0, 4], sizes = [1, 1], strides = [1, 1]} : vector<1x8xf32> to vector<1x1xf32>
    %347 = vector.broadcast %346 : vector<1x1xf32> to vector<8x8xf32>
    %348 = arith.addf %345, %347 : vector<8x8xf32>
    %c0_56 = arith.constant 0 : index
    %c0_57 = arith.constant 0 : index
    %c4 = arith.constant 4 : index
    %c0_58 = arith.constant 0 : index
    %c0_59 = arith.constant 0 : index
    %349 = vector.load %arg12[%c0_56, %c0_57, %c4, %c0_58, %c0_59] : memref<1x1x8x8x8xf32, #tpu.memory_space<vmem>>, vector<1x1x1x8x8xf32>
    %350 = vector.shape_cast %349 : vector<1x1x1x8x8xf32> to vector<8x8xf32>
    %351 = vector.shape_cast %348 : vector<8x8xf32> to vector<1x1x1x8x8xf32>
    tpu.vector_store %arg12[%c0_56, %c0_57, %c4, %c0_58, %c0_59], %351 {strides = array<i32>} : memref<1x1x8x8x8xf32, #tpu.memory_space<vmem>>, vector<1x1x1x8x8xf32>,
    %352 = vector.extract_strided_slice %2 {offsets = [0, 5], sizes = [1, 1], strides = [1, 1]} : vector<8x8xf32> to vector<1x1xf32>
    %353 = vector.extract_strided_slice %1 {offsets = [0, 0, 0], sizes = [1, 8, 8], strides = [1, 1, 1]} : vector<8x8x8xf32> to vector<1x8x8xf32>
    %354 = vector.shape_cast %353 : vector<1x8x8xf32> to vector<8x8xf32>
    %355 = vector.broadcast %352 : vector<1x1xf32> to vector<8x8xf32>
    %356 = arith.mulf %355, %354 : vector<8x8xf32>
    %357 = vector.extract_strided_slice %2 {offsets = [1, 5], sizes = [1, 1], strides = [1, 1]} : vector<8x8xf32> to vector<1x1xf32>
    %358 = vector.extract_strided_slice %1 {offsets = [1, 0, 0], sizes = [1, 8, 8], strides = [1, 1, 1]} : vector<8x8x8xf32> to vector<1x8x8xf32>
    %359 = vector.shape_cast %358 : vector<1x8x8xf32> to vector<8x8xf32>
    %360 = vector.broadcast %357 : vector<1x1xf32> to vector<8x8xf32>
    %361 = arith.mulf %360, %359 : vector<8x8xf32>
    %362 = arith.addf %356, %361 : vector<8x8xf32>
    %363 = vector.extract_strided_slice %2 {offsets = [2, 5], sizes = [1, 1], strides = [1, 1]} : vector<8x8xf32> to vector<1x1xf32>
    %364 = vector.extract_strided_slice %1 {offsets = [2, 0, 0], sizes = [1, 8, 8], strides = [1, 1, 1]} : vector<8x8x8xf32> to vector<1x8x8xf32>
    %365 = vector.shape_cast %364 : vector<1x8x8xf32> to vector<8x8xf32>
    %366 = vector.broadcast %363 : vector<1x1xf32> to vector<8x8xf32>
    %367 = arith.mulf %366, %365 : vector<8x8xf32>
    %368 = arith.addf %362, %367 : vector<8x8xf32>
    %369 = vector.extract_strided_slice %2 {offsets = [3, 5], sizes = [1, 1], strides = [1, 1]} : vector<8x8xf32> to vector<1x1xf32>
    %370 = vector.extract_strided_slice %1 {offsets = [3, 0, 0], sizes = [1, 8, 8], strides = [1, 1, 1]} : vector<8x8x8xf32> to vector<1x8x8xf32>
    %371 = vector.shape_cast %370 : vector<1x8x8xf32> to vector<8x8xf32>
    %372 = vector.broadcast %369 : vector<1x1xf32> to vector<8x8xf32>
    %373 = arith.mulf %372, %371 : vector<8x8xf32>
    %374 = arith.addf %368, %373 : vector<8x8xf32>
    %375 = vector.extract_strided_slice %2 {offsets = [4, 5], sizes = [1, 1], strides = [1, 1]} : vector<8x8xf32> to vector<1x1xf32>
    %376 = vector.extract_strided_slice %1 {offsets = [4, 0, 0], sizes = [1, 8, 8], strides = [1, 1, 1]} : vector<8x8x8xf32> to vector<1x8x8xf32>
    %377 = vector.shape_cast %376 : vector<1x8x8xf32> to vector<8x8xf32>
    %378 = vector.broadcast %375 : vector<1x1xf32> to vector<8x8xf32>
    %379 = arith.mulf %378, %377 : vector<8x8xf32>
    %380 = arith.addf %374, %379 : vector<8x8xf32>
    %381 = vector.extract_strided_slice %2 {offsets = [5, 5], sizes = [1, 1], strides = [1, 1]} : vector<8x8xf32> to vector<1x1xf32>
    %382 = vector.extract_strided_slice %1 {offsets = [5, 0, 0], sizes = [1, 8, 8], strides = [1, 1, 1]} : vector<8x8x8xf32> to vector<1x8x8xf32>
    %383 = vector.shape_cast %382 : vector<1x8x8xf32> to vector<8x8xf32>
    %384 = vector.broadcast %381 : vector<1x1xf32> to vector<8x8xf32>
    %385 = arith.mulf %384, %383 : vector<8x8xf32>
    %386 = arith.addf %380, %385 : vector<8x8xf32>
    %387 = vector.extract_strided_slice %2 {offsets = [6, 5], sizes = [1, 1], strides = [1, 1]} : vector<8x8xf32> to vector<1x1xf32>
    %388 = vector.extract_strided_slice %1 {offsets = [6, 0, 0], sizes = [1, 8, 8], strides = [1, 1, 1]} : vector<8x8x8xf32> to vector<1x8x8xf32>
    %389 = vector.shape_cast %388 : vector<1x8x8xf32> to vector<8x8xf32>
    %390 = vector.broadcast %387 : vector<1x1xf32> to vector<8x8xf32>
    %391 = arith.mulf %390, %389 : vector<8x8xf32>
    %392 = arith.addf %386, %391 : vector<8x8xf32>
    %393 = vector.extract_strided_slice %2 {offsets = [7, 5], sizes = [1, 1], strides = [1, 1]} : vector<8x8xf32> to vector<1x1xf32>
    %394 = vector.extract_strided_slice %1 {offsets = [7, 0, 0], sizes = [1, 8, 8], strides = [1, 1, 1]} : vector<8x8x8xf32> to vector<1x8x8xf32>
    %395 = vector.shape_cast %394 : vector<1x8x8xf32> to vector<8x8xf32>
    %396 = vector.broadcast %393 : vector<1x1xf32> to vector<8x8xf32>
    %397 = arith.mulf %396, %395 : vector<8x8xf32>
    %398 = arith.addf %392, %397 : vector<8x8xf32>
    %399 = vector.extract_strided_slice %54 {offsets = [5, 0], sizes = [1, 8], strides = [1, 1]} : vector<8x8xf32> to vector<1x8xf32>
    %400 = vector.broadcast %399 : vector<1x8xf32> to vector<8x8xf32>
    %401 = arith.addf %398, %400 : vector<8x8xf32>
    %402 = vector.extract_strided_slice %56 {offsets = [0, 5], sizes = [8, 1], strides = [1, 1]} : vector<8x8xf32> to vector<8x1xf32>
    %403 = vector.broadcast %402 : vector<8x1xf32> to vector<8x8xf32>
    %404 = arith.addf %401, %403 : vector<8x8xf32>
    %405 = vector.extract_strided_slice %3 {offsets = [0, 5], sizes = [1, 1], strides = [1, 1]} : vector<1x8xf32> to vector<1x1xf32>
    %406 = vector.broadcast %405 : vector<1x1xf32> to vector<8x8xf32>
    %407 = arith.addf %404, %406 : vector<8x8xf32>
    %c0_60 = arith.constant 0 : index
    %c0_61 = arith.constant 0 : index
    %c5 = arith.constant 5 : index
    %c0_62 = arith.constant 0 : index
    %c0_63 = arith.constant 0 : index
    %408 = vector.load %arg12[%c0_60, %c0_61, %c5, %c0_62, %c0_63] : memref<1x1x8x8x8xf32, #tpu.memory_space<vmem>>, vector<1x1x1x8x8xf32>
    %409 = vector.shape_cast %408 : vector<1x1x1x8x8xf32> to vector<8x8xf32>
    %410 = vector.shape_cast %407 : vector<8x8xf32> to vector<1x1x1x8x8xf32>
    tpu.vector_store %arg12[%c0_60, %c0_61, %c5, %c0_62, %c0_63], %410 {strides = array<i32>} : memref<1x1x8x8x8xf32, #tpu.memory_space<vmem>>, vector<1x1x1x8x8xf32>,
    %411 = vector.extract_strided_slice %2 {offsets = [0, 6], sizes = [1, 1], strides = [1, 1]} : vector<8x8xf32> to vector<1x1xf32>
    %412 = vector.extract_strided_slice %1 {offsets = [0, 0, 0], sizes = [1, 8, 8], strides = [1, 1, 1]} : vector<8x8x8xf32> to vector<1x8x8xf32>
    %413 = vector.shape_cast %412 : vector<1x8x8xf32> to vector<8x8xf32>
    %414 = vector.broadcast %411 : vector<1x1xf32> to vector<8x8xf32>
    %415 = arith.mulf %414, %413 : vector<8x8xf32>
    %416 = vector.extract_strided_slice %2 {offsets = [1, 6], sizes = [1, 1], strides = [1, 1]} : vector<8x8xf32> to vector<1x1xf32>
    %417 = vector.extract_strided_slice %1 {offsets = [1, 0, 0], sizes = [1, 8, 8], strides = [1, 1, 1]} : vector<8x8x8xf32> to vector<1x8x8xf32>
    %418 = vector.shape_cast %417 : vector<1x8x8xf32> to vector<8x8xf32>
    %419 = vector.broadcast %416 : vector<1x1xf32> to vector<8x8xf32>
    %420 = arith.mulf %419, %418 : vector<8x8xf32>
    %421 = arith.addf %415, %420 : vector<8x8xf32>
    %422 = vector.extract_strided_slice %2 {offsets = [2, 6], sizes = [1, 1], strides = [1, 1]} : vector<8x8xf32> to vector<1x1xf32>
    %423 = vector.extract_strided_slice %1 {offsets = [2, 0, 0], sizes = [1, 8, 8], strides = [1, 1, 1]} : vector<8x8x8xf32> to vector<1x8x8xf32>
    %424 = vector.shape_cast %423 : vector<1x8x8xf32> to vector<8x8xf32>
    %425 = vector.broadcast %422 : vector<1x1xf32> to vector<8x8xf32>
    %426 = arith.mulf %425, %424 : vector<8x8xf32>
    %427 = arith.addf %421, %426 : vector<8x8xf32>
    %428 = vector.extract_strided_slice %2 {offsets = [3, 6], sizes = [1, 1], strides = [1, 1]} : vector<8x8xf32> to vector<1x1xf32>
    %429 = vector.extract_strided_slice %1 {offsets = [3, 0, 0], sizes = [1, 8, 8], strides = [1, 1, 1]} : vector<8x8x8xf32> to vector<1x8x8xf32>
    %430 = vector.shape_cast %429 : vector<1x8x8xf32> to vector<8x8xf32>
    %431 = vector.broadcast %428 : vector<1x1xf32> to vector<8x8xf32>
    %432 = arith.mulf %431, %430 : vector<8x8xf32>
    %433 = arith.addf %427, %432 : vector<8x8xf32>
    %434 = vector.extract_strided_slice %2 {offsets = [4, 6], sizes = [1, 1], strides = [1, 1]} : vector<8x8xf32> to vector<1x1xf32>
    %435 = vector.extract_strided_slice %1 {offsets = [4, 0, 0], sizes = [1, 8, 8], strides = [1, 1, 1]} : vector<8x8x8xf32> to vector<1x8x8xf32>
    %436 = vector.shape_cast %435 : vector<1x8x8xf32> to vector<8x8xf32>
    %437 = vector.broadcast %434 : vector<1x1xf32> to vector<8x8xf32>
    %438 = arith.mulf %437, %436 : vector<8x8xf32>
    %439 = arith.addf %433, %438 : vector<8x8xf32>
    %440 = vector.extract_strided_slice %2 {offsets = [5, 6], sizes = [1, 1], strides = [1, 1]} : vector<8x8xf32> to vector<1x1xf32>
    %441 = vector.extract_strided_slice %1 {offsets = [5, 0, 0], sizes = [1, 8, 8], strides = [1, 1, 1]} : vector<8x8x8xf32> to vector<1x8x8xf32>
    %442 = vector.shape_cast %441 : vector<1x8x8xf32> to vector<8x8xf32>
    %443 = vector.broadcast %440 : vector<1x1xf32> to vector<8x8xf32>
    %444 = arith.mulf %443, %442 : vector<8x8xf32>
    %445 = arith.addf %439, %444 : vector<8x8xf32>
    %446 = vector.extract_strided_slice %2 {offsets = [6, 6], sizes = [1, 1], strides = [1, 1]} : vector<8x8xf32> to vector<1x1xf32>
    %447 = vector.extract_strided_slice %1 {offsets = [6, 0, 0], sizes = [1, 8, 8], strides = [1, 1, 1]} : vector<8x8x8xf32> to vector<1x8x8xf32>
    %448 = vector.shape_cast %447 : vector<1x8x8xf32> to vector<8x8xf32>
    %449 = vector.broadcast %446 : vector<1x1xf32> to vector<8x8xf32>
    %450 = arith.mulf %449, %448 : vector<8x8xf32>
    %451 = arith.addf %445, %450 : vector<8x8xf32>
    %452 = vector.extract_strided_slice %2 {offsets = [7, 6], sizes = [1, 1], strides = [1, 1]} : vector<8x8xf32> to vector<1x1xf32>
    %453 = vector.extract_strided_slice %1 {offsets = [7, 0, 0], sizes = [1, 8, 8], strides = [1, 1, 1]} : vector<8x8x8xf32> to vector<1x8x8xf32>
    %454 = vector.shape_cast %453 : vector<1x8x8xf32> to vector<8x8xf32>
    %455 = vector.broadcast %452 : vector<1x1xf32> to vector<8x8xf32>
    %456 = arith.mulf %455, %454 : vector<8x8xf32>
    %457 = arith.addf %451, %456 : vector<8x8xf32>
    %458 = vector.extract_strided_slice %54 {offsets = [6, 0], sizes = [1, 8], strides = [1, 1]} : vector<8x8xf32> to vector<1x8xf32>
    %459 = vector.broadcast %458 : vector<1x8xf32> to vector<8x8xf32>
    %460 = arith.addf %457, %459 : vector<8x8xf32>
    %461 = vector.extract_strided_slice %56 {offsets = [0, 6], sizes = [8, 1], strides = [1, 1]} : vector<8x8xf32> to vector<8x1xf32>
    %462 = vector.broadcast %461 : vector<8x1xf32> to vector<8x8xf32>
    %463 = arith.addf %460, %462 : vector<8x8xf32>
    %464 = vector.extract_strided_slice %3 {offsets = [0, 6], sizes = [1, 1], strides = [1, 1]} : vector<1x8xf32> to vector<1x1xf32>
    %465 = vector.broadcast %464 : vector<1x1xf32> to vector<8x8xf32>
    %466 = arith.addf %463, %465 : vector<8x8xf32>
    %c0_64 = arith.constant 0 : index
    %c0_65 = arith.constant 0 : index
    %c6 = arith.constant 6 : index
    %c0_66 = arith.constant 0 : index
    %c0_67 = arith.constant 0 : index
    %467 = vector.load %arg12[%c0_64, %c0_65, %c6, %c0_66, %c0_67] : memref<1x1x8x8x8xf32, #tpu.memory_space<vmem>>, vector<1x1x1x8x8xf32>
    %468 = vector.shape_cast %467 : vector<1x1x1x8x8xf32> to vector<8x8xf32>
    %469 = vector.shape_cast %466 : vector<8x8xf32> to vector<1x1x1x8x8xf32>
    tpu.vector_store %arg12[%c0_64, %c0_65, %c6, %c0_66, %c0_67], %469 {strides = array<i32>} : memref<1x1x8x8x8xf32, #tpu.memory_space<vmem>>, vector<1x1x1x8x8xf32>,
    %470 = vector.extract_strided_slice %2 {offsets = [0, 7], sizes = [1, 1], strides = [1, 1]} : vector<8x8xf32> to vector<1x1xf32>
    %471 = vector.extract_strided_slice %1 {offsets = [0, 0, 0], sizes = [1, 8, 8], strides = [1, 1, 1]} : vector<8x8x8xf32> to vector<1x8x8xf32>
    %472 = vector.shape_cast %471 : vector<1x8x8xf32> to vector<8x8xf32>
    %473 = vector.broadcast %470 : vector<1x1xf32> to vector<8x8xf32>
    %474 = arith.mulf %473, %472 : vector<8x8xf32>
    %475 = vector.extract_strided_slice %2 {offsets = [1, 7], sizes = [1, 1], strides = [1, 1]} : vector<8x8xf32> to vector<1x1xf32>
    %476 = vector.extract_strided_slice %1 {offsets = [1, 0, 0], sizes = [1, 8, 8], strides = [1, 1, 1]} : vector<8x8x8xf32> to vector<1x8x8xf32>
    %477 = vector.shape_cast %476 : vector<1x8x8xf32> to vector<8x8xf32>
    %478 = vector.broadcast %475 : vector<1x1xf32> to vector<8x8xf32>
    %479 = arith.mulf %478, %477 : vector<8x8xf32>
    %480 = arith.addf %474, %479 : vector<8x8xf32>
    %481 = vector.extract_strided_slice %2 {offsets = [2, 7], sizes = [1, 1], strides = [1, 1]} : vector<8x8xf32> to vector<1x1xf32>
    %482 = vector.extract_strided_slice %1 {offsets = [2, 0, 0], sizes = [1, 8, 8], strides = [1, 1, 1]} : vector<8x8x8xf32> to vector<1x8x8xf32>
    %483 = vector.shape_cast %482 : vector<1x8x8xf32> to vector<8x8xf32>
    %484 = vector.broadcast %481 : vector<1x1xf32> to vector<8x8xf32>
    %485 = arith.mulf %484, %483 : vector<8x8xf32>
    %486 = arith.addf %480, %485 : vector<8x8xf32>
    %487 = vector.extract_strided_slice %2 {offsets = [3, 7], sizes = [1, 1], strides = [1, 1]} : vector<8x8xf32> to vector<1x1xf32>
    %488 = vector.extract_strided_slice %1 {offsets = [3, 0, 0], sizes = [1, 8, 8], strides = [1, 1, 1]} : vector<8x8x8xf32> to vector<1x8x8xf32>
    %489 = vector.shape_cast %488 : vector<1x8x8xf32> to vector<8x8xf32>
    %490 = vector.broadcast %487 : vector<1x1xf32> to vector<8x8xf32>
    %491 = arith.mulf %490, %489 : vector<8x8xf32>
    %492 = arith.addf %486, %491 : vector<8x8xf32>
    %493 = vector.extract_strided_slice %2 {offsets = [4, 7], sizes = [1, 1], strides = [1, 1]} : vector<8x8xf32> to vector<1x1xf32>
    %494 = vector.extract_strided_slice %1 {offsets = [4, 0, 0], sizes = [1, 8, 8], strides = [1, 1, 1]} : vector<8x8x8xf32> to vector<1x8x8xf32>
    %495 = vector.shape_cast %494 : vector<1x8x8xf32> to vector<8x8xf32>
    %496 = vector.broadcast %493 : vector<1x1xf32> to vector<8x8xf32>
    %497 = arith.mulf %496, %495 : vector<8x8xf32>
    %498 = arith.addf %492, %497 : vector<8x8xf32>
    %499 = vector.extract_strided_slice %2 {offsets = [5, 7], sizes = [1, 1], strides = [1, 1]} : vector<8x8xf32> to vector<1x1xf32>
    %500 = vector.extract_strided_slice %1 {offsets = [5, 0, 0], sizes = [1, 8, 8], strides = [1, 1, 1]} : vector<8x8x8xf32> to vector<1x8x8xf32>
    %501 = vector.shape_cast %500 : vector<1x8x8xf32> to vector<8x8xf32>
    %502 = vector.broadcast %499 : vector<1x1xf32> to vector<8x8xf32>
    %503 = arith.mulf %502, %501 : vector<8x8xf32>
    %504 = arith.addf %498, %503 : vector<8x8xf32>
    %505 = vector.extract_strided_slice %2 {offsets = [6, 7], sizes = [1, 1], strides = [1, 1]} : vector<8x8xf32> to vector<1x1xf32>
    %506 = vector.extract_strided_slice %1 {offsets = [6, 0, 0], sizes = [1, 8, 8], strides = [1, 1, 1]} : vector<8x8x8xf32> to vector<1x8x8xf32>
    %507 = vector.shape_cast %506 : vector<1x8x8xf32> to vector<8x8xf32>
    %508 = vector.broadcast %505 : vector<1x1xf32> to vector<8x8xf32>
    %509 = arith.mulf %508, %507 : vector<8x8xf32>
    %510 = arith.addf %504, %509 : vector<8x8xf32>
    %511 = vector.extract_strided_slice %2 {offsets = [7, 7], sizes = [1, 1], strides = [1, 1]} : vector<8x8xf32> to vector<1x1xf32>
    %512 = vector.extract_strided_slice %1 {offsets = [7, 0, 0], sizes = [1, 8, 8], strides = [1, 1, 1]} : vector<8x8x8xf32> to vector<1x8x8xf32>
    %513 = vector.shape_cast %512 : vector<1x8x8xf32> to vector<8x8xf32>
    %514 = vector.broadcast %511 : vector<1x1xf32> to vector<8x8xf32>
    %515 = arith.mulf %514, %513 : vector<8x8xf32>
    %516 = arith.addf %510, %515 : vector<8x8xf32>
    %517 = vector.extract_strided_slice %54 {offsets = [7, 0], sizes = [1, 8], strides = [1, 1]} : vector<8x8xf32> to vector<1x8xf32>
    %518 = vector.broadcast %517 : vector<1x8xf32> to vector<8x8xf32>
    %519 = arith.addf %516, %518 : vector<8x8xf32>
    %520 = vector.extract_strided_slice %56 {offsets = [0, 7], sizes = [8, 1], strides = [1, 1]} : vector<8x8xf32> to vector<8x1xf32>
    %521 = vector.broadcast %520 : vector<8x1xf32> to vector<8x8xf32>
    %522 = arith.addf %519, %521 : vector<8x8xf32>
    %523 = vector.extract_strided_slice %3 {offsets = [0, 7], sizes = [1, 1], strides = [1, 1]} : vector<1x8xf32> to vector<1x1xf32>
    %524 = vector.broadcast %523 : vector<1x1xf32> to vector<8x8xf32>
    %525 = arith.addf %522, %524 : vector<8x8xf32>
    %c0_68 = arith.constant 0 : index
    %c0_69 = arith.constant 0 : index
    %c7 = arith.constant 7 : index
    %c0_70 = arith.constant 0 : index
    %c0_71 = arith.constant 0 : index
    %526 = vector.load %arg12[%c0_68, %c0_69, %c7, %c0_70, %c0_71] : memref<1x1x8x8x8xf32, #tpu.memory_space<vmem>>, vector<1x1x1x8x8xf32>
    %527 = vector.shape_cast %526 : vector<1x1x1x8x8xf32> to vector<8x8xf32>
    %528 = vector.shape_cast %525 : vector<8x8xf32> to vector<1x1x1x8x8xf32>
    tpu.vector_store %arg12[%c0_68, %c0_69, %c7, %c0_70, %c0_71], %528 {strides = array<i32>} : memref<1x1x8x8x8xf32, #tpu.memory_space<vmem>>, vector<1x1x1x8x8xf32>,
    return
  }
  func.func @transform_0(%arg0: i32, %arg1: i32) -> (i32, i32, i32, i32, i32) {
    %c0_i32 = arith.constant 0 : i32
    %c0_i32_0 = arith.constant 0 : i32
    %c0_i32_1 = arith.constant 0 : i32
    %c0_i32_2 = arith.constant 0 : i32
    return %arg0, %arg1, %c0_i32, %c0_i32_0, %c0_i32_1 : i32, i32, i32, i32, i32
  }
  func.func @transform_1(%arg0: i32, %arg1: i32) -> (i32, i32, i32) {
    %c0_i32 = arith.constant 0 : i32
    %c0_i32_0 = arith.constant 0 : i32
    %c0_i32_1 = arith.constant 0 : i32
    return %arg1, %c0_i32, %c0_i32_0 : i32, i32, i32
  }
  func.func @transform_2(%arg0: i32, %arg1: i32) -> (i32, i32, i32, i32) {
    %c0_i32 = arith.constant 0 : i32
    %c0_i32_0 = arith.constant 0 : i32
    %c0_i32_1 = arith.constant 0 : i32
    return %arg0, %arg1, %c0_i32, %c0_i32_0 : i32, i32, i32, i32
  }
  func.func @transform_3(%arg0: i32, %arg1: i32) -> (i32, i32, i32) {
    %c0_i32 = arith.constant 0 : i32
    %c0_i32_0 = arith.constant 0 : i32
    %c0_i32_1 = arith.constant 0 : i32
    return %arg0, %c0_i32, %c0_i32_0 : i32, i32, i32
  }
  func.func @transform_4(%arg0: i32, %arg1: i32) -> (i32, i32, i32) {
    %c0_i32 = arith.constant 0 : i32
    %c0_i32_0 = arith.constant 0 : i32
    %c0_i32_1 = arith.constant 0 : i32
    return %arg0, %c0_i32, %c0_i32_0 : i32, i32, i32
  }
  func.func @transform_5(%arg0: i32, %arg1: i32) -> (i32, i32, i32) {
    %c0_i32 = arith.constant 0 : i32
    %c0_i32_0 = arith.constant 0 : i32
    %c0_i32_1 = arith.constant 0 : i32
    return %arg0, %c0_i32, %c0_i32_0 : i32, i32, i32
  }
  func.func @transform_6(%arg0: i32, %arg1: i32) -> (i32, i32) {
    %c0_i32 = arith.constant 0 : i32
    %c0_i32_0 = arith.constant 0 : i32
    %c0_i32_1 = arith.constant 0 : i32
    return %c0_i32, %c0_i32_0 : i32, i32
  }
  func.func @transform_7(%arg0: i32, %arg1: i32) -> (i32, i32) {
    %c0_i32 = arith.constant 0 : i32
    %c0_i32_0 = arith.constant 0 : i32
    %c0_i32_1 = arith.constant 0 : i32
    return %c0_i32, %c0_i32_0 : i32, i32
  }
  func.func @transform_8(%arg0: i32, %arg1: i32) -> (i32, i32) {
    %c0_i32 = arith.constant 0 : i32
    %c0_i32_0 = arith.constant 0 : i32
    %c0_i32_1 = arith.constant 0 : i32
    return %c0_i32, %c0_i32_0 : i32, i32
  }
  func.func @transform_9(%arg0: i32, %arg1: i32) -> (i32, i32) {
    %c0_i32 = arith.constant 0 : i32
    %c0_i32_0 = arith.constant 0 : i32
    %c0_i32_1 = arith.constant 0 : i32
    return %c0_i32, %c0_i32_0 : i32, i32
  }
  func.func @transform_10(%arg0: i32, %arg1: i32) -> (i32, i32, i32, i32, i32) {
    %c0_i32 = arith.constant 0 : i32
    %c0_i32_0 = arith.constant 0 : i32
    %c0_i32_1 = arith.constant 0 : i32
    %c0_i32_2 = arith.constant 0 : i32
    return %arg0, %arg1, %c0_i32, %c0_i32_0, %c0_i32_1 : i32, i32, i32, i32, i32
  }
  func.func @transform_11(%arg0: i32, %arg1: i32) -> (i32, i32, i32, i32) {
    %c0_i32 = arith.constant 0 : i32
    %c0_i32_0 = arith.constant 0 : i32
    %c0_i32_1 = arith.constant 0 : i32
    return %arg0, %arg1, %c0_i32, %c0_i32_0 : i32, i32, i32, i32
  }
}

module attributes {stable_mosaic.version = 11 : i64} {
  func.func @_linear_kernel(%arg0: i32, %arg1: memref<128x64xf32, #tpu.memory_space<vmem>>, %arg2: memref<64x32xf32, #tpu.memory_space<vmem>>, %arg3: memref<1x32xf32, #tpu.memory_space<vmem>>, %arg4: memref<128x32xf32, #tpu.memory_space<vmem>>) attributes {dimension_semantics = [#tpu.dimension_semantics<parallel>], iteration_bounds = array<i64: 1>, scalar_prefetch = 0 : i64, scratch_operands = 0 : i64, tpu.core_type = #tpu.core_type<tc>, window_params = [{transform_indices = @transform_0, window_bounds = array<i64: 128, 64>}, {pipeline_mode = #tpu.pipeline_mode<synchronous>, transform_indices = @transform_1, window_bounds = array<i64: 64, 32>}, {pipeline_mode = #tpu.pipeline_mode<synchronous>, transform_indices = @transform_2, window_bounds = array<i64: 1, 32>}, {transform_indices = @transform_3, window_bounds = array<i64: 128, 32>}]} {
    %c0 = arith.constant 0 : index
    %c0_0 = arith.constant 0 : index
    %0 = vector.load %arg1[%c0, %c0_0] : memref<128x64xf32, #tpu.memory_space<vmem>>, vector<128x64xf32>
    %c0_1 = arith.constant 0 : index
    %c0_2 = arith.constant 0 : index
    %1 = vector.load %arg2[%c0_1, %c0_2] : memref<64x32xf32, #tpu.memory_space<vmem>>, vector<64x32xf32>
    %cst = arith.constant dense<0.000000e+00> : vector<128x32xf32>
    %2 = tpu.matmul %0, %1, %cst {dimension_numbers = #tpu.dot_dimension_numbers<[1], [0], [0], [1], [0, 0, 1, 1], [], []>} : vector<128x64xf32>, vector<64x32xf32>, vector<128x32xf32> -> vector<128x32xf32>
    %c0_3 = arith.constant 0 : index
    %c0_4 = arith.constant 0 : index
    %3 = vector.load %arg3[%c0_3, %c0_4] : memref<1x32xf32, #tpu.memory_space<vmem>>, vector<1x32xf32>
    %4 = vector.broadcast %3 : vector<1x32xf32> to vector<128x32xf32>
    %5 = arith.addf %2, %4 : vector<128x32xf32>
    %c0_5 = arith.constant 0 : index
    %c0_6 = arith.constant 0 : index
    %6 = vector.load %arg4[%c0_5, %c0_6] : memref<128x32xf32, #tpu.memory_space<vmem>>, vector<128x32xf32>
    tpu.vector_store %arg4[%c0_5, %c0_6], %5 {strides = array<i32>} : memref<128x32xf32, #tpu.memory_space<vmem>>, vector<128x32xf32>,
    return
  }
  func.func @transform_0(%arg0: i32) -> (i32, i32) {
    %c0_i32 = arith.constant 0 : i32
    %c0_i32_0 = arith.constant 0 : i32
    return %arg0, %c0_i32 : i32, i32
  }
  func.func @transform_1(%arg0: i32) -> (i32, i32) {
    %c0_i32 = arith.constant 0 : i32
    %c0_i32_0 = arith.constant 0 : i32
    %c0_i32_1 = arith.constant 0 : i32
    return %c0_i32, %c0_i32_0 : i32, i32
  }
  func.func @transform_2(%arg0: i32) -> (i32, i32) {
    %c0_i32 = arith.constant 0 : i32
    %c0_i32_0 = arith.constant 0 : i32
    %c0_i32_1 = arith.constant 0 : i32
    return %c0_i32, %c0_i32_0 : i32, i32
  }
  func.func @transform_3(%arg0: i32) -> (i32, i32) {
    %c0_i32 = arith.constant 0 : i32
    %c0_i32_0 = arith.constant 0 : i32
    return %arg0, %c0_i32 : i32, i32
  }
}

</mosaic_0001>

<llo_original>
// kernel: _lambda_.5
$region0: #{_lambda_.5}
  #allocation0 [shape = 'u32[]', space=smem, size = 0x4, offset = 0x4, fixed_abs, tag = 'smem constant byte address 0x4 - core index']
  #allocation1 [shape = 'u32[144,128]{1,0:T(1,128)}', space=vmem, size = 0x12000, scoped, tag = 'internal scratch']
  %s0 = inlined_call_operand.vmem [shape: f32[128,64], index: 0, kind: input, shape index: {}]
  %s1 = inlined_call_operand.vmem [shape: f32[64,32], index: 1, kind: input, shape index: {}]
  %s2 = inlined_call_operand.vmem [shape: f32[1,32], index: 2, kind: input, shape index: {}]
  %s3 = inlined_call_operand.vmem [shape: f32[128,32], index: 3, kind: output, shape index: {}]
  %s4 = sld [smem:[#allocation0]]
  $region22: #{_lambda_.5} parent=0
    _
  %s6 = ssub.s32 1, %s4
  %s7 = scalar_select 0, %s6, %s4
  // Predicated region
  $region2: #{_lambda_.5} parent=0 // pred_check
    _
  $region3: #{_lambda_.5} parent=0 // pred_check_branch
    %9 = sbr.rel (0) target = $region5
  $region4: #{_lambda_.5} parent=0 // pred_region
    _
  $region5: #{_lambda_.5} parent=0 // pred_fallthru
    _
  // Predicated region
  $region6: #{_lambda_.5} parent=0 // pred_check
    _
  $region7: #{_lambda_.5} parent=0 // pred_check_branch
    %11 = sbr.rel (0) target = $region9
  $region8: #{_lambda_.5} parent=0 // pred_region
    _
  $region9: #{_lambda_.5} parent=0 // pred_fallthru
    _
  // Predicated region
  $region10: #{_lambda_.5} parent=0 // pred_check
    _
  $region11: #{_lambda_.5} parent=0 // pred_check_branch
    %13 = sbr.rel (0) target = $region13
  $region12: #{_lambda_.5} parent=0 // pred_region
    _
  $region13: #{_lambda_.5} parent=0 // pred_fallthru
    _
  %v14 = vld [vmem:[%s0] sm:$0xff]
  %v15 = vld [vmem:[%s0 + $0x8] sm:$0xff]
  %v16 = vld [vmem:[%s0 + $0x10] sm:$0xff]
  %v17 = vld [vmem:[%s0 + $0x18] sm:$0xff]
  %v18 = vld [vmem:[%s0 + $0x20] sm:$0xff]
  %v19 = vld [vmem:[%s0 + $0x28] sm:$0xff]
  %v20 = vld [vmem:[%s0 + $0x30] sm:$0xff]
  %v21 = vld [vmem:[%s0 + $0x38] sm:$0xff]
  %v22 = vld [vmem:[%s0 + $0x40] sm:$0xff]
  %v23 = vld [vmem:[%s0 + $0x48] sm:$0xff]
  %v24 = vld [vmem:[%s0 + $0x50] sm:$0xff]
  %v25 = vld [vmem:[%s0 + $0x58] sm:$0xff]
  %v26 = vld [vmem:[%s0 + $0x60] sm:$0xff]
  %v27 = vld [vmem:[%s0 + $0x68] sm:$0xff]
  %v28 = vld [vmem:[%s0 + $0x70] sm:$0xff]
  %v29 = vld [vmem:[%s0 + $0x78] sm:$0xff]
  %v30 = vld [vmem:[%s1] sm:$0xff]
  %v31 = vld [vmem:[%s1 + $0x8] sm:$0xff]
  %v32 = vld [vmem:[%s1 + $0x10] sm:$0xff]
  %v33 = vld [vmem:[%s1 + $0x18] sm:$0xff]
  %v34 = vld [vmem:[%s1 + $0x20] sm:$0xff]
  %v35 = vld [vmem:[%s1 + $0x28] sm:$0xff]
  %v36 = vld [vmem:[%s1 + $0x30] sm:$0xff]
  %v37 = vld [vmem:[%s1 + $0x38] sm:$0xff]
  %v38 = vld [vmem:[%s2] sm:$0x1]
  %v40 = vlaneseq
  %v41 = vshrl.u32 %v40, 7
  %v42 = vsub.s32 0, %v41
  %v43 = vrot.slane %v38, %v42
  %vm45 = vcmask 523264
  %v47 = vsel %vm45, %v14, 0
  %v50 = vsel %vm45, %v15, 0
  %v53 = vsel %vm45, %v16, 0
  %v56 = vsel %vm45, %v17, 0
  %v59 = vsel %vm45, %v18, 0
  %v62 = vsel %vm45, %v19, 0
  %v65 = vsel %vm45, %v20, 0
  %v68 = vsel %vm45, %v21, 0
  %v71 = vsel %vm45, %v22, 0
  %v74 = vsel %vm45, %v23, 0
  %v77 = vsel %vm45, %v24, 0
  %v80 = vsel %vm45, %v25, 0
  %v83 = vsel %vm45, %v26, 0
  %v86 = vsel %vm45, %v27, 0
  %v89 = vsel %vm45, %v28, 0
  %v92 = vsel %vm45, %v29, 0
  %94 = vmatprep.subr.mxu0 0.0
  %95 = vmatpush1.msra.mxu0 %v30
  %96 = vmatprep.subr.mxu0 0.0
  %97 = vmatpush1.msra.mxu0 %v31
  %98 = vmatprep.subr.mxu0 0.0
  %99 = vmatpush1.msra.mxu0 %v32
  %100 = vmatprep.subr.mxu0 0.0
  %101 = vmatpush1.msra.mxu0 %v33
  %102 = vmatprep.subr.mxu0 0.0
  %103 = vmatpush1.msra.mxu0 %v34
  %104 = vmatprep.subr.mxu0 0.0
  %105 = vmatpush1.msra.mxu0 %v35
  %106 = vmatprep.subr.mxu0 0.0
  %107 = vmatpush1.msra.mxu0 %v36
  %108 = vmatprep.subr.mxu0 0.0
  %109 = vmatpush1.msra.mxu0 %v37
  %110 = vmatprep.subr.mxu0 0.0
  %111 = vmatpush1.msra.mxu0 0.0
  %112 = vmatprep.subr.mxu0 0.0
  %113 = vmatpush1.msra.mxu0 0.0
  %114 = vmatprep.subr.mxu0 0.0
  %115 = vmatpush1.msra.mxu0 0.0
  %116 = vmatprep.subr.mxu0 0.0
  %117 = vmatpush1.msra.mxu0 0.0
  %118 = vmatprep.subr.mxu0 0.0
  %119 = vmatpush1.msra.mxu0 0.0
  %120 = vmatprep.subr.mxu0 0.0
  %121 = vmatpush1.msra.mxu0 0.0
  %122 = vmatprep.subr.mxu0 0.0
  %123 = vmatpush1.msra.mxu0 0.0
  %124 = vmatprep.subr.mxu0 0.0
  %125 = vmatpush1.msra.mxu0 0.0
  %126 = vmatprep.subr.mxu0 0.0
  %127 = vmatpush1.msra.mxu0 0.0
  %128 = vmatprep.subr.mxu0 0.0
  %129 = vmatpush1.msra.mxu0 0.0
  %130 = vmatprep.subr.mxu0 0.0
  %131 = vmatpush1.msra.mxu0 0.0
  %132 = vmatprep.subr.mxu0 0.0
  %133 = vmatpush1.msra.mxu0 0.0
  %134 = vmatprep.subr.mxu0 0.0
  %135 = vmatpush1.msra.mxu0 0.0
  %136 = vmatprep.subr.mxu0 0.0
  %137 = vmatpush1.msra.mxu0 0.0
  %138 = vmatprep.subr.mxu0 0.0
  %139 = vmatpush1.msra.mxu0 0.0
  %140 = vmatprep.subr.mxu0 0.0
  %141 = vmatpush1.msra.mxu0 0.0
  %142 = vmatprep.subr.mxu0 0.0
  %143 = vmatpush1.msra.mxu0 0.0
  %144 = vmatprep.subr.mxu0 0.0
  %145 = vmatpush1.msra.mxu0 0.0
  %146 = vmatprep.subr.mxu0 0.0
  %147 = vmatpush1.msra.mxu0 0.0
  %148 = vmatprep.subr.mxu0 0.0
  %149 = vmatpush1.msra.mxu0 0.0
  %150 = vmatprep.subr.mxu0 0.0
  %151 = vmatpush1.msra.mxu0 0.0
  %152 = vmatprep.subr.mxu0 0.0
  %153 = vmatpush1.msra.mxu0 0.0
  %154 = vmatprep.subr.mxu0 0.0
  %155 = vmatpush1.msra.mxu0 0.0
  %156 = vmatprep.subr.mxu0 0.0
  %157 = vmatpush1.msra.mxu0 0.0
  %158 = vmatprep.mubr.f32.mxu0 0.0
  %159 = vmatmul.mubr.f32.gmra.mrb[0].mxu0 %v47
  %v160 = vpop.f32.mrb[0].mxu0
  %v161 = vadd.f32 %v43, %v160
  %v162 = vpop.f32.mrb[0].mxu0
  %163 = vmatprep.mubr.f32.mxu0 0.0
  %164 = vmatmul.mubr.f32.gmra.mrb[0].mxu0 %v50
  %v165 = vpop.f32.mrb[0].mxu0
  %v166 = vadd.f32 %v43, %v165
  %v167 = vpop.f32.mrb[0].mxu0
  %168 = vmatprep.mubr.f32.mxu0 0.0
  %169 = vmatmul.mubr.f32.gmra.mrb[0].mxu0 %v53
  %v170 = vpop.f32.mrb[0].mxu0
  %v171 = vadd.f32 %v43, %v170
  %v172 = vpop.f32.mrb[0].mxu0
  %173 = vmatprep.mubr.f32.mxu0 0.0
  %174 = vmatmul.mubr.f32.gmra.mrb[0].mxu0 %v56
  %v175 = vpop.f32.mrb[0].mxu0
  %v176 = vadd.f32 %v43, %v175
  %v177 = vpop.f32.mrb[0].mxu0
  %178 = vmatprep.mubr.f32.mxu0 0.0
  %179 = vmatmul.mubr.f32.gmra.mrb[0].mxu0 %v59
  %v180 = vpop.f32.mrb[0].mxu0
  %v181 = vadd.f32 %v43, %v180
  %v182 = vpop.f32.mrb[0].mxu0
  %183 = vmatprep.mubr.f32.mxu0 0.0
  %184 = vmatmul.mubr.f32.gmra.mrb[0].mxu0 %v62
  %v185 = vpop.f32.mrb[0].mxu0
  %v186 = vadd.f32 %v43, %v185
  %v187 = vpop.f32.mrb[0].mxu0
  %188 = vmatprep.mubr.f32.mxu0 0.0
  %189 = vmatmul.mubr.f32.gmra.mrb[0].mxu0 %v65
  %v190 = vpop.f32.mrb[0].mxu0
  %v191 = vadd.f32 %v43, %v190
  %v192 = vpop.f32.mrb[0].mxu0
  %193 = vmatprep.mubr.f32.mxu0 0.0
  %194 = vmatmul.mubr.f32.gmra.mrb[0].mxu0 %v68
  %v195 = vpop.f32.mrb[0].mxu0
  %v196 = vadd.f32 %v43, %v195
  %v197 = vpop.f32.mrb[0].mxu0
  %198 = vmatprep.mubr.f32.mxu0 0.0
  %199 = vmatmul.mubr.f32.gmra.mrb[0].mxu0 %v71
  %v200 = vpop.f32.mrb[0].mxu0
  %v201 = vadd.f32 %v43, %v200
  %v202 = vpop.f32.mrb[0].mxu0
  %203 = vmatprep.mubr.f32.mxu0 0.0
  %204 = vmatmul.mubr.f32.gmra.mrb[0].mxu0 %v74
  %v205 = vpop.f32.mrb[0].mxu0
  %v206 = vadd.f32 %v43, %v205
  %v207 = vpop.f32.mrb[0].mxu0
  %208 = vmatprep.mubr.f32.mxu0 0.0
  %209 = vmatmul.mubr.f32.gmra.mrb[0].mxu0 %v77
  %v210 = vpop.f32.mrb[0].mxu0
  %v211 = vadd.f32 %v43, %v210
  %v212 = vpop.f32.mrb[0].mxu0
  %213 = vmatprep.mubr.f32.mxu0 0.0
  %214 = vmatmul.mubr.f32.gmra.mrb[0].mxu0 %v80
  %v215 = vpop.f32.mrb[0].mxu0
  %v216 = vadd.f32 %v43, %v215
  %v217 = vpop.f32.mrb[0].mxu0
  %218 = vmatprep.mubr.f32.mxu0 0.0
  %219 = vmatmul.mubr.f32.gmra.mrb[0].mxu0 %v83
  %v220 = vpop.f32.mrb[0].mxu0
  %v221 = vadd.f32 %v43, %v220
  %v222 = vpop.f32.mrb[0].mxu0
  %223 = vmatprep.mubr.f32.mxu0 0.0
  %224 = vmatmul.mubr.f32.gmra.mrb[0].mxu0 %v86
  %v225 = vpop.f32.mrb[0].mxu0
  %v226 = vadd.f32 %v43, %v225
  %v227 = vpop.f32.mrb[0].mxu0
  %228 = vmatprep.mubr.f32.mxu0 0.0
  %229 = vmatmul.mubr.f32.gmra.mrb[0].mxu0 %v89
  %v230 = vpop.f32.mrb[0].mxu0
  %v231 = vadd.f32 %v43, %v230
  %v232 = vpop.f32.mrb[0].mxu0
  %233 = vmatprep.mubr.f32.mxu0 0.0
  %234 = vmatmul.mubr.f32.gmra.mrb[0].mxu0 %v92
  %v235 = vpop.f32.mrb[0].mxu0
  %v236 = vadd.f32 %v43, %v235
  %v237 = vpop.f32.mrb[0].mxu0
  %238 = vdwg.mxu0
  %vm239 = vcmask 261120
  %240 = vst.msk [vmem:[%s3] sm:$0xff] %vm239, %v161
  %241 = vst.msk [vmem:[%s3 + $0x8] sm:$0xff] %vm239, %v166
  %242 = vst.msk [vmem:[%s3 + $0x10] sm:$0xff] %vm239, %v171
  %243 = vst.msk [vmem:[%s3 + $0x18] sm:$0xff] %vm239, %v176
  %244 = vst.msk [vmem:[%s3 + $0x20] sm:$0xff] %vm239, %v181
  %245 = vst.msk [vmem:[%s3 + $0x28] sm:$0xff] %vm239, %v186
  %246 = vst.msk [vmem:[%s3 + $0x30] sm:$0xff] %vm239, %v191
  %247 = vst.msk [vmem:[%s3 + $0x38] sm:$0xff] %vm239, %v196
  %248 = vst.msk [vmem:[%s3 + $0x40] sm:$0xff] %vm239, %v201
  %249 = vst.msk [vmem:[%s3 + $0x48] sm:$0xff] %vm239, %v206
  %250 = vst.msk [vmem:[%s3 + $0x50] sm:$0xff] %vm239, %v211
  %251 = vst.msk [vmem:[%s3 + $0x58] sm:$0xff] %vm239, %v216
  %252 = vst.msk [vmem:[%s3 + $0x60] sm:$0xff] %vm239, %v221
  %253 = vst.msk [vmem:[%s3 + $0x68] sm:$0xff] %vm239, %v226
  %254 = vst.msk [vmem:[%s3 + $0x70] sm:$0xff] %vm239, %v231
  %255 = vst.msk [vmem:[%s3 + $0x78] sm:$0xff] %vm239, %v236
  // Predicated region
  $region14: #{_lambda_.5} parent=0 // pred_check
    _
  $region15: #{_lambda_.5} parent=0 // pred_check_branch
    %257 = sbr.rel (0) target = $region17
  $region16: #{_lambda_.5} parent=0 // pred_region
    _
  $region17: #{_lambda_.5} parent=0 // pred_fallthru
    _
  // Predicated region
  $region18: #{_lambda_.5} parent=0 // pred_check
    _
  $region19: #{_lambda_.5} parent=0 // pred_check_branch
    %259 = sbr.rel (0) target = $region21
  $region20: #{_lambda_.5} parent=0 // pred_region
    _
  $region21: #{_lambda_.5} parent=0 // pred_fallthru
    _

// kernel: _lambda_.3
$region0: #{_lambda_.3}
  #allocation0 [shape = 'u32[]', space=smem, size = 0x4, offset = 0x4, fixed_abs, tag = 'smem constant byte address 0x4 - core index']
  #allocation1 [shape = 'u32[144,128]{1,0:T(1,128)}', space=vmem, size = 0x12000, scoped, tag = 'internal scratch']
  %s0 = inlined_call_operand.vmem [shape: f32[2,2,8,8,8], index: 0, kind: input, shape index: {}, may-alias: {0,8}]
  %s1 = inlined_call_operand.vmem [shape: f32[2,8,32], index: 1, kind: input, shape index: {}]
  %s2 = inlined_call_operand.vmem [shape: f32[2,32,16], index: 2, kind: input, shape index: {}]
  %s3 = inlined_call_operand.vmem [shape: f32[2,1,16], index: 3, kind: input, shape index: {}]
  %s4 = inlined_call_operand.vmem [shape: f32[8,8], index: 4, kind: input, shape index: {}]
  %s5 = inlined_call_operand.vmem [shape: f32[8,16], index: 5, kind: input, shape index: {}]
  %s6 = inlined_call_operand.vmem [shape: f32[16,8], index: 6, kind: input, shape index: {}]
  %s7 = inlined_call_operand.vmem [shape: f32[1,8], index: 7, kind: input, shape index: {}]
  %s8 = inlined_call_operand.vmem [shape: f32[2,2,8,8,8], index: 8, kind: output, shape index: {0}, may-alias: {0,8}]
  %s9 = inlined_call_operand.vmem [shape: f32[2,2,8,16], index: 9, kind: output, shape index: {1}]
  %10 = xla_tuple %s8, %s9
  %s11 = sld [smem:[#allocation0]]
  $region73: #{_lambda_.3} parent=0
    _
  %s13 = ssub.s32 1, %s11
  %s14 = scalar_select 0, %s13, %s11
  loop: start=0, step=1, limit=6
  $region2: #{_lambda_.3} parent=0 // loop_pre_header
    _
  $region3: #{_lambda_.3} parent=0 // loop_header
    %s16 = sphi 0, %s20
    %p17 = scmp.ge.s32.totalorder %s16, 6
    %s23 = sphi 0, %s35
    %s24 = sphi 0, %s31
    %s25 = sphi 0, %s23
    %s26 = sphi 0, %s24
    %s27 = sphi 0, %s25
    %s28 = sphi 0, %s26
    %s40 = sphi 0, %s42
    %s43 = sphi 0, %s40
    %s44 = sphi 0, %s43
    %s60 = sphi 0, %s44
    %s66 = sphi 0, %s68
    %s69 = sphi 0, %s66
    %s70 = sphi 0, %s69
    %s86 = sphi 0, %s70
    %s92 = sphi 0, %s94
    %s95 = sphi 0, %s92
    %s96 = sphi 0, %s95
    %s112 = sphi 0, %s96
    %s118 = sphi 0, %s120
    %s121 = sphi 0, %s118
    %s122 = sphi 0, %s121
    %s138 = sphi 0, %s122
    %s142 = sphi 0, %s142
    %s144 = sphi 0, %s142
    %s145 = sphi 0, %s144
    %s159 = sphi 0, %s145
    %s163 = sphi 0, %s163
    %s165 = sphi 0, %s163
    %s166 = sphi 0, %s165
    %s180 = sphi 0, %s166
    %s184 = sphi 0, %s184
    %s186 = sphi 0, %s184
    %s187 = sphi 0, %s186
    %s201 = sphi 0, %s187
    %s205 = sphi 0, %s205
    %s207 = sphi 0, %s205
    %s208 = sphi 0, %s207
    %s222 = sphi 0, %s208
    %s230 = sphi 0, %s232
    %s233 = sphi 0, %s230
    %s234 = sphi 0, %s233
    %s250 = sphi 0, %s234
    %s258 = sphi 0, %s260
    %s261 = sphi 0, %s258
    %s262 = sphi 0, %s261
    %s278 = sphi 0, %s262
  $region4: #{_lambda_.3} parent=0 // loop_header_branch
    %19 = sbr.rel (%p17) target = $region8
  $region5: #{_lambda_.3} parent=0 // loop_body
    %s21 = ssub.s32 %s16, 1
    %s22 = ssub.s32 %s16, 2
    %s29 = sadd.s32 1, %s24
    %p30 = scmp.ge.s32.totalorder %s29, 2
    %s31 = scalar_select %p30, 0, %s29
    %s32 = sadd.s32 1, %s23
    %s33 = scalar_select %p30, %s32, %s23
    %p34 = scmp.ge.s32.totalorder %s33, 2
    %s35 = scalar_select %p34, 0, %s33
    %s36 = ssub.s32 %s23, %s35
    %s37 = ssub.s32 %s24, %s31
    %s38 = sor.u32 %s36, %s37
    %p39 = scmp.eq.s32.totalorder %s38, 0
    %s41 = sadd.s32 %s40, 1
    %s42 = scalar_select %p39, %s40, %s41
    %p45 = pneg %p39
    %p46 = scmp.eq.s32.totalorder %s16, 3
    %p47 = por %p45, %p46
    %p48 = scmp.ne.s32.totalorder %s40, %s43
    %p49 = scmp.eq.s32.totalorder %s16, 0
    %p50 = por %p48, %p49
    %p51 = scmp.ne.s32.totalorder %s40, %s43
    %p52 = scmp.eq.s32.totalorder %s21, 3
    %p53 = por %p51, %p52
    %p54 = scmp.ne.s32.totalorder %s43, %s44
    %p55 = scmp.eq.s32.totalorder %s21, 0
    %p56 = por %p54, %p55
    %p57 = scmp.ne.s32.totalorder %s43, %s44
    %p58 = scmp.eq.s32.totalorder %s22, 3
    %p59 = por %p57, %p58
    %p61 = scmp.ne.s32.totalorder %s44, %s60
    %p62 = scmp.eq.s32.totalorder %s22, 0
    %p63 = por %p61, %p62
    %s64 = ssub.s32 %s24, %s31
    %p65 = scmp.eq.s32.totalorder %s64, 0
    %s67 = sadd.s32 %s66, 1
    %s68 = scalar_select %p65, %s66, %s67
    %p71 = pneg %p65
    %p72 = scmp.eq.s32.totalorder %s16, 3
    %p73 = por %p71, %p72
    %p74 = scmp.ne.s32.totalorder %s66, %s69
    %p75 = scmp.eq.s32.totalorder %s16, 0
    %p76 = por %p74, %p75
    %p77 = scmp.ne.s32.totalorder %s66, %s69
    %p78 = scmp.eq.s32.totalorder %s21, 3
    %p79 = por %p77, %p78
    %p80 = scmp.ne.s32.totalorder %s69, %s70
    %p81 = scmp.eq.s32.totalorder %s21, 0
    %p82 = por %p80, %p81
    %p83 = scmp.ne.s32.totalorder %s69, %s70
    %p84 = scmp.eq.s32.totalorder %s22, 3
    %p85 = por %p83, %p84
    %p87 = scmp.ne.s32.totalorder %s70, %s86
    %p88 = scmp.eq.s32.totalorder %s22, 0
    %p89 = por %p87, %p88
    %s90 = ssub.s32 %s23, %s35
    %p91 = scmp.eq.s32.totalorder %s90, 0
    %s93 = sadd.s32 %s92, 1
    %s94 = scalar_select %p91, %s92, %s93
    %p97 = pneg %p91
    %p98 = scmp.eq.s32.totalorder %s16, 3
    %p99 = por %p97, %p98
    %p100 = scmp.ne.s32.totalorder %s92, %s95
    %p101 = scmp.eq.s32.totalorder %s16, 0
    %p102 = por %p100, %p101
    %p103 = scmp.ne.s32.totalorder %s92, %s95
    %p104 = scmp.eq.s32.totalorder %s21, 3
    %p105 = por %p103, %p104
    %p106 = scmp.ne.s32.totalorder %s95, %s96
    %p107 = scmp.eq.s32.totalorder %s21, 0
    %p108 = por %p106, %p107
    %p109 = scmp.ne.s32.totalorder %s95, %s96
    %p110 = scmp.eq.s32.totalorder %s22, 3
    %p111 = por %p109, %p110
    %p113 = scmp.ne.s32.totalorder %s96, %s112
    %p114 = scmp.eq.s32.totalorder %s22, 0
    %p115 = por %p113, %p114
    %s116 = ssub.s32 %s23, %s35
    %p117 = scmp.eq.s32.totalorder %s116, 0
    %s119 = sadd.s32 %s118, 1
    %s120 = scalar_select %p117, %s118, %s119
    %p123 = pneg %p117
    %p124 = scmp.eq.s32.totalorder %s16, 3
    %p125 = por %p123, %p124
    %p126 = scmp.ne.s32.totalorder %s118, %s121
    %p127 = scmp.eq.s32.totalorder %s16, 0
    %p128 = por %p126, %p127
    %p129 = scmp.ne.s32.totalorder %s118, %s121
    %p130 = scmp.eq.s32.totalorder %s21, 3
    %p131 = por %p129, %p130
    %p132 = scmp.ne.s32.totalorder %s121, %s122
    %p133 = scmp.eq.s32.totalorder %s21, 0
    %p134 = por %p132, %p133
    %p135 = scmp.ne.s32.totalorder %s121, %s122
    %p136 = scmp.eq.s32.totalorder %s22, 3
    %p137 = por %p135, %p136
    %p139 = scmp.ne.s32.totalorder %s122, %s138
    %p140 = scmp.eq.s32.totalorder %s22, 0
    %p141 = por %p139, %p140
    %s143 = sadd.s32 %s142, 1
    %p146 = scmp.eq.s32.totalorder %s16, 3
    %p147 = scmp.ne.s32.totalorder %s142, %s144
    %p148 = scmp.eq.s32.totalorder %s16, 0
    %p149 = por %p147, %p148
    %p150 = scmp.ne.s32.totalorder %s142, %s144
    %p151 = scmp.eq.s32.totalorder %s21, 3
    %p152 = por %p150, %p151
    %p153 = scmp.ne.s32.totalorder %s144, %s145
    %p154 = scmp.eq.s32.totalorder %s21, 0
    %p155 = por %p153, %p154
    %p156 = scmp.ne.s32.totalorder %s144, %s145
    %p157 = scmp.eq.s32.totalorder %s22, 3
    %p158 = por %p156, %p157
    %p160 = scmp.ne.s32.totalorder %s145, %s159
    %p161 = scmp.eq.s32.totalorder %s22, 0
    %p162 = por %p160, %p161
    %s164 = sadd.s32 %s163, 1
    %p167 = scmp.eq.s32.totalorder %s16, 3
    %p168 = scmp.ne.s32.totalorder %s163, %s165
    %p169 = scmp.eq.s32.totalorder %s16, 0
    %p170 = por %p168, %p169
    %p171 = scmp.ne.s32.totalorder %s163, %s165
    %p172 = scmp.eq.s32.totalorder %s21, 3
    %p173 = por %p171, %p172
    %p174 = scmp.ne.s32.totalorder %s165, %s166
    %p175 = scmp.eq.s32.totalorder %s21, 0
    %p176 = por %p174, %p175
    %p177 = scmp.ne.s32.totalorder %s165, %s166
    %p178 = scmp.eq.s32.totalorder %s22, 3
    %p179 = por %p177, %p178
    %p181 = scmp.ne.s32.totalorder %s166, %s180
    %p182 = scmp.eq.s32.totalorder %s22, 0
    %p183 = por %p181, %p182
    %s185 = sadd.s32 %s184, 1
    %p188 = scmp.eq.s32.totalorder %s16, 3
    %p189 = scmp.ne.s32.totalorder %s184, %s186
    %p190 = scmp.eq.s32.totalorder %s16, 0
    %p191 = por %p189, %p190
    %p192 = scmp.ne.s32.totalorder %s184, %s186
    %p193 = scmp.eq.s32.totalorder %s21, 3
    %p194 = por %p192, %p193
    %p195 = scmp.ne.s32.totalorder %s186, %s187
    %p196 = scmp.eq.s32.totalorder %s21, 0
    %p197 = por %p195, %p196
    %p198 = scmp.ne.s32.totalorder %s186, %s187
    %p199 = scmp.eq.s32.totalorder %s22, 3
    %p200 = por %p198, %p199
    %p202 = scmp.ne.s32.totalorder %s187, %s201
    %p203 = scmp.eq.s32.totalorder %s22, 0
    %p204 = por %p202, %p203
    %s206 = sadd.s32 %s205, 1
    %p209 = scmp.eq.s32.totalorder %s16, 3
    %p210 = scmp.ne.s32.totalorder %s205, %s207
    %p211 = scmp.eq.s32.totalorder %s16, 0
    %p212 = por %p210, %p211
    %p213 = scmp.ne.s32.totalorder %s205, %s207
    %p214 = scmp.eq.s32.totalorder %s21, 3
    %p215 = por %p213, %p214
    %p216 = scmp.ne.s32.totalorder %s207, %s208
    %p217 = scmp.eq.s32.totalorder %s21, 0
    %p218 = por %p216, %p217
    %p219 = scmp.ne.s32.totalorder %s207, %s208
    %p220 = scmp.eq.s32.totalorder %s22, 3
    %p221 = por %p219, %p220
    %p223 = scmp.ne.s32.totalorder %s208, %s222
    %p224 = scmp.eq.s32.totalorder %s22, 0
    %p225 = por %p223, %p224
    %s226 = ssub.s32 %s23, %s35
    %s227 = ssub.s32 %s24, %s31
    %s228 = sor.u32 %s226, %s227
    %p229 = scmp.eq.s32.totalorder %s228, 0
    %s231 = sadd.s32 %s230, 1
    %s232 = scalar_select %p229, %s230, %s231
    %p235 = pneg %p229
    %p236 = scmp.eq.s32.totalorder %s16, 3
    %p237 = por %p235, %p236
    %p238 = scmp.ne.s32.totalorder %s230, %s233
    %p239 = scmp.eq.s32.totalorder %s16, 0
    %p240 = por %p238, %p239
    %p241 = scmp.ne.s32.totalorder %s230, %s233
    %p242 = scmp.eq.s32.totalorder %s21, 3
    %p243 = por %p241, %p242
    %p244 = scmp.ne.s32.totalorder %s233, %s234
    %p245 = scmp.eq.s32.totalorder %s21, 0
    %p246 = por %p244, %p245
    %p247 = scmp.ne.s32.totalorder %s233, %s234
    %p248 = scmp.eq.s32.totalorder %s22, 3
    %p249 = por %p247, %p248
    %p251 = scmp.ne.s32.totalorder %s234, %s250
    %p252 = scmp.eq.s32.totalorder %s22, 0
    %p253 = por %p251, %p252
    %s254 = ssub.s32 %s23, %s35
    %s255 = ssub.s32 %s24, %s31
    %s256 = sor.u32 %s254, %s255
    %p257 = scmp.eq.s32.totalorder %s256, 0
    %s259 = sadd.s32 %s258, 1
    %s260 = scalar_select %p257, %s258, %s259
    %p263 = pneg %p257
    %p264 = scmp.eq.s32.totalorder %s16, 3
    %p265 = por %p263, %p264
    %p266 = scmp.ne.s32.totalorder %s258, %s261
    %p267 = scmp.eq.s32.totalorder %s16, 0
    %p268 = por %p266, %p267
    %p269 = scmp.ne.s32.totalorder %s258, %s261
    %p270 = scmp.eq.s32.totalorder %s21, 3
    %p271 = por %p269, %p270
    %p272 = scmp.ne.s32.totalorder %s261, %s262
    %p273 = scmp.eq.s32.totalorder %s21, 0
    %p274 = por %p272, %p273
    %p275 = scmp.ne.s32.totalorder %s261, %s262
    %p276 = scmp.eq.s32.totalorder %s22, 3
    %p277 = por %p275, %p276
    %p279 = scmp.ne.s32.totalorder %s262, %s278
    %p280 = scmp.eq.s32.totalorder %s22, 0
    %p281 = por %p279, %p280
    %p282 = scmp.le.s32.totalorder 1, %s16
    %p283 = scmp.lt.s32.totalorder %s16, 5
    %p284 = pnand %p282, %p283
    %p285 = pneg %p284
    // Predicated region
    $region9: #{_lambda_.3} parent=5 // pred_check
      _
    $region10: #{_lambda_.3} parent=5 // pred_check_branch
      %287 = sbr.rel (%p284) target = $region12
    $region11: #{_lambda_.3} parent=5 // pred_region
      %s288 = ssub.s32 %s16, 1
      // Predicated region
      $region13: #{_lambda_.3} parent=11 // pred_check
        %p289 = pneg %p155
      $region14: #{_lambda_.3} parent=11 // pred_check_branch
        %291 = sbr.rel (%p289) target = $region16
      $region15: #{_lambda_.3} parent=11 // pred_region
        _
      $region16: #{_lambda_.3} parent=11 // pred_fallthru
        _
      // Predicated region
      $region17: #{_lambda_.3} parent=11 // pred_check
        %p292 = pneg %p176
      $region18: #{_lambda_.3} parent=11 // pred_check_branch
        %294 = sbr.rel (%p292) target = $region20
      $region19: #{_lambda_.3} parent=11 // pred_region
        _
      $region20: #{_lambda_.3} parent=11 // pred_fallthru
        _
      // Predicated region
      $region21: #{_lambda_.3} parent=11 // pred_check
        %p295 = pneg %p197
      $region22: #{_lambda_.3} parent=11 // pred_check_branch
        %297 = sbr.rel (%p295) target = $region24
      $region23: #{_lambda_.3} parent=11 // pred_region
        _
      $region24: #{_lambda_.3} parent=11 // pred_fallthru
        _
      // Predicated region
      $region25: #{_lambda_.3} parent=11 // pred_check
        %p298 = pneg %p218
      $region26: #{_lambda_.3} parent=11 // pred_check_branch
        %300 = sbr.rel (%p298) target = $region28
      $region27: #{_lambda_.3} parent=11 // pred_region
        _
      $region28: #{_lambda_.3} parent=11 // pred_fallthru
        _
    $region12: #{_lambda_.3} parent=5 // pred_fallthru
      _
    %p301 = scmp.lt.s32.totalorder %s16, 4
    // Predicated region
    $region29: #{_lambda_.3} parent=5 // pred_check
      %p302 = pneg %p301
    $region30: #{_lambda_.3} parent=5 // pred_check_branch
      %304 = sbr.rel (%p302) target = $region32
    $region31: #{_lambda_.3} parent=5 // pred_region
      // Predicated region
      $region33: #{_lambda_.3} parent=31 // pred_check
        %p305 = pneg %p50
      $region34: #{_lambda_.3} parent=31 // pred_check_branch
        %307 = sbr.rel (%p305) target = $region36
      $region35: #{_lambda_.3} parent=31 // pred_region
        %p308 = scmp.lt.s32.totalorder %s23, 1
        %s309 = scalar_select %p308, %s23, 1
        %p310 = scmp.lt.s32.totalorder %s24, 1
        %s311 = scalar_select %p310, %s24, 1
        %s312 = smul.addr %s311, 8
        %s313 = smul.addr %s309, 16
        %s314 = sadd.s32 %s312, %s313
        %s315 = smul.addr %s314, 8
        %s316 = scalar_lea.vmem %s0, %s315
      $region36: #{_lambda_.3} parent=31 // pred_fallthru
        _
      // Predicated region
      $region37: #{_lambda_.3} parent=31 // pred_check
        %p317 = pneg %p76
      $region38: #{_lambda_.3} parent=31 // pred_check_branch
        %319 = sbr.rel (%p317) target = $region40
      $region39: #{_lambda_.3} parent=31 // pred_region
        %p320 = scmp.lt.s32.totalorder %s24, 1
        %s321 = scalar_select %p320, %s24, 1
        %s322 = smul.addr %s321, 8
        %s323 = scalar_lea.vmem %s1, %s322
      $region40: #{_lambda_.3} parent=31 // pred_fallthru
        _
      // Predicated region
      $region41: #{_lambda_.3} parent=31 // pred_check
        %p324 = pneg %p102
      $region42: #{_lambda_.3} parent=31 // pred_check_branch
        %326 = sbr.rel (%p324) target = $region44
      $region43: #{_lambda_.3} parent=31 // pred_region
        %p327 = scmp.lt.s32.totalorder %s23, 1
        %s328 = scalar_select %p327, %s23, 1
        %s329 = smul.addr %s328, 4
        %s330 = smul.addr %s329, 8
        %s331 = scalar_lea.vmem %s2, %s330
      $region44: #{_lambda_.3} parent=31 // pred_fallthru
        _
      // Predicated region
      $region45: #{_lambda_.3} parent=31 // pred_check
        %p332 = pneg %p128
      $region46: #{_lambda_.3} parent=31 // pred_check_branch
        %334 = sbr.rel (%p332) target = $region48
      $region47: #{_lambda_.3} parent=31 // pred_region
        %p335 = scmp.lt.s32.totalorder %s23, 1
        %s336 = scalar_select %p335, %s23, 1
        %s337 = scalar_lea.vmem %s3, %s336
      $region48: #{_lambda_.3} parent=31 // pred_fallthru
        _
    $region32: #{_lambda_.3} parent=5 // pred_fallthru
      _
    %p338 = scmp.le.s32.totalorder 1, %s16
    %p339 = scmp.lt.s32.totalorder %s16, 5
    %p340 = pnand %p338, %p339
    %p341 = pneg %p340
    // Predicated region
    $region49: #{_lambda_.3} parent=5 // pred_check
      _
    $region50: #{_lambda_.3} parent=5 // pred_check_branch
      %343 = sbr.rel (%p340) target = $region52
    $region51: #{_lambda_.3} parent=5 // pred_region
      %s344 = ssub.s32 %s16, 1
      %p345 = scmp.lt.s32.totalorder %s25, 1
      %s346 = scalar_select %p345, %s25, 1
      %p347 = scmp.lt.s32.totalorder %s26, 1
      %s348 = scalar_select %p347, %s26, 1
      %s349 = smul.addr %s348, 8
      %s350 = smul.addr %s346, 16
      %s351 = sadd.s32 %s349, %s350
      %s352 = smul.addr %s351, 8
      %s353 = scalar_lea.vmem %s0, %s352
      %p354 = pneg %p56
      %p355 = pneg %p53
      %p356 = scmp.lt.s32.totalorder %s26, 1
      %s357 = scalar_select %p356, %s26, 1
      %s358 = smul.addr %s357, 8
      %s359 = scalar_lea.vmem %s1, %s358
      %p360 = pneg %p82
      %p361 = pneg %p79
      %p362 = scmp.lt.s32.totalorder %s25, 1
      %s363 = scalar_select %p362, %s25, 1
      %s364 = smul.addr %s363, 4
      %s365 = smul.addr %s364, 8
      %s366 = scalar_lea.vmem %s2, %s365
      %p367 = pneg %p108
      %p368 = pneg %p105
      %p369 = scmp.lt.s32.totalorder %s25, 1
      %s370 = scalar_select %p369, %s25, 1
      %s371 = scalar_lea.vmem %s3, %s370
      %p372 = pneg %p134
      %p373 = pneg %p131
      %p374 = pneg %p155
      %p375 = pneg %p152
      %p376 = pneg %p176
      %p377 = pneg %p173
      %p378 = pneg %p197
      %p379 = pneg %p194
      %p380 = pneg %p218
      %p381 = pneg %p215
      %p382 = pneg %p246
      %p383 = pneg %p243
      %p384 = scmp.lt.s32.totalorder %s25, 1
      %s385 = scalar_select %p384, %s25, 1
      %p386 = scmp.lt.s32.totalorder %s26, 1
      %s387 = scalar_select %p386, %s26, 1
      %s388 = smul.addr %s387, 8
      %s389 = smul.addr %s385, 16
      %s390 = sadd.s32 %s388, %s389
      %s391 = smul.addr %s390, 8
      %s392 = scalar_lea.vmem %s8, %s391
      %p393 = pneg %p274
      %p394 = pneg %p271
      %p395 = scmp.lt.s32.totalorder %s25, 1
      %s396 = scalar_select %p395, %s25, 1
      %p397 = scmp.lt.s32.totalorder %s26, 1
      %s398 = scalar_select %p397, %s26, 1
      %s399 = smul.addr %s396, 2
      %s400 = sadd.s32 %s398, %s399
      %s401 = smul.addr %s400, 8
      %s402 = scalar_lea.vmem %s9, %s401
      %p403 = scmp.lt.s32.totalorder %s25, 1
      %s404 = scalar_select %p403, %s25, 1
      %p405 = scmp.lt.s32.totalorder %s26, 1
      %s406 = scalar_select %p405, %s26, 1
      %s407 = smul.addr %s406, 8
      %s408 = smul.addr %s404, 16
      %s409 = sadd.s32 %s407, %s408
      %s410 = smul.addr %s409, 8
      %s411 = scalar_lea.vmem %s0, %s410
      %p412 = scmp.lt.s32.totalorder %s26, 1
      %s413 = scalar_select %p412, %s26, 1
      %s414 = smul.addr %s413, 8
      %s415 = scalar_lea.vmem %s1, %s414
      %p416 = scmp.lt.s32.totalorder %s25, 1
      %s417 = scalar_select %p416, %s25, 1
      %s418 = smul.addr %s417, 4
      %s419 = smul.addr %s418, 8
      %s420 = scalar_lea.vmem %s2, %s419
      %p421 = scmp.lt.s32.totalorder %s25, 1
      %s422 = scalar_select %p421, %s25, 1
      %s423 = scalar_lea.vmem %s3, %s422
      %p424 = scmp.lt.s32.totalorder %s25, 1
      %s425 = scalar_select %p424, %s25, 1
      %p426 = scmp.lt.s32.totalorder %s26, 1
      %s427 = scalar_select %p426, %s26, 1
      %s428 = smul.addr %s427, 8
      %s429 = smul.addr %s425, 16
      %s430 = sadd.s32 %s428, %s429
      %s431 = smul.addr %s430, 8
      %s432 = scalar_lea.vmem %s8, %s431
      %p433 = scmp.lt.s32.totalorder %s25, 1
      %s434 = scalar_select %p433, %s25, 1
      %p435 = scmp.lt.s32.totalorder %s26, 1
      %s436 = scalar_select %p435, %s26, 1
      %s437 = smul.addr %s434, 2
      %s438 = sadd.s32 %s436, %s437
      %s439 = smul.addr %s438, 8
      %s440 = scalar_lea.vmem %s9, %s439
      %v441 = vld [vmem:[%s411] sm:$0xff]
      %v442 = vld [vmem:[%s411 + $0x8] sm:$0xff]
      %v443 = vld [vmem:[%s411 + $0x10] sm:$0xff]
      %v444 = vld [vmem:[%s411 + $0x18] sm:$0xff]
      %v445 = vld [vmem:[%s411 + $0x20] sm:$0xff]
      %v446 = vld [vmem:[%s411 + $0x28] sm:$0xff]
      %v447 = vld [vmem:[%s411 + $0x30] sm:$0xff]
      %v448 = vld [vmem:[%s411 + $0x38] sm:$0xff]
      %v449 = vld [vmem:[%s4] sm:$0xff]
      %v450 = vld [vmem:[%s7] sm:$0x1]
      %v451 = vld [vmem:[%s415] sm:$0xff]
      %v452 = vld [vmem:[%s420] sm:$0xff]
      %v453 = vld [vmem:[%s420 + $0x8] sm:$0xff]
      %v454 = vld [vmem:[%s420 + $0x10] sm:$0xff]
      %v455 = vld [vmem:[%s420 + $0x18] sm:$0xff]
      %vm456 = vcmask 261120
      %v458 = vsel %vm456, %v451, 0
      %460 = vmatprep.subr.mxu0 0.0
      %461 = vmatpush1.msra.mxu0 %v452
      %462 = vmatprep.subr.mxu0 0.0
      %463 = vmatpush1.msra.mxu0 %v453
      %464 = vmatprep.subr.mxu0 0.0
      %465 = vmatpush1.msra.mxu0 %v454
      %466 = vmatprep.subr.mxu0 0.0
      %467 = vmatpush1.msra.mxu0 %v455
      %468 = vmatprep.subr.mxu0 0.0
      %469 = vmatpush1.msra.mxu0 0.0
      %470 = vmatprep.subr.mxu0 0.0
      %471 = vmatpush1.msra.mxu0 0.0
      %472 = vmatprep.subr.mxu0 0.0
      %473 = vmatpush1.msra.mxu0 0.0
      %474 = vmatprep.subr.mxu0 0.0
      %475 = vmatpush1.msra.mxu0 0.0
      %476 = vmatprep.subr.mxu0 0.0
      %477 = vmatpush1.msra.mxu0 0.0
      %478 = vmatprep.subr.mxu0 0.0
      %479 = vmatpush1.msra.mxu0 0.0
      %480 = vmatprep.subr.mxu0 0.0
      %481 = vmatpush1.msra.mxu0 0.0
      %482 = vmatprep.subr.mxu0 0.0
      %483 = vmatpush1.msra.mxu0 0.0
      %484 = vmatprep.subr.mxu0 0.0
      %485 = vmatpush1.msra.mxu0 0.0
      %486 = vmatprep.subr.mxu0 0.0
      %487 = vmatpush1.msra.mxu0 0.0
      %488 = vmatprep.subr.mxu0 0.0
      %489 = vmatpush1.msra.mxu0 0.0
      %490 = vmatprep.subr.mxu0 0.0
      %491 = vmatpush1.msra.mxu0 0.0
      %492 = vmatprep.subr.mxu0 0.0
      %493 = vmatpush1.msra.mxu0 0.0
      %494 = vmatprep.subr.mxu0 0.0
      %495 = vmatpush1.msra.mxu0 0.0
      %496 = vmatprep.subr.mxu0 0.0
      %497 = vmatpush1.msra.mxu0 0.0
      %498 = vmatprep.subr.mxu0 0.0
      %499 = vmatpush1.msra.mxu0 0.0
      %500 = vmatprep.subr.mxu0 0.0
      %501 = vmatpush1.msra.mxu0 0.0
      %502 = vmatprep.subr.mxu0 0.0
      %503 = vmatpush1.msra.mxu0 0.0
      %504 = vmatprep.subr.mxu0 0.0
      %505 = vmatpush1.msra.mxu0 0.0
      %506 = vmatprep.subr.mxu0 0.0
      %507 = vmatpush1.msra.mxu0 0.0
      %508 = vmatprep.subr.mxu0 0.0
      %509 = vmatpush1.msra.mxu0 0.0
      %510 = vmatprep.subr.mxu0 0.0
      %511 = vmatpush1.msra.mxu0 0.0
      %512 = vmatprep.subr.mxu0 0.0
      %513 = vmatpush1.msra.mxu0 0.0
      %514 = vmatprep.subr.mxu0 0.0
      %515 = vmatpush1.msra.mxu0 0.0
      %516 = vmatprep.subr.mxu0 0.0
      %517 = vmatpush1.msra.mxu0 0.0
      %518 = vmatprep.subr.mxu0 0.0
      %519 = vmatpush1.msra.mxu0 0.0
      %520 = vmatprep.subr.mxu0 0.0
      %521 = vmatpush1.msra.mxu0 0.0
      %522 = vmatprep.subr.mxu0 0.0
      %523 = vmatpush1.msra.mxu0 0.0
      %524 = vmatprep.mubr.f32.mxu0 0.0
      %525 = vmatmul.mubr.f32.gmra.mrb[0].mxu0 %v458
      %v526 = vpop.f32.mrb[0].mxu0
      %v527 = vadd.f32 0.0, %v526
      %v528 = vpop.f32.mrb[0].mxu0
      %529 = vdwg.mxu0
      %v530 = vadd.f32 %v441, %v442
      %v531 = vadd.f32 %v530, %v443
      %v532 = vadd.f32 %v531, %v444
      %v533 = vadd.f32 %v532, %v445
      %v534 = vadd.f32 %v533, %v446
      %v535 = vadd.f32 %v534, %v447
      %v536 = vadd.f32 %v535, %v448
      %v537 = vmul.f32 %v536, 0.125
      %vm538 = vcmask 64512
      %v540 = vsel %vm538, %v537, 0
      %542 = vmatprep.subr.mxu0 0.0
      %543 = vmatpush1.msra.mxu0 %v527
      %544 = vmatprep.subr.mxu0 0.0
      %545 = vmatpush1.msra.mxu0 0.0
      %546 = vmatprep.subr.mxu0 0.0
      %547 = vmatpush1.msra.mxu0 0.0
      %548 = vmatprep.subr.mxu0 0.0
      %549 = vmatpush1.msra.mxu0 0.0
      %550 = vmatprep.subr.mxu0 0.0
      %551 = vmatpush1.msra.mxu0 0.0
      %552 = vmatprep.subr.mxu0 0.0
      %553 = vmatpush1.msra.mxu0 0.0
      %554 = vmatprep.subr.mxu0 0.0
      %555 = vmatpush1.msra.mxu0 0.0
      %556 = vmatprep.subr.mxu0 0.0
      %557 = vmatpush1.msra.mxu0 0.0
      %558 = vmatprep.subr.mxu0 0.0
      %559 = vmatpush1.msra.mxu0 0.0
      %560 = vmatprep.subr.mxu0 0.0
      %561 = vmatpush1.msra.mxu0 0.0
      %562 = vmatprep.subr.mxu0 0.0
      %563 = vmatpush1.msra.mxu0 0.0
      %564 = vmatprep.subr.mxu0 0.0
      %565 = vmatpush1.msra.mxu0 0.0
      %566 = vmatprep.subr.mxu0 0.0
      %567 = vmatpush1.msra.mxu0 0.0
      %568 = vmatprep.subr.mxu0 0.0
      %569 = vmatpush1.msra.mxu0 0.0
      %570 = vmatprep.subr.mxu0 0.0
      %571 = vmatpush1.msra.mxu0 0.0
      %572 = vmatprep.subr.mxu0 0.0
      %573 = vmatpush1.msra.mxu0 0.0
      %574 = vmatprep.subr.mxu0 0.0
      %575 = vmatpush1.msra.mxu0 0.0
      %576 = vmatprep.subr.mxu0 0.0
      %577 = vmatpush1.msra.mxu0 0.0
      %578 = vmatprep.subr.mxu0 0.0
      %579 = vmatpush1.msra.mxu0 0.0
      %580 = vmatprep.subr.mxu0 0.0
      %581 = vmatpush1.msra.mxu0 0.0
      %582 = vmatprep.subr.mxu0 0.0
      %583 = vmatpush1.msra.mxu0 0.0
      %584 = vmatprep.subr.mxu0 0.0
      %585 = vmatpush1.msra.mxu0 0.0
      %586 = vmatprep.subr.mxu0 0.0
      %587 = vmatpush1.msra.mxu0 0.0
      %588 = vmatprep.subr.mxu0 0.0
      %589 = vmatpush1.msra.mxu0 0.0
      %590 = vmatprep.subr.mxu0 0.0
      %591 = vmatpush1.msra.mxu0 0.0
      %592 = vmatprep.subr.mxu0 0.0
      %593 = vmatpush1.msra.mxu0 0.0
      %594 = vmatprep.subr.mxu0 0.0
      %595 = vmatpush1.msra.mxu0 0.0
      %596 = vmatprep.subr.mxu0 0.0
      %597 = vmatpush1.msra.mxu0 0.0
      %598 = vmatprep.subr.mxu0 0.0
      %599 = vmatpush1.msra.mxu0 0.0
      %600 = vmatprep.subr.mxu0 0.0
      %601 = vmatpush1.msra.mxu0 0.0
      %602 = vmatprep.subr.mxu0 0.0
      %603 = vmatpush1.msra.mxu0 0.0
      %604 = vmatprep.subr.mxu0 0.0
      %605 = vmatpush1.msra.mxu0 0.0
      %606 = vmatprep.mubr.f32.mxu0 0.0
      %607 = vmatmul.mubr.f32.gmra.mrb[0].mxu0 %v540
      %v608 = vpop.f32.mrb[0].mxu0
      %v609 = vadd.f32 %v527, %v608
      %v610 = vpop.f32.mrb[0].mxu0
      %611 = vdwg.mxu0
      %v612 = vld [vmem:[%s423] sm:$0x1]
      %v613 = vmul.f32 %v612, 2.0
      %v615 = vlaneseq
      %v616 = vshrl.u32 %v615, 7
      %v617 = vsub.s32 0, %v616
      %v618 = vrot.slane %v613, %v617
      %v620 = vadd.f32 %v609, %v618
      %v621 = vmax.f32 %v620, 0.0
      %vm622 = vcmask 130048
      %623 = vst.msk [vmem:[%s440] sm:$0xff] %vm622, %v621
      %v624 = vld [vmem:[%s5] sm:$0xff]
      %v626 = vsel %vm622, %v624, 0
      %v629 = vsel %vm622, %v621, 0
      %631 = vmatprep.subr.mxu0 0.0
      %632 = vmatpush1.xpose.msra.mxu0 %v629
      %633 = vmatprep.subr.mxu0 0.0
      %634 = vmatpush1.xpose.msra.mxu0 0.0
      %635 = vmatprep.subr.mxu0 0.0
      %636 = vmatpush1.xpose.msra.mxu0 0.0
      %637 = vmatprep.subr.mxu0 0.0
      %638 = vmatpush1.xpose.msra.mxu0 0.0
      %639 = vmatprep.subr.mxu0 0.0
      %640 = vmatpush1.xpose.msra.mxu0 0.0
      %641 = vmatprep.subr.mxu0 0.0
      %642 = vmatpush1.xpose.msra.mxu0 0.0
      %643 = vmatprep.subr.mxu0 0.0
      %644 = vmatpush1.xpose.msra.mxu0 0.0
      %645 = vmatprep.subr.mxu0 0.0
      %646 = vmatpush1.xpose.msra.mxu0 0.0
      %647 = vmatprep.subr.mxu0 0.0
      %648 = vmatpush1.xpose.msra.mxu0 0.0
      %649 = vmatprep.subr.mxu0 0.0
      %650 = vmatpush1.xpose.msra.mxu0 0.0
      %651 = vmatprep.subr.mxu0 0.0
      %652 = vmatpush1.xpose.msra.mxu0 0.0
      %653 = vmatprep.subr.mxu0 0.0
      %654 = vmatpush1.xpose.msra.mxu0 0.0
      %655 = vmatprep.subr.mxu0 0.0
      %656 = vmatpush1.xpose.msra.mxu0 0.0
      %657 = vmatprep.subr.mxu0 0.0
      %658 = vmatpush1.xpose.msra.mxu0 0.0
      %659 = vmatprep.subr.mxu0 0.0
      %660 = vmatpush1.xpose.msra.mxu0 0.0
      %661 = vmatprep.subr.mxu0 0.0
      %662 = vmatpush1.xpose.msra.mxu0 0.0
      %663 = vmatprep.subr.mxu0 0.0
      %664 = vmatpush1.xpose.msra.mxu0 0.0
      %665 = vmatprep.subr.mxu0 0.0
      %666 = vmatpush1.xpose.msra.mxu0 0.0
      %667 = vmatprep.subr.mxu0 0.0
      %668 = vmatpush1.xpose.msra.mxu0 0.0
      %669 = vmatprep.subr.mxu0 0.0
      %670 = vmatpush1.xpose.msra.mxu0 0.0
      %671 = vmatprep.subr.mxu0 0.0
      %672 = vmatpush1.xpose.msra.mxu0 0.0
      %673 = vmatprep.subr.mxu0 0.0
      %674 = vmatpush1.xpose.msra.mxu0 0.0
      %675 = vmatprep.subr.mxu0 0.0
      %676 = vmatpush1.xpose.msra.mxu0 0.0
      %677 = vmatprep.subr.mxu0 0.0
      %678 = vmatpush1.xpose.msra.mxu0 0.0
      %679 = vmatprep.subr.mxu0 0.0
      %680 = vmatpush1.xpose.msra.mxu0 0.0
      %681 = vmatprep.subr.mxu0 0.0
      %682 = vmatpush1.xpose.msra.mxu0 0.0
      %683 = vmatprep.subr.mxu0 0.0
      %684 = vmatpush1.xpose.msra.mxu0 0.0
      %685 = vmatprep.subr.mxu0 0.0
      %686 = vmatpush1.xpose.msra.mxu0 0.0
      %687 = vmatprep.subr.mxu0 0.0
      %688 = vmatpush1.xpose.msra.mxu0 0.0
      %689 = vmatprep.subr.mxu0 0.0
      %690 = vmatpush1.xpose.msra.mxu0 0.0
      %691 = vmatprep.subr.mxu0 0.0
      %692 = vmatpush1.xpose.msra.mxu0 0.0
      %693 = vmatprep.subr.mxu0 0.0
      %694 = vmatpush1.xpose.msra.mxu0 0.0
      %695 = vmatprep.mubr.f32.mxu0 0.0
      %696 = vmatmul.mubr.f32.gmra.mrb[0].mxu0 %v626
      %v697 = vpop.f32.mrb[0].mxu0
      %v698 = vadd.f32 0.0, %v697
      %v699 = vpop.f32.mrb[0].mxu0
      %700 = vdwg.mxu0
      %v701 = vld [vmem:[%s6] sm:$0xff]
      %v702 = vld [vmem:[%s6 + $0x8] sm:$0xff]
      %703 = vmatprep.subr.mxu0 0.0
      %704 = vmatpush1.msra.mxu0 %v701
      %705 = vmatprep.subr.mxu0 0.0
      %706 = vmatpush1.msra.mxu0 %v702
      %707 = vmatprep.subr.mxu0 0.0
      %708 = vmatpush1.msra.mxu0 0.0
      %709 = vmatprep.subr.mxu0 0.0
      %710 = vmatpush1.msra.mxu0 0.0
      %711 = vmatprep.subr.mxu0 0.0
      %712 = vmatpush1.msra.mxu0 0.0
      %713 = vmatprep.subr.mxu0 0.0
      %714 = vmatpush1.msra.mxu0 0.0
      %715 = vmatprep.subr.mxu0 0.0
      %716 = vmatpush1.msra.mxu0 0.0
      %717 = vmatprep.subr.mxu0 0.0
      %718 = vmatpush1.msra.mxu0 0.0
      %719 = vmatprep.subr.mxu0 0.0
      %720 = vmatpush1.msra.mxu0 0.0
      %721 = vmatprep.subr.mxu0 0.0
      %722 = vmatpush1.msra.mxu0 0.0
      %723 = vmatprep.subr.mxu0 0.0
      %724 = vmatpush1.msra.mxu0 0.0
      %725 = vmatprep.subr.mxu0 0.0
      %726 = vmatpush1.msra.mxu0 0.0
      %727 = vmatprep.subr.mxu0 0.0
      %728 = vmatpush1.msra.mxu0 0.0
      %729 = vmatprep.subr.mxu0 0.0
      %730 = vmatpush1.msra.mxu0 0.0
      %731 = vmatprep.subr.mxu0 0.0
      %732 = vmatpush1.msra.mxu0 0.0
      %733 = vmatprep.subr.mxu0 0.0
      %734 = vmatpush1.msra.mxu0 0.0
      %735 = vmatprep.subr.mxu0 0.0
      %736 = vmatpush1.msra.mxu0 0.0
      %737 = vmatprep.subr.mxu0 0.0
      %738 = vmatpush1.msra.mxu0 0.0
      %739 = vmatprep.subr.mxu0 0.0
      %740 = vmatpush1.msra.mxu0 0.0
      %741 = vmatprep.subr.mxu0 0.0
      %742 = vmatpush1.msra.mxu0 0.0
      %743 = vmatprep.subr.mxu0 0.0
      %744 = vmatpush1.msra.mxu0 0.0
      %745 = vmatprep.subr.mxu0 0.0
      %746 = vmatpush1.msra.mxu0 0.0
      %747 = vmatprep.subr.mxu0 0.0
      %748 = vmatpush1.msra.mxu0 0.0
      %749 = vmatprep.subr.mxu0 0.0
      %750 = vmatpush1.msra.mxu0 0.0
      %751 = vmatprep.subr.mxu0 0.0
      %752 = vmatpush1.msra.mxu0 0.0
      %753 = vmatprep.subr.mxu0 0.0
      %754 = vmatpush1.msra.mxu0 0.0
      %755 = vmatprep.subr.mxu0 0.0
      %756 = vmatpush1.msra.mxu0 0.0
      %757 = vmatprep.subr.mxu0 0.0
      %758 = vmatpush1.msra.mxu0 0.0
      %759 = vmatprep.subr.mxu0 0.0
      %760 = vmatpush1.msra.mxu0 0.0
      %761 = vmatprep.subr.mxu0 0.0
      %762 = vmatpush1.msra.mxu0 0.0
      %763 = vmatprep.subr.mxu0 0.0
      %764 = vmatpush1.msra.mxu0 0.0
      %765 = vmatprep.subr.mxu0 0.0
      %766 = vmatpush1.msra.mxu0 0.0
      %767 = vmatprep.mubr.f32.mxu0 0.0
      %768 = vmatmul.mubr.f32.gmra.mrb[0].mxu0 %v629
      %v769 = vpop.f32.mrb[0].mxu0
      %v770 = vadd.f32 0.0, %v769
      %v771 = vpop.f32.mrb[0].mxu0
      %772 = vdwg.mxu0
      %s774 = vtos %v449
      %v775 = vstv %s774
      %v777 = vmul.f32 %v775, %v441
      %v778 = vrot.slane %v449, 1
      %s779 = vtos %v778
      %v780 = vstv %s779
      %v782 = vmul.f32 %v780, %v442
      %v783 = vadd.f32 %v777, %v782
      %v784 = vrot.slane %v449, 2
      %s785 = vtos %v784
      %v786 = vstv %s785
      %v788 = vmul.f32 %v786, %v443
      %v789 = vadd.f32 %v783, %v788
      %v790 = vrot.slane %v449, 3
      %s791 = vtos %v790
      %v792 = vstv %s791
      %v794 = vmul.f32 %v792, %v444
      %v795 = vadd.f32 %v789, %v794
      %v796 = vrot.slane %v449, 4
      %s797 = vtos %v796
      %v798 = vstv %s797
      %v800 = vmul.f32 %v798, %v445
      %v801 = vadd.f32 %v795, %v800
      %v802 = vrot.slane %v449, 5
      %s803 = vtos %v802
      %v804 = vstv %s803
      %v806 = vmul.f32 %v804, %v446
      %v807 = vadd.f32 %v801, %v806
      %v808 = vrot.slane %v449, 6
      %s809 = vtos %v808
      %v810 = vstv %s809
      %v812 = vmul.f32 %v810, %v447
      %v813 = vadd.f32 %v807, %v812
      %v814 = vrot.slane %v449, 7
      %s815 = vtos %v814
      %v816 = vstv %s815
      %v818 = vmul.f32 %v816, %v448
      %v819 = vadd.f32 %v813, %v818
      %v820 = vlaneseq
      %v821 = vshrl.u32 %v820, 7
      %v822 = vsub.s32 0, %v821
      %v823 = vrot.slane %v698, %v822
      %v824 = vadd.f32 %v819, %v823
      %826 = vset.pattern.permute.xlu0 0
      %827 = vperm.xlu0 %826, %v770
      %v828 = vpop.permute.xlu0 %827
      %v830 = vadd.f32 %v824, %v828
      %v832 = vlaneseq
      %v833 = vshrl.u32 %v832, 7
      %v834 = vsub.s32 0, %v833
      %v835 = vrot.slane %v450, %v834
      %836 = vset.pattern.permute.xlu0 0
      %837 = vperm.xlu0 %836, %v835
      %v838 = vpop.permute.xlu0 %837
      %v840 = vadd.f32 %v830, %v838
      %841 = vst.msk [vmem:[%s432] sm:$0xff] %vm538, %v840
      %842 = vrot.lane.b32.xlu0 %v449, 127
      %v843 = vpop.permute.xlu0 %842
      %s844 = vtos %v843
      %v845 = vstv %s844
      %v847 = vmul.f32 %v845, %v441
      %848 = vrot.lane.b32.xlu0 %v778, 127
      %v849 = vpop.permute.xlu0 %848
      %s850 = vtos %v849
      %v851 = vstv %s850
      %v853 = vmul.f32 %v851, %v442
      %v854 = vadd.f32 %v847, %v853
      %855 = vrot.lane.b32.xlu0 %v784, 127
      %v856 = vpop.permute.xlu0 %855
      %s857 = vtos %v856
      %v858 = vstv %s857
      %v860 = vmul.f32 %v858, %v443
      %v861 = vadd.f32 %v854, %v860
      %862 = vrot.lane.b32.xlu0 %v790, 127
      %v863 = vpop.permute.xlu0 %862
      %s864 = vtos %v863
      %v865 = vstv %s864
      %v867 = vmul.f32 %v865, %v444
      %v868 = vadd.f32 %v861, %v867
      %869 = vrot.lane.b32.xlu0 %v796, 127
      %v870 = vpop.permute.xlu0 %869
      %s871 = vtos %v870
      %v872 = vstv %s871
      %v874 = vmul.f32 %v872, %v445
      %v875 = vadd.f32 %v868, %v874
      %876 = vrot.lane.b32.xlu0 %v802, 127
      %v877 = vpop.permute.xlu0 %876
      %s878 = vtos %v877
      %v879 = vstv %s878
      %v881 = vmul.f32 %v879, %v446
      %v882 = vadd.f32 %v875, %v881
      %883 = vrot.lane.b32.xlu0 %v808, 127
      %v884 = vpop.permute.xlu0 %883
      %s885 = vtos %v884
      %v886 = vstv %s885
      %v888 = vmul.f32 %v886, %v447
      %v889 = vadd.f32 %v882, %v888
      %890 = vrot.lane.b32.xlu0 %v814, 127
      %v891 = vpop.permute.xlu0 %890
      %s892 = vtos %v891
      %v893 = vstv %s892
      %v895 = vmul.f32 %v893, %v448
      %v896 = vadd.f32 %v889, %v895
      %v897 = vlaneseq
      %v898 = vshrl.u32 %v897, 7
      %v899 = vsub.s32 1, %v898
      %v900 = vrot.slane %v698, %v899
      %v901 = vadd.f32 %v896, %v900
      %902 = vset.pattern.permute.xlu0 1
      %903 = vperm.xlu0 %902, %v770
      %v904 = vpop.permute.xlu0 %903
      %v906 = vadd.f32 %v901, %v904
      %907 = vset.pattern.permute.xlu0 1
      %908 = vperm.xlu0 %907, %v835
      %v909 = vpop.permute.xlu0 %908
      %v911 = vadd.f32 %v906, %v909
      %s912 = scalar_lea.vmem %s432, 8
      %913 = vst.msk [vmem:[%s912] sm:$0xff] %vm538, %v911
      %914 = vrot.lane.b32.xlu0 %v449, 126
      %v915 = vpop.permute.xlu0 %914
      %s916 = vtos %v915
      %v917 = vstv %s916
      %v919 = vmul.f32 %v917, %v441
      %920 = vrot.lane.b32.xlu0 %v778, 126
      %v921 = vpop.permute.xlu0 %920
      %s922 = vtos %v921
      %v923 = vstv %s922
      %v925 = vmul.f32 %v923, %v442
      %v926 = vadd.f32 %v919, %v925
      %927 = vrot.lane.b32.xlu0 %v784, 126
      %v928 = vpop.permute.xlu0 %927
      %s929 = vtos %v928
      %v930 = vstv %s929
      %v932 = vmul.f32 %v930, %v443
      %v933 = vadd.f32 %v926, %v932
      %934 = vrot.lane.b32.xlu0 %v790, 126
      %v935 = vpop.permute.xlu0 %934
      %s936 = vtos %v935
      %v937 = vstv %s936
      %v939 = vmul.f32 %v937, %v444
      %v940 = vadd.f32 %v933, %v939
      %941 = vrot.lane.b32.xlu0 %v796, 126
      %v942 = vpop.permute.xlu0 %941
      %s943 = vtos %v942
      %v944 = vstv %s943
      %v946 = vmul.f32 %v944, %v445
      %v947 = vadd.f32 %v940, %v946
      %948 = vrot.lane.b32.xlu0 %v802, 126
      %v949 = vpop.permute.xlu0 %948
      %s950 = vtos %v949
      %v951 = vstv %s950
      %v953 = vmul.f32 %v951, %v446
      %v954 = vadd.f32 %v947, %v953
      %955 = vrot.lane.b32.xlu0 %v808, 126
      %v956 = vpop.permute.xlu0 %955
      %s957 = vtos %v956
      %v958 = vstv %s957
      %v960 = vmul.f32 %v958, %v447
      %v961 = vadd.f32 %v954, %v960
      %962 = vrot.lane.b32.xlu0 %v814, 126
      %v963 = vpop.permute.xlu0 %962
      %s964 = vtos %v963
      %v965 = vstv %s964
      %v967 = vmul.f32 %v965, %v448
      %v968 = vadd.f32 %v961, %v967
      %v969 = vlaneseq
      %v970 = vshrl.u32 %v969, 7
      %v971 = vsub.s32 2, %v970
      %v972 = vrot.slane %v698, %v971
      %v973 = vadd.f32 %v968, %v972
      %974 = vset.pattern.permute.xlu0 2
      %975 = vperm.xlu0 %974, %v770
      %v976 = vpop.permute.xlu0 %975
      %v978 = vadd.f32 %v973, %v976
      %979 = vset.pattern.permute.xlu0 2
      %980 = vperm.xlu0 %979, %v835
      %v981 = vpop.permute.xlu0 %980
      %v983 = vadd.f32 %v978, %v981
      %s984 = scalar_lea.vmem %s432, 16
      %985 = vst.msk [vmem:[%s984] sm:$0xff] %vm538, %v983
      %986 = vrot.lane.b32.xlu0 %v449, 125
      %v987 = vpop.permute.xlu0 %986
      %s988 = vtos %v987
      %v989 = vstv %s988
      %v991 = vmul.f32 %v989, %v441
      %992 = vrot.lane.b32.xlu0 %v778, 125
      %v993 = vpop.permute.xlu0 %992
      %s994 = vtos %v993
      %v995 = vstv %s994
      %v997 = vmul.f32 %v995, %v442
      %v998 = vadd.f32 %v991, %v997
      %999 = vrot.lane.b32.xlu0 %v784, 125
      %v1000 = vpop.permute.xlu0 %999
      %s1001 = vtos %v1000
      %v1002 = vstv %s1001
      %v1004 = vmul.f32 %v1002, %v443
      %v1005 = vadd.f32 %v998, %v1004
      %1006 = vrot.lane.b32.xlu0 %v790, 125
      %v1007 = vpop.permute.xlu0 %1006
      %s1008 = vtos %v1007
      %v1009 = vstv %s1008
      %v1011 = vmul.f32 %v1009, %v444
      %v1012 = vadd.f32 %v1005, %v1011
      %1013 = vrot.lane.b32.xlu0 %v796, 125
      %v1014 = vpop.permute.xlu0 %1013
      %s1015 = vtos %v1014
      %v1016 = vstv %s1015
      %v1018 = vmul.f32 %v1016, %v445
      %v1019 = vadd.f32 %v1012, %v1018
      %1020 = vrot.lane.b32.xlu0 %v802, 125
      %v1021 = vpop.permute.xlu0 %1020
      %s1022 = vtos %v1021
      %v1023 = vstv %s1022
      %v1025 = vmul.f32 %v1023, %v446
      %v1026 = vadd.f32 %v1019, %v1025
      %1027 = vrot.lane.b32.xlu0 %v808, 125
      %v1028 = vpop.permute.xlu0 %1027
      %s1029 = vtos %v1028
      %v1030 = vstv %s1029
      %v1032 = vmul.f32 %v1030, %v447
      %v1033 = vadd.f32 %v1026, %v1032
      %1034 = vrot.lane.b32.xlu0 %v814, 125
      %v1035 = vpop.permute.xlu0 %1034
      %s1036 = vtos %v1035
      %v1037 = vstv %s1036
      %v1039 = vmul.f32 %v1037, %v448
      %v1040 = vadd.f32 %v1033, %v1039
      %v1041 = vlaneseq
      %v1042 = vshrl.u32 %v1041, 7
      %v1043 = vsub.s32 3, %v1042
      %v1044 = vrot.slane %v698, %v1043
      %v1045 = vadd.f32 %v1040, %v1044
      %1046 = vset.pattern.permute.xlu0 3
      %1047 = vperm.xlu0 %1046, %v770
      %v1048 = vpop.permute.xlu0 %1047
      %v1050 = vadd.f32 %v1045, %v1048
      %1051 = vset.pattern.permute.xlu0 3
      %1052 = vperm.xlu0 %1051, %v835
      %v1053 = vpop.permute.xlu0 %1052
      %v1055 = vadd.f32 %v1050, %v1053
      %s1056 = scalar_lea.vmem %s432, 24
      %1057 = vst.msk [vmem:[%s1056] sm:$0xff] %vm538, %v1055
      %1058 = vrot.lane.b32.xlu0 %v449, 124
      %v1059 = vpop.permute.xlu0 %1058
      %s1060 = vtos %v1059
      %v1061 = vstv %s1060
      %v1063 = vmul.f32 %v1061, %v441
      %1064 = vrot.lane.b32.xlu0 %v778, 124
      %v1065 = vpop.permute.xlu0 %1064
      %s1066 = vtos %v1065
      %v1067 = vstv %s1066
      %v1069 = vmul.f32 %v1067, %v442
      %v1070 = vadd.f32 %v1063, %v1069
      %1071 = vrot.lane.b32.xlu0 %v784, 124
      %v1072 = vpop.permute.xlu0 %1071
      %s1073 = vtos %v1072
      %v1074 = vstv %s1073
      %v1076 = vmul.f32 %v1074, %v443
      %v1077 = vadd.f32 %v1070, %v1076
      %1078 = vrot.lane.b32.xlu0 %v790, 124
      %v1079 = vpop.permute.xlu0 %1078
      %s1080 = vtos %v1079
      %v1081 = vstv %s1080
      %v1083 = vmul.f32 %v1081, %v444
      %v1084 = vadd.f32 %v1077, %v1083
      %1085 = vrot.lane.b32.xlu0 %v796, 124
      %v1086 = vpop.permute.xlu0 %1085
      %s1087 = vtos %v1086
      %v1088 = vstv %s1087
      %v1090 = vmul.f32 %v1088, %v445
      %v1091 = vadd.f32 %v1084, %v1090
      %1092 = vrot.lane.b32.xlu0 %v802, 124
      %v1093 = vpop.permute.xlu0 %1092
      %s1094 = vtos %v1093
      %v1095 = vstv %s1094
      %v1097 = vmul.f32 %v1095, %v446
      %v1098 = vadd.f32 %v1091, %v1097
      %1099 = vrot.lane.b32.xlu0 %v808, 124
      %v1100 = vpop.permute.xlu0 %1099
      %s1101 = vtos %v1100
      %v1102 = vstv %s1101
      %v1104 = vmul.f32 %v1102, %v447
      %v1105 = vadd.f32 %v1098, %v1104
      %1106 = vrot.lane.b32.xlu0 %v814, 124
      %v1107 = vpop.permute.xlu0 %1106
      %s1108 = vtos %v1107
      %v1109 = vstv %s1108
      %v1111 = vmul.f32 %v1109, %v448
      %v1112 = vadd.f32 %v1105, %v1111
      %v1113 = vlaneseq
      %v1114 = vshrl.u32 %v1113, 7
      %v1115 = vsub.s32 4, %v1114
      %v1116 = vrot.slane %v698, %v1115
      %v1117 = vadd.f32 %v1112, %v1116
      %1118 = vset.pattern.permute.xlu0 4
      %1119 = vperm.xlu0 %1118, %v770
      %v1120 = vpop.permute.xlu0 %1119
      %v1122 = vadd.f32 %v1117, %v1120
      %1123 = vset.pattern.permute.xlu0 4
      %1124 = vperm.xlu0 %1123, %v835
      %v1125 = vpop.permute.xlu0 %1124
      %v1127 = vadd.f32 %v1122, %v1125
      %s1128 = scalar_lea.vmem %s432, 32
      %1129 = vst.msk [vmem:[%s1128] sm:$0xff] %vm538, %v1127
      %1130 = vrot.lane.b32.xlu0 %v449, 123
      %v1131 = vpop.permute.xlu0 %1130
      %s1132 = vtos %v1131
      %v1133 = vstv %s1132
      %v1135 = vmul.f32 %v1133, %v441
      %1136 = vrot.lane.b32.xlu0 %v778, 123
      %v1137 = vpop.permute.xlu0 %1136
      %s1138 = vtos %v1137
      %v1139 = vstv %s1138
      %v1141 = vmul.f32 %v1139, %v442
      %v1142 = vadd.f32 %v1135, %v1141
      %1143 = vrot.lane.b32.xlu0 %v784, 123
      %v1144 = vpop.permute.xlu0 %1143
      %s1145 = vtos %v1144
      %v1146 = vstv %s1145
      %v1148 = vmul.f32 %v1146, %v443
      %v1149 = vadd.f32 %v1142, %v1148
      %1150 = vrot.lane.b32.xlu0 %v790, 123
      %v1151 = vpop.permute.xlu0 %1150
      %s1152 = vtos %v1151
      %v1153 = vstv %s1152
      %v1155 = vmul.f32 %v1153, %v444
      %v1156 = vadd.f32 %v1149, %v1155
      %1157 = vrot.lane.b32.xlu0 %v796, 123
      %v1158 = vpop.permute.xlu0 %1157
      %s1159 = vtos %v1158
      %v1160 = vstv %s1159
      %v1162 = vmul.f32 %v1160, %v445
      %v1163 = vadd.f32 %v1156, %v1162
      %1164 = vrot.lane.b32.xlu0 %v802, 123
      %v1165 = vpop.permute.xlu0 %1164
      %s1166 = vtos %v1165
      %v1167 = vstv %s1166
      %v1169 = vmul.f32 %v1167, %v446
      %v1170 = vadd.f32 %v1163, %v1169
      %1171 = vrot.lane.b32.xlu0 %v808, 123
      %v1172 = vpop.permute.xlu0 %1171
      %s1173 = vtos %v1172
      %v1174 = vstv %s1173
      %v1176 = vmul.f32 %v1174, %v447
      %v1177 = vadd.f32 %v1170, %v1176
      %1178 = vrot.lane.b32.xlu0 %v814, 123
      %v1179 = vpop.permute.xlu0 %1178
      %s1180 = vtos %v1179
      %v1181 = vstv %s1180
      %v1183 = vmul.f32 %v1181, %v448
      %v1184 = vadd.f32 %v1177, %v1183
      %v1185 = vlaneseq
      %v1186 = vshrl.u32 %v1185, 7
      %v1187 = vsub.s32 5, %v1186
      %v1188 = vrot.slane %v698, %v1187
      %v1189 = vadd.f32 %v1184, %v1188
      %1190 = vset.pattern.permute.xlu0 5
      %1191 = vperm.xlu0 %1190, %v770
      %v1192 = vpop.permute.xlu0 %1191
      %v1194 = vadd.f32 %v1189, %v1192
      %1195 = vset.pattern.permute.xlu0 5
      %1196 = vperm.xlu0 %1195, %v835
      %v1197 = vpop.permute.xlu0 %1196
      %v1199 = vadd.f32 %v1194, %v1197
      %s1200 = scalar_lea.vmem %s432, 40
      %1201 = vst.msk [vmem:[%s1200] sm:$0xff] %vm538, %v1199
      %1202 = vrot.lane.b32.xlu0 %v449, 122
      %v1203 = vpop.permute.xlu0 %1202
      %s1204 = vtos %v1203
      %v1205 = vstv %s1204
      %v1207 = vmul.f32 %v1205, %v441
      %1208 = vrot.lane.b32.xlu0 %v778, 122
      %v1209 = vpop.permute.xlu0 %1208
      %s1210 = vtos %v1209
      %v1211 = vstv %s1210
      %v1213 = vmul.f32 %v1211, %v442
      %v1214 = vadd.f32 %v1207, %v1213
      %1215 = vrot.lane.b32.xlu0 %v784, 122
      %v1216 = vpop.permute.xlu0 %1215
      %s1217 = vtos %v1216
      %v1218 = vstv %s1217
      %v1220 = vmul.f32 %v1218, %v443
      %v1221 = vadd.f32 %v1214, %v1220
      %1222 = vrot.lane.b32.xlu0 %v790, 122
      %v1223 = vpop.permute.xlu0 %1222
      %s1224 = vtos %v1223
      %v1225 = vstv %s1224
      %v1227 = vmul.f32 %v1225, %v444
      %v1228 = vadd.f32 %v1221, %v1227
      %1229 = vrot.lane.b32.xlu0 %v796, 122
      %v1230 = vpop.permute.xlu0 %1229
      %s1231 = vtos %v1230
      %v1232 = vstv %s1231
      %v1234 = vmul.f32 %v1232, %v445
      %v1235 = vadd.f32 %v1228, %v1234
      %1236 = vrot.lane.b32.xlu0 %v802, 122
      %v1237 = vpop.permute.xlu0 %1236
      %s1238 = vtos %v1237
      %v1239 = vstv %s1238
      %v1241 = vmul.f32 %v1239, %v446
      %v1242 = vadd.f32 %v1235, %v1241
      %1243 = vrot.lane.b32.xlu0 %v808, 122
      %v1244 = vpop.permute.xlu0 %1243
      %s1245 = vtos %v1244
      %v1246 = vstv %s1245
      %v1248 = vmul.f32 %v1246, %v447
      %v1249 = vadd.f32 %v1242, %v1248
      %1250 = vrot.lane.b32.xlu0 %v814, 122
      %v1251 = vpop.permute.xlu0 %1250
      %s1252 = vtos %v1251
      %v1253 = vstv %s1252
      %v1255 = vmul.f32 %v1253, %v448
      %v1256 = vadd.f32 %v1249, %v1255
      %v1257 = vlaneseq
      %v1258 = vshrl.u32 %v1257, 7
      %v1259 = vsub.s32 6, %v1258
      %v1260 = vrot.slane %v698, %v1259
      %v1261 = vadd.f32 %v1256, %v1260
      %1262 = vset.pattern.permute.xlu0 6
      %1263 = vperm.xlu0 %1262, %v770
      %v1264 = vpop.permute.xlu0 %1263
      %v1266 = vadd.f32 %v1261, %v1264
      %1267 = vset.pattern.permute.xlu0 6
      %1268 = vperm.xlu0 %1267, %v835
      %v1269 = vpop.permute.xlu0 %1268
      %v1271 = vadd.f32 %v1266, %v1269
      %s1272 = scalar_lea.vmem %s432, 48
      %1273 = vst.msk [vmem:[%s1272] sm:$0xff] %vm538, %v1271
      %1274 = vrot.lane.b32.xlu0 %v449, 121
      %v1275 = vpop.permute.xlu0 %1274
      %s1276 = vtos %v1275
      %v1277 = vstv %s1276
      %v1279 = vmul.f32 %v1277, %v441
      %1280 = vrot.lane.b32.xlu0 %v778, 121
      %v1281 = vpop.permute.xlu0 %1280
      %s1282 = vtos %v1281
      %v1283 = vstv %s1282
      %v1285 = vmul.f32 %v1283, %v442
      %v1286 = vadd.f32 %v1279, %v1285
      %1287 = vrot.lane.b32.xlu0 %v784, 121
      %v1288 = vpop.permute.xlu0 %1287
      %s1289 = vtos %v1288
      %v1290 = vstv %s1289
      %v1292 = vmul.f32 %v1290, %v443
      %v1293 = vadd.f32 %v1286, %v1292
      %1294 = vrot.lane.b32.xlu0 %v790, 121
      %v1295 = vpop.permute.xlu0 %1294
      %s1296 = vtos %v1295
      %v1297 = vstv %s1296
      %v1299 = vmul.f32 %v1297, %v444
      %v1300 = vadd.f32 %v1293, %v1299
      %1301 = vrot.lane.b32.xlu0 %v796, 121
      %v1302 = vpop.permute.xlu0 %1301
      %s1303 = vtos %v1302
      %v1304 = vstv %s1303
      %v1306 = vmul.f32 %v1304, %v445
      %v1307 = vadd.f32 %v1300, %v1306
      %1308 = vrot.lane.b32.xlu0 %v802, 121
      %v1309 = vpop.permute.xlu0 %1308
      %s1310 = vtos %v1309
      %v1311 = vstv %s1310
      %v1313 = vmul.f32 %v1311, %v446
      %v1314 = vadd.f32 %v1307, %v1313
      %1315 = vrot.lane.b32.xlu0 %v808, 121
      %v1316 = vpop.permute.xlu0 %1315
      %s1317 = vtos %v1316
      %v1318 = vstv %s1317
      %v1320 = vmul.f32 %v1318, %v447
      %v1321 = vadd.f32 %v1314, %v1320
      %1322 = vrot.lane.b32.xlu0 %v814, 121
      %v1323 = vpop.permute.xlu0 %1322
      %s1324 = vtos %v1323
      %v1325 = vstv %s1324
      %v1327 = vmul.f32 %v1325, %v448
      %v1328 = vadd.f32 %v1321, %v1327
      %v1329 = vlaneseq
      %v1330 = vshrl.u32 %v1329, 7
      %v1331 = vsub.s32 7, %v1330
      %v1332 = vrot.slane %v698, %v1331
      %v1333 = vadd.f32 %v1328, %v1332
      %1334 = vset.pattern.permute.xlu0 7
      %1335 = vperm.xlu0 %1334, %v770
      %v1336 = vpop.permute.xlu0 %1335
      %v1338 = vadd.f32 %v1333, %v1336
      %1339 = vset.pattern.permute.xlu0 7
      %1340 = vperm.xlu0 %1339, %v835
      %v1341 = vpop.permute.xlu0 %1340
      %v1343 = vadd.f32 %v1338, %v1341
      %s1344 = scalar_lea.vmem %s432, 56
      %1345 = vst.msk [vmem:[%s1344] sm:$0xff] %vm538, %v1343
      %p1346 = scmp.lt.s32.totalorder %s25, 1
      %s1347 = scalar_select %p1346, %s25, 1
      %p1348 = scmp.lt.s32.totalorder %s26, 1
      %s1349 = scalar_select %p1348, %s26, 1
      %s1350 = smul.addr %s1349, 8
      %s1351 = smul.addr %s1347, 16
      %s1352 = sadd.s32 %s1350, %s1351
      %s1353 = smul.addr %s1352, 8
      %s1354 = scalar_lea.vmem %s8, %s1353
      %p1355 = scmp.lt.s32.totalorder %s25, 1
      %s1356 = scalar_select %p1355, %s25, 1
      %p1357 = scmp.lt.s32.totalorder %s26, 1
      %s1358 = scalar_select %p1357, %s26, 1
      %s1359 = smul.addr %s1356, 2
      %s1360 = sadd.s32 %s1358, %s1359
      %s1361 = smul.addr %s1360, 8
      %s1362 = scalar_lea.vmem %s9, %s1361
      // Predicated region
      $region53: #{_lambda_.3} parent=51 // pred_check
        %p1363 = pneg %p243
      $region54: #{_lambda_.3} parent=51 // pred_check_branch
        %1365 = sbr.rel (%p1363) target = $region56
      $region55: #{_lambda_.3} parent=51 // pred_region
        _
      $region56: #{_lambda_.3} parent=51 // pred_fallthru
        _
      // Predicated region
      $region57: #{_lambda_.3} parent=51 // pred_check
        %p1366 = pneg %p271
      $region58: #{_lambda_.3} parent=51 // pred_check_branch
        %1368 = sbr.rel (%p1366) target = $region60
      $region59: #{_lambda_.3} parent=51 // pred_region
        _
      $region60: #{_lambda_.3} parent=51 // pred_fallthru
        _
    $region52: #{_lambda_.3} parent=5 // pred_fallthru
      _
    %p1369 = scmp.le.s32.totalorder 2, %s16
    // Predicated region
    $region61: #{_lambda_.3} parent=5 // pred_check
      %p1370 = pneg %p1369
    $region62: #{_lambda_.3} parent=5 // pred_check_branch
      %1372 = sbr.rel (%p1370) target = $region64
    $region63: #{_lambda_.3} parent=5 // pred_region
      %s1373 = ssub.s32 %s16, 2
      // Predicated region
      $region65: #{_lambda_.3} parent=63 // pred_check
        %p1374 = pneg %p249
      $region66: #{_lambda_.3} parent=63 // pred_check_branch
        %1376 = sbr.rel (%p1374) target = $region68
      $region67: #{_lambda_.3} parent=63 // pred_region
        %p1377 = scmp.lt.s32.totalorder %s27, 1
        %s1378 = scalar_select %p1377, %s27, 1
        %p1379 = scmp.lt.s32.totalorder %s28, 1
        %s1380 = scalar_select %p1379, %s28, 1
        %s1381 = smul.addr %s1380, 8
        %s1382 = smul.addr %s1378, 16
        %s1383 = sadd.s32 %s1381, %s1382
        %s1384 = smul.addr %s1383, 8
        %s1385 = scalar_lea.vmem %s8, %s1384
      $region68: #{_lambda_.3} parent=63 // pred_fallthru
        _
      // Predicated region
      $region69: #{_lambda_.3} parent=63 // pred_check
        %p1386 = pneg %p277
      $region70: #{_lambda_.3} parent=63 // pred_check_branch
        %1388 = sbr.rel (%p1386) target = $region72
      $region71: #{_lambda_.3} parent=63 // pred_region
        %p1389 = scmp.lt.s32.totalorder %s27, 1
        %s1390 = scalar_select %p1389, %s27, 1
        %p1391 = scmp.lt.s32.totalorder %s28, 1
        %s1392 = scalar_select %p1391, %s28, 1
        %s1393 = smul.addr %s1390, 2
        %s1394 = sadd.s32 %s1392, %s1393
        %s1395 = smul.addr %s1394, 8
        %s1396 = scalar_lea.vmem %s9, %s1395
      $region72: #{_lambda_.3} parent=63 // pred_fallthru
        _
    $region64: #{_lambda_.3} parent=5 // pred_fallthru
      _
  $region6: #{_lambda_.3} parent=0 // loop_footer
    %s20 = sadd.s32 1, %s16
  $region7: #{_lambda_.3} parent=0 // loop_footer_branch
    %15 = sbr.rel target = $region3
  $region8: #{_lambda_.3} parent=0 // loop_exit
    _

// kernel: _lambda_.4
$region0: #{_lambda_.4}
  #allocation0 [shape = 'u32[]', space=smem, size = 0x4, offset = 0x4, fixed_abs, tag = 'smem constant byte address 0x4 - core index']
  #allocation1 [shape = 'u32[144,128]{1,0:T(1,128)}', space=vmem, size = 0x12000, scoped, tag = 'internal scratch']
  %s0 = inlined_call_operand.vmem [shape: f32[2,2,8,8,8], index: 0, kind: input, shape index: {}, may-alias: {0,10}]
  %s1 = inlined_call_operand.vmem [shape: f32[2,8,32], index: 1, kind: input, shape index: {}]
  %s2 = inlined_call_operand.vmem [shape: f32[2,2,8,16], index: 2, kind: input, shape index: {}]
  %s3 = inlined_call_operand.vmem [shape: f32[2,32,16], index: 3, kind: input, shape index: {}]
  %s4 = inlined_call_operand.vmem [shape: f32[2,16,16], index: 4, kind: input, shape index: {}]
  %s5 = inlined_call_operand.vmem [shape: f32[2,1,16], index: 5, kind: input, shape index: {}]
  %s6 = inlined_call_operand.vmem [shape: f32[8,8], index: 6, kind: input, shape index: {}]
  %s7 = inlined_call_operand.vmem [shape: f32[8,16], index: 7, kind: input, shape index: {}]
  %s8 = inlined_call_operand.vmem [shape: f32[16,8], index: 8, kind: input, shape index: {}]
  %s9 = inlined_call_operand.vmem [shape: f32[1,8], index: 9, kind: input, shape index: {}]
  %s10 = inlined_call_operand.vmem [shape: f32[2,2,8,8,8], index: 10, kind: output, shape index: {0}, may-alias: {0,10}]
  %s11 = inlined_call_operand.vmem [shape: f32[2,2,8,16], index: 11, kind: output, shape index: {1}]
  %12 = xla_tuple %s10, %s11
  %s13 = sld [smem:[#allocation0]]
  $region81: #{_lambda_.4} parent=0
    _
  %s15 = ssub.s32 1, %s13
  %s16 = scalar_select 0, %s15, %s13
  loop: start=0, step=1, limit=6
  $region2: #{_lambda_.4} parent=0 // loop_pre_header
    _
  $region3: #{_lambda_.4} parent=0 // loop_header
    %s18 = sphi 0, %s22
    %p19 = scmp.ge.s32.totalorder %s18, 6
    %s25 = sphi 0, %s37
    %s26 = sphi 0, %s33
    %s27 = sphi 0, %s25
    %s28 = sphi 0, %s26
    %s29 = sphi 0, %s27
    %s30 = sphi 0, %s28
    %s42 = sphi 0, %s44
    %s45 = sphi 0, %s42
    %s46 = sphi 0, %s45
    %s62 = sphi 0, %s46
    %s68 = sphi 0, %s70
    %s71 = sphi 0, %s68
    %s72 = sphi 0, %s71
    %s88 = sphi 0, %s72
    %s96 = sphi 0, %s98
    %s99 = sphi 0, %s96
    %s100 = sphi 0, %s99
    %s116 = sphi 0, %s100
    %s122 = sphi 0, %s124
    %s125 = sphi 0, %s122
    %s126 = sphi 0, %s125
    %s142 = sphi 0, %s126
    %s148 = sphi 0, %s150
    %s151 = sphi 0, %s148
    %s152 = sphi 0, %s151
    %s168 = sphi 0, %s152
    %s174 = sphi 0, %s176
    %s177 = sphi 0, %s174
    %s178 = sphi 0, %s177
    %s194 = sphi 0, %s178
    %s198 = sphi 0, %s198
    %s200 = sphi 0, %s198
    %s201 = sphi 0, %s200
    %s215 = sphi 0, %s201
    %s219 = sphi 0, %s219
    %s221 = sphi 0, %s219
    %s222 = sphi 0, %s221
    %s236 = sphi 0, %s222
    %s240 = sphi 0, %s240
    %s242 = sphi 0, %s240
    %s243 = sphi 0, %s242
    %s257 = sphi 0, %s243
    %s261 = sphi 0, %s261
    %s263 = sphi 0, %s261
    %s264 = sphi 0, %s263
    %s278 = sphi 0, %s264
    %s286 = sphi 0, %s288
    %s289 = sphi 0, %s286
    %s290 = sphi 0, %s289
    %s306 = sphi 0, %s290
    %s314 = sphi 0, %s316
    %s317 = sphi 0, %s314
    %s318 = sphi 0, %s317
    %s334 = sphi 0, %s318
  $region4: #{_lambda_.4} parent=0 // loop_header_branch
    %21 = sbr.rel (%p19) target = $region8
  $region5: #{_lambda_.4} parent=0 // loop_body
    %s23 = ssub.s32 %s18, 1
    %s24 = ssub.s32 %s18, 2
    %s31 = sadd.s32 1, %s26
    %p32 = scmp.ge.s32.totalorder %s31, 2
    %s33 = scalar_select %p32, 0, %s31
    %s34 = sadd.s32 1, %s25
    %s35 = scalar_select %p32, %s34, %s25
    %p36 = scmp.ge.s32.totalorder %s35, 2
    %s37 = scalar_select %p36, 0, %s35
    %s38 = ssub.s32 %s25, %s37
    %s39 = ssub.s32 %s26, %s33
    %s40 = sor.u32 %s38, %s39
    %p41 = scmp.eq.s32.totalorder %s40, 0
    %s43 = sadd.s32 %s42, 1
    %s44 = scalar_select %p41, %s42, %s43
    %p47 = pneg %p41
    %p48 = scmp.eq.s32.totalorder %s18, 3
    %p49 = por %p47, %p48
    %p50 = scmp.ne.s32.totalorder %s42, %s45
    %p51 = scmp.eq.s32.totalorder %s18, 0
    %p52 = por %p50, %p51
    %p53 = scmp.ne.s32.totalorder %s42, %s45
    %p54 = scmp.eq.s32.totalorder %s23, 3
    %p55 = por %p53, %p54
    %p56 = scmp.ne.s32.totalorder %s45, %s46
    %p57 = scmp.eq.s32.totalorder %s23, 0
    %p58 = por %p56, %p57
    %p59 = scmp.ne.s32.totalorder %s45, %s46
    %p60 = scmp.eq.s32.totalorder %s24, 3
    %p61 = por %p59, %p60
    %p63 = scmp.ne.s32.totalorder %s46, %s62
    %p64 = scmp.eq.s32.totalorder %s24, 0
    %p65 = por %p63, %p64
    %s66 = ssub.s32 %s26, %s33
    %p67 = scmp.eq.s32.totalorder %s66, 0
    %s69 = sadd.s32 %s68, 1
    %s70 = scalar_select %p67, %s68, %s69
    %p73 = pneg %p67
    %p74 = scmp.eq.s32.totalorder %s18, 3
    %p75 = por %p73, %p74
    %p76 = scmp.ne.s32.totalorder %s68, %s71
    %p77 = scmp.eq.s32.totalorder %s18, 0
    %p78 = por %p76, %p77
    %p79 = scmp.ne.s32.totalorder %s68, %s71
    %p80 = scmp.eq.s32.totalorder %s23, 3
    %p81 = por %p79, %p80
    %p82 = scmp.ne.s32.totalorder %s71, %s72
    %p83 = scmp.eq.s32.totalorder %s23, 0
    %p84 = por %p82, %p83
    %p85 = scmp.ne.s32.totalorder %s71, %s72
    %p86 = scmp.eq.s32.totalorder %s24, 3
    %p87 = por %p85, %p86
    %p89 = scmp.ne.s32.totalorder %s72, %s88
    %p90 = scmp.eq.s32.totalorder %s24, 0
    %p91 = por %p89, %p90
    %s92 = ssub.s32 %s25, %s37
    %s93 = ssub.s32 %s26, %s33
    %s94 = sor.u32 %s92, %s93
    %p95 = scmp.eq.s32.totalorder %s94, 0
    %s97 = sadd.s32 %s96, 1
    %s98 = scalar_select %p95, %s96, %s97
    %p101 = pneg %p95
    %p102 = scmp.eq.s32.totalorder %s18, 3
    %p103 = por %p101, %p102
    %p104 = scmp.ne.s32.totalorder %s96, %s99
    %p105 = scmp.eq.s32.totalorder %s18, 0
    %p106 = por %p104, %p105
    %p107 = scmp.ne.s32.totalorder %s96, %s99
    %p108 = scmp.eq.s32.totalorder %s23, 3
    %p109 = por %p107, %p108
    %p110 = scmp.ne.s32.totalorder %s99, %s100
    %p111 = scmp.eq.s32.totalorder %s23, 0
    %p112 = por %p110, %p111
    %p113 = scmp.ne.s32.totalorder %s99, %s100
    %p114 = scmp.eq.s32.totalorder %s24, 3
    %p115 = por %p113, %p114
    %p117 = scmp.ne.s32.totalorder %s100, %s116
    %p118 = scmp.eq.s32.totalorder %s24, 0
    %p119 = por %p117, %p118
    %s120 = ssub.s32 %s25, %s37
    %p121 = scmp.eq.s32.totalorder %s120, 0
    %s123 = sadd.s32 %s122, 1
    %s124 = scalar_select %p121, %s122, %s123
    %p127 = pneg %p121
    %p128 = scmp.eq.s32.totalorder %s18, 3
    %p129 = por %p127, %p128
    %p130 = scmp.ne.s32.totalorder %s122, %s125
    %p131 = scmp.eq.s32.totalorder %s18, 0
    %p132 = por %p130, %p131
    %p133 = scmp.ne.s32.totalorder %s122, %s125
    %p134 = scmp.eq.s32.totalorder %s23, 3
    %p135 = por %p133, %p134
    %p136 = scmp.ne.s32.totalorder %s125, %s126
    %p137 = scmp.eq.s32.totalorder %s23, 0
    %p138 = por %p136, %p137
    %p139 = scmp.ne.s32.totalorder %s125, %s126
    %p140 = scmp.eq.s32.totalorder %s24, 3
    %p141 = por %p139, %p140
    %p143 = scmp.ne.s32.totalorder %s126, %s142
    %p144 = scmp.eq.s32.totalorder %s24, 0
    %p145 = por %p143, %p144
    %s146 = ssub.s32 %s25, %s37
    %p147 = scmp.eq.s32.totalorder %s146, 0
    %s149 = sadd.s32 %s148, 1
    %s150 = scalar_select %p147, %s148, %s149
    %p153 = pneg %p147
    %p154 = scmp.eq.s32.totalorder %s18, 3
    %p155 = por %p153, %p154
    %p156 = scmp.ne.s32.totalorder %s148, %s151
    %p157 = scmp.eq.s32.totalorder %s18, 0
    %p158 = por %p156, %p157
    %p159 = scmp.ne.s32.totalorder %s148, %s151
    %p160 = scmp.eq.s32.totalorder %s23, 3
    %p161 = por %p159, %p160
    %p162 = scmp.ne.s32.totalorder %s151, %s152
    %p163 = scmp.eq.s32.totalorder %s23, 0
    %p164 = por %p162, %p163
    %p165 = scmp.ne.s32.totalorder %s151, %s152
    %p166 = scmp.eq.s32.totalorder %s24, 3
    %p167 = por %p165, %p166
    %p169 = scmp.ne.s32.totalorder %s152, %s168
    %p170 = scmp.eq.s32.totalorder %s24, 0
    %p171 = por %p169, %p170
    %s172 = ssub.s32 %s25, %s37
    %p173 = scmp.eq.s32.totalorder %s172, 0
    %s175 = sadd.s32 %s174, 1
    %s176 = scalar_select %p173, %s174, %s175
    %p179 = pneg %p173
    %p180 = scmp.eq.s32.totalorder %s18, 3
    %p181 = por %p179, %p180
    %p182 = scmp.ne.s32.totalorder %s174, %s177
    %p183 = scmp.eq.s32.totalorder %s18, 0
    %p184 = por %p182, %p183
    %p185 = scmp.ne.s32.totalorder %s174, %s177
    %p186 = scmp.eq.s32.totalorder %s23, 3
    %p187 = por %p185, %p186
    %p188 = scmp.ne.s32.totalorder %s177, %s178
    %p189 = scmp.eq.s32.totalorder %s23, 0
    %p190 = por %p188, %p189
    %p191 = scmp.ne.s32.totalorder %s177, %s178
    %p192 = scmp.eq.s32.totalorder %s24, 3
    %p193 = por %p191, %p192
    %p195 = scmp.ne.s32.totalorder %s178, %s194
    %p196 = scmp.eq.s32.totalorder %s24, 0
    %p197 = por %p195, %p196
    %s199 = sadd.s32 %s198, 1
    %p202 = scmp.eq.s32.totalorder %s18, 3
    %p203 = scmp.ne.s32.totalorder %s198, %s200
    %p204 = scmp.eq.s32.totalorder %s18, 0
    %p205 = por %p203, %p204
    %p206 = scmp.ne.s32.totalorder %s198, %s200
    %p207 = scmp.eq.s32.totalorder %s23, 3
    %p208 = por %p206, %p207
    %p209 = scmp.ne.s32.totalorder %s200, %s201
    %p210 = scmp.eq.s32.totalorder %s23, 0
    %p211 = por %p209, %p210
    %p212 = scmp.ne.s32.totalorder %s200, %s201
    %p213 = scmp.eq.s32.totalorder %s24, 3
    %p214 = por %p212, %p213
    %p216 = scmp.ne.s32.totalorder %s201, %s215
    %p217 = scmp.eq.s32.totalorder %s24, 0
    %p218 = por %p216, %p217
    %s220 = sadd.s32 %s219, 1
    %p223 = scmp.eq.s32.totalorder %s18, 3
    %p224 = scmp.ne.s32.totalorder %s219, %s221
    %p225 = scmp.eq.s32.totalorder %s18, 0
    %p226 = por %p224, %p225
    %p227 = scmp.ne.s32.totalorder %s219, %s221
    %p228 = scmp.eq.s32.totalorder %s23, 3
    %p229 = por %p227, %p228
    %p230 = scmp.ne.s32.totalorder %s221, %s222
    %p231 = scmp.eq.s32.totalorder %s23, 0
    %p232 = por %p230, %p231
    %p233 = scmp.ne.s32.totalorder %s221, %s222
    %p234 = scmp.eq.s32.totalorder %s24, 3
    %p235 = por %p233, %p234
    %p237 = scmp.ne.s32.totalorder %s222, %s236
    %p238 = scmp.eq.s32.totalorder %s24, 0
    %p239 = por %p237, %p238
    %s241 = sadd.s32 %s240, 1
    %p244 = scmp.eq.s32.totalorder %s18, 3
    %p245 = scmp.ne.s32.totalorder %s240, %s242
    %p246 = scmp.eq.s32.totalorder %s18, 0
    %p247 = por %p245, %p246
    %p248 = scmp.ne.s32.totalorder %s240, %s242
    %p249 = scmp.eq.s32.totalorder %s23, 3
    %p250 = por %p248, %p249
    %p251 = scmp.ne.s32.totalorder %s242, %s243
    %p252 = scmp.eq.s32.totalorder %s23, 0
    %p253 = por %p251, %p252
    %p254 = scmp.ne.s32.totalorder %s242, %s243
    %p255 = scmp.eq.s32.totalorder %s24, 3
    %p256 = por %p254, %p255
    %p258 = scmp.ne.s32.totalorder %s243, %s257
    %p259 = scmp.eq.s32.totalorder %s24, 0
    %p260 = por %p258, %p259
    %s262 = sadd.s32 %s261, 1
    %p265 = scmp.eq.s32.totalorder %s18, 3
    %p266 = scmp.ne.s32.totalorder %s261, %s263
    %p267 = scmp.eq.s32.totalorder %s18, 0
    %p268 = por %p266, %p267
    %p269 = scmp.ne.s32.totalorder %s261, %s263
    %p270 = scmp.eq.s32.totalorder %s23, 3
    %p271 = por %p269, %p270
    %p272 = scmp.ne.s32.totalorder %s263, %s264
    %p273 = scmp.eq.s32.totalorder %s23, 0
    %p274 = por %p272, %p273
    %p275 = scmp.ne.s32.totalorder %s263, %s264
    %p276 = scmp.eq.s32.totalorder %s24, 3
    %p277 = por %p275, %p276
    %p279 = scmp.ne.s32.totalorder %s264, %s278
    %p280 = scmp.eq.s32.totalorder %s24, 0
    %p281 = por %p279, %p280
    %s282 = ssub.s32 %s25, %s37
    %s283 = ssub.s32 %s26, %s33
    %s284 = sor.u32 %s282, %s283
    %p285 = scmp.eq.s32.totalorder %s284, 0
    %s287 = sadd.s32 %s286, 1
    %s288 = scalar_select %p285, %s286, %s287
    %p291 = pneg %p285
    %p292 = scmp.eq.s32.totalorder %s18, 3
    %p293 = por %p291, %p292
    %p294 = scmp.ne.s32.totalorder %s286, %s289
    %p295 = scmp.eq.s32.totalorder %s18, 0
    %p296 = por %p294, %p295
    %p297 = scmp.ne.s32.totalorder %s286, %s289
    %p298 = scmp.eq.s32.totalorder %s23, 3
    %p299 = por %p297, %p298
    %p300 = scmp.ne.s32.totalorder %s289, %s290
    %p301 = scmp.eq.s32.totalorder %s23, 0
    %p302 = por %p300, %p301
    %p303 = scmp.ne.s32.totalorder %s289, %s290
    %p304 = scmp.eq.s32.totalorder %s24, 3
    %p305 = por %p303, %p304
    %p307 = scmp.ne.s32.totalorder %s290, %s306
    %p308 = scmp.eq.s32.totalorder %s24, 0
    %p309 = por %p307, %p308
    %s310 = ssub.s32 %s25, %s37
    %s311 = ssub.s32 %s26, %s33
    %s312 = sor.u32 %s310, %s311
    %p313 = scmp.eq.s32.totalorder %s312, 0
    %s315 = sadd.s32 %s314, 1
    %s316 = scalar_select %p313, %s314, %s315
    %p319 = pneg %p313
    %p320 = scmp.eq.s32.totalorder %s18, 3
    %p321 = por %p319, %p320
    %p322 = scmp.ne.s32.totalorder %s314, %s317
    %p323 = scmp.eq.s32.totalorder %s18, 0
    %p324 = por %p322, %p323
    %p325 = scmp.ne.s32.totalorder %s314, %s317
    %p326 = scmp.eq.s32.totalorder %s23, 3
    %p327 = por %p325, %p326
    %p328 = scmp.ne.s32.totalorder %s317, %s318
    %p329 = scmp.eq.s32.totalorder %s23, 0
    %p330 = por %p328, %p329
    %p331 = scmp.ne.s32.totalorder %s317, %s318
    %p332 = scmp.eq.s32.totalorder %s24, 3
    %p333 = por %p331, %p332
    %p335 = scmp.ne.s32.totalorder %s318, %s334
    %p336 = scmp.eq.s32.totalorder %s24, 0
    %p337 = por %p335, %p336
    %p338 = scmp.le.s32.totalorder 1, %s18
    %p339 = scmp.lt.s32.totalorder %s18, 5
    %p340 = pnand %p338, %p339
    %p341 = pneg %p340
    // Predicated region
    $region9: #{_lambda_.4} parent=5 // pred_check
      _
    $region10: #{_lambda_.4} parent=5 // pred_check_branch
      %343 = sbr.rel (%p340) target = $region12
    $region11: #{_lambda_.4} parent=5 // pred_region
      %s344 = ssub.s32 %s18, 1
      // Predicated region
      $region13: #{_lambda_.4} parent=11 // pred_check
        %p345 = pneg %p211
      $region14: #{_lambda_.4} parent=11 // pred_check_branch
        %347 = sbr.rel (%p345) target = $region16
      $region15: #{_lambda_.4} parent=11 // pred_region
        _
      $region16: #{_lambda_.4} parent=11 // pred_fallthru
        _
      // Predicated region
      $region17: #{_lambda_.4} parent=11 // pred_check
        %p348 = pneg %p232
      $region18: #{_lambda_.4} parent=11 // pred_check_branch
        %350 = sbr.rel (%p348) target = $region20
      $region19: #{_lambda_.4} parent=11 // pred_region
        _
      $region20: #{_lambda_.4} parent=11 // pred_fallthru
        _
      // Predicated region
      $region21: #{_lambda_.4} parent=11 // pred_check
        %p351 = pneg %p253
      $region22: #{_lambda_.4} parent=11 // pred_check_branch
        %353 = sbr.rel (%p351) target = $region24
      $region23: #{_lambda_.4} parent=11 // pred_region
        _
      $region24: #{_lambda_.4} parent=11 // pred_fallthru
        _
      // Predicated region
      $region25: #{_lambda_.4} parent=11 // pred_check
        %p354 = pneg %p274
      $region26: #{_lambda_.4} parent=11 // pred_check_branch
        %356 = sbr.rel (%p354) target = $region28
      $region27: #{_lambda_.4} parent=11 // pred_region
        _
      $region28: #{_lambda_.4} parent=11 // pred_fallthru
        _
    $region12: #{_lambda_.4} parent=5 // pred_fallthru
      _
    %p357 = scmp.lt.s32.totalorder %s18, 4
    // Predicated region
    $region29: #{_lambda_.4} parent=5 // pred_check
      %p358 = pneg %p357
    $region30: #{_lambda_.4} parent=5 // pred_check_branch
      %360 = sbr.rel (%p358) target = $region32
    $region31: #{_lambda_.4} parent=5 // pred_region
      // Predicated region
      $region33: #{_lambda_.4} parent=31 // pred_check
        %p361 = pneg %p52
      $region34: #{_lambda_.4} parent=31 // pred_check_branch
        %363 = sbr.rel (%p361) target = $region36
      $region35: #{_lambda_.4} parent=31 // pred_region
        %p364 = scmp.lt.s32.totalorder %s25, 1
        %s365 = scalar_select %p364, %s25, 1
        %p366 = scmp.lt.s32.totalorder %s26, 1
        %s367 = scalar_select %p366, %s26, 1
        %s368 = smul.addr %s367, 8
        %s369 = smul.addr %s365, 16
        %s370 = sadd.s32 %s368, %s369
        %s371 = smul.addr %s370, 8
        %s372 = scalar_lea.vmem %s0, %s371
      $region36: #{_lambda_.4} parent=31 // pred_fallthru
        _
      // Predicated region
      $region37: #{_lambda_.4} parent=31 // pred_check
        %p373 = pneg %p78
      $region38: #{_lambda_.4} parent=31 // pred_check_branch
        %375 = sbr.rel (%p373) target = $region40
      $region39: #{_lambda_.4} parent=31 // pred_region
        %p376 = scmp.lt.s32.totalorder %s26, 1
        %s377 = scalar_select %p376, %s26, 1
        %s378 = smul.addr %s377, 8
        %s379 = scalar_lea.vmem %s1, %s378
      $region40: #{_lambda_.4} parent=31 // pred_fallthru
        _
      // Predicated region
      $region41: #{_lambda_.4} parent=31 // pred_check
        %p380 = pneg %p106
      $region42: #{_lambda_.4} parent=31 // pred_check_branch
        %382 = sbr.rel (%p380) target = $region44
      $region43: #{_lambda_.4} parent=31 // pred_region
        %p383 = scmp.lt.s32.totalorder %s25, 1
        %s384 = scalar_select %p383, %s25, 1
        %p385 = scmp.lt.s32.totalorder %s26, 1
        %s386 = scalar_select %p385, %s26, 1
        %s387 = smul.addr %s384, 2
        %s388 = sadd.s32 %s386, %s387
        %s389 = smul.addr %s388, 8
        %s390 = scalar_lea.vmem %s2, %s389
      $region44: #{_lambda_.4} parent=31 // pred_fallthru
        _
      // Predicated region
      $region45: #{_lambda_.4} parent=31 // pred_check
        %p391 = pneg %p132
      $region46: #{_lambda_.4} parent=31 // pred_check_branch
        %393 = sbr.rel (%p391) target = $region48
      $region47: #{_lambda_.4} parent=31 // pred_region
        %p394 = scmp.lt.s32.totalorder %s25, 1
        %s395 = scalar_select %p394, %s25, 1
        %s396 = smul.addr %s395, 4
        %s397 = smul.addr %s396, 8
        %s398 = scalar_lea.vmem %s3, %s397
      $region48: #{_lambda_.4} parent=31 // pred_fallthru
        _
      // Predicated region
      $region49: #{_lambda_.4} parent=31 // pred_check
        %p399 = pneg %p158
      $region50: #{_lambda_.4} parent=31 // pred_check_branch
        %401 = sbr.rel (%p399) target = $region52
      $region51: #{_lambda_.4} parent=31 // pred_region
        %p402 = scmp.lt.s32.totalorder %s25, 1
        %s403 = scalar_select %p402, %s25, 1
        %s404 = smul.addr %s403, 2
        %s405 = smul.addr %s404, 8
        %s406 = scalar_lea.vmem %s4, %s405
      $region52: #{_lambda_.4} parent=31 // pred_fallthru
        _
      // Predicated region
      $region53: #{_lambda_.4} parent=31 // pred_check
        %p407 = pneg %p184
      $region54: #{_lambda_.4} parent=31 // pred_check_branch
        %409 = sbr.rel (%p407) target = $region56
      $region55: #{_lambda_.4} parent=31 // pred_region
        %p410 = scmp.lt.s32.totalorder %s25, 1
        %s411 = scalar_select %p410, %s25, 1
        %s412 = scalar_lea.vmem %s5, %s411
      $region56: #{_lambda_.4} parent=31 // pred_fallthru
        _
    $region32: #{_lambda_.4} parent=5 // pred_fallthru
      _
    %p413 = scmp.le.s32.totalorder 1, %s18
    %p414 = scmp.lt.s32.totalorder %s18, 5
    %p415 = pnand %p413, %p414
    %p416 = pneg %p415
    // Predicated region
    $region57: #{_lambda_.4} parent=5 // pred_check
      _
    $region58: #{_lambda_.4} parent=5 // pred_check_branch
      %418 = sbr.rel (%p415) target = $region60
    $region59: #{_lambda_.4} parent=5 // pred_region
      %s419 = ssub.s32 %s18, 1
      %p420 = scmp.lt.s32.totalorder %s27, 1
      %s421 = scalar_select %p420, %s27, 1
      %p422 = scmp.lt.s32.totalorder %s28, 1
      %s423 = scalar_select %p422, %s28, 1
      %s424 = smul.addr %s423, 8
      %s425 = smul.addr %s421, 16
      %s426 = sadd.s32 %s424, %s425
      %s427 = smul.addr %s426, 8
      %s428 = scalar_lea.vmem %s0, %s427
      %p429 = pneg %p58
      %p430 = pneg %p55
      %p431 = scmp.lt.s32.totalorder %s28, 1
      %s432 = scalar_select %p431, %s28, 1
      %s433 = smul.addr %s432, 8
      %s434 = scalar_lea.vmem %s1, %s433
      %p435 = pneg %p84
      %p436 = pneg %p81
      %p437 = scmp.lt.s32.totalorder %s27, 1
      %s438 = scalar_select %p437, %s27, 1
      %p439 = scmp.lt.s32.totalorder %s28, 1
      %s440 = scalar_select %p439, %s28, 1
      %s441 = smul.addr %s438, 2
      %s442 = sadd.s32 %s440, %s441
      %s443 = smul.addr %s442, 8
      %s444 = scalar_lea.vmem %s2, %s443
      %p445 = pneg %p112
      %p446 = pneg %p109
      %p447 = scmp.lt.s32.totalorder %s27, 1
      %s448 = scalar_select %p447, %s27, 1
      %s449 = smul.addr %s448, 4
      %s450 = smul.addr %s449, 8
      %s451 = scalar_lea.vmem %s3, %s450
      %p452 = pneg %p138
      %p453 = pneg %p135
      %p454 = scmp.lt.s32.totalorder %s27, 1
      %s455 = scalar_select %p454, %s27, 1
      %s456 = smul.addr %s455, 2
      %s457 = smul.addr %s456, 8
      %s458 = scalar_lea.vmem %s4, %s457
      %p459 = pneg %p164
      %p460 = pneg %p161
      %p461 = scmp.lt.s32.totalorder %s27, 1
      %s462 = scalar_select %p461, %s27, 1
      %s463 = scalar_lea.vmem %s5, %s462
      %p464 = pneg %p190
      %p465 = pneg %p187
      %p466 = pneg %p211
      %p467 = pneg %p208
      %p468 = pneg %p232
      %p469 = pneg %p229
      %p470 = pneg %p253
      %p471 = pneg %p250
      %p472 = pneg %p274
      %p473 = pneg %p271
      %p474 = pneg %p302
      %p475 = pneg %p299
      %p476 = scmp.lt.s32.totalorder %s27, 1
      %s477 = scalar_select %p476, %s27, 1
      %p478 = scmp.lt.s32.totalorder %s28, 1
      %s479 = scalar_select %p478, %s28, 1
      %s480 = smul.addr %s479, 8
      %s481 = smul.addr %s477, 16
      %s482 = sadd.s32 %s480, %s481
      %s483 = smul.addr %s482, 8
      %s484 = scalar_lea.vmem %s10, %s483
      %p485 = pneg %p330
      %p486 = pneg %p327
      %p487 = scmp.lt.s32.totalorder %s27, 1
      %s488 = scalar_select %p487, %s27, 1
      %p489 = scmp.lt.s32.totalorder %s28, 1
      %s490 = scalar_select %p489, %s28, 1
      %s491 = smul.addr %s488, 2
      %s492 = sadd.s32 %s490, %s491
      %s493 = smul.addr %s492, 8
      %s494 = scalar_lea.vmem %s11, %s493
      %p495 = scmp.lt.s32.totalorder %s27, 1
      %s496 = scalar_select %p495, %s27, 1
      %p497 = scmp.lt.s32.totalorder %s28, 1
      %s498 = scalar_select %p497, %s28, 1
      %s499 = smul.addr %s498, 8
      %s500 = smul.addr %s496, 16
      %s501 = sadd.s32 %s499, %s500
      %s502 = smul.addr %s501, 8
      %s503 = scalar_lea.vmem %s0, %s502
      %p504 = scmp.lt.s32.totalorder %s28, 1
      %s505 = scalar_select %p504, %s28, 1
      %s506 = smul.addr %s505, 8
      %s507 = scalar_lea.vmem %s1, %s506
      %p508 = scmp.lt.s32.totalorder %s27, 1
      %s509 = scalar_select %p508, %s27, 1
      %p510 = scmp.lt.s32.totalorder %s28, 1
      %s511 = scalar_select %p510, %s28, 1
      %s512 = smul.addr %s509, 2
      %s513 = sadd.s32 %s511, %s512
      %s514 = smul.addr %s513, 8
      %s515 = scalar_lea.vmem %s2, %s514
      %p516 = scmp.lt.s32.totalorder %s27, 1
      %s517 = scalar_select %p516, %s27, 1
      %s518 = smul.addr %s517, 4
      %s519 = smul.addr %s518, 8
      %s520 = scalar_lea.vmem %s3, %s519
      %p521 = scmp.lt.s32.totalorder %s27, 1
      %s522 = scalar_select %p521, %s27, 1
      %s523 = smul.addr %s522, 2
      %s524 = smul.addr %s523, 8
      %s525 = scalar_lea.vmem %s4, %s524
      %p526 = scmp.lt.s32.totalorder %s27, 1
      %s527 = scalar_select %p526, %s27, 1
      %s528 = scalar_lea.vmem %s5, %s527
      %p529 = scmp.lt.s32.totalorder %s27, 1
      %s530 = scalar_select %p529, %s27, 1
      %p531 = scmp.lt.s32.totalorder %s28, 1
      %s532 = scalar_select %p531, %s28, 1
      %s533 = smul.addr %s532, 8
      %s534 = smul.addr %s530, 16
      %s535 = sadd.s32 %s533, %s534
      %s536 = smul.addr %s535, 8
      %s537 = scalar_lea.vmem %s10, %s536
      %p538 = scmp.lt.s32.totalorder %s27, 1
      %s539 = scalar_select %p538, %s27, 1
      %p540 = scmp.lt.s32.totalorder %s28, 1
      %s541 = scalar_select %p540, %s28, 1
      %s542 = smul.addr %s539, 2
      %s543 = sadd.s32 %s541, %s542
      %s544 = smul.addr %s543, 8
      %s545 = scalar_lea.vmem %s11, %s544
      %v546 = vld [vmem:[%s503] sm:$0xff]
      %v547 = vld [vmem:[%s503 + $0x8] sm:$0xff]
      %v548 = vld [vmem:[%s503 + $0x10] sm:$0xff]
      %v549 = vld [vmem:[%s503 + $0x18] sm:$0xff]
      %v550 = vld [vmem:[%s503 + $0x20] sm:$0xff]
      %v551 = vld [vmem:[%s503 + $0x28] sm:$0xff]
      %v552 = vld [vmem:[%s503 + $0x30] sm:$0xff]
      %v553 = vld [vmem:[%s503 + $0x38] sm:$0xff]
      %v554 = vld [vmem:[%s6] sm:$0xff]
      %v555 = vld [vmem:[%s9] sm:$0x1]
      %v556 = vld [vmem:[%s507] sm:$0xff]
      %v557 = vld [vmem:[%s520] sm:$0xff]
      %v558 = vld [vmem:[%s520 + $0x8] sm:$0xff]
      %v559 = vld [vmem:[%s520 + $0x10] sm:$0xff]
      %v560 = vld [vmem:[%s520 + $0x18] sm:$0xff]
      %v561 = vld [vmem:[%s515] sm:$0xff]
      %v562 = vld [vmem:[%s525] sm:$0xff]
      %v563 = vld [vmem:[%s525 + $0x8] sm:$0xff]
      %vm564 = vcmask 130048
      %v566 = vsel %vm564, %v561, 0
      %568 = vmatprep.subr.mxu0 0.0
      %569 = vmatpush1.msra.mxu0 %v562
      %570 = vmatprep.subr.mxu0 0.0
      %571 = vmatpush1.msra.mxu0 %v563
      %572 = vmatprep.subr.mxu0 0.0
      %573 = vmatpush1.msra.mxu0 0.0
      %574 = vmatprep.subr.mxu0 0.0
      %575 = vmatpush1.msra.mxu0 0.0
      %576 = vmatprep.subr.mxu0 0.0
      %577 = vmatpush1.msra.mxu0 0.0
      %578 = vmatprep.subr.mxu0 0.0
      %579 = vmatpush1.msra.mxu0 0.0
      %580 = vmatprep.subr.mxu0 0.0
      %581 = vmatpush1.msra.mxu0 0.0
      %582 = vmatprep.subr.mxu0 0.0
      %583 = vmatpush1.msra.mxu0 0.0
      %584 = vmatprep.subr.mxu0 0.0
      %585 = vmatpush1.msra.mxu0 0.0
      %586 = vmatprep.subr.mxu0 0.0
      %587 = vmatpush1.msra.mxu0 0.0
      %588 = vmatprep.subr.mxu0 0.0
      %589 = vmatpush1.msra.mxu0 0.0
      %590 = vmatprep.subr.mxu0 0.0
      %591 = vmatpush1.msra.mxu0 0.0
      %592 = vmatprep.subr.mxu0 0.0
      %593 = vmatpush1.msra.mxu0 0.0
      %594 = vmatprep.subr.mxu0 0.0
      %595 = vmatpush1.msra.mxu0 0.0
      %596 = vmatprep.subr.mxu0 0.0
      %597 = vmatpush1.msra.mxu0 0.0
      %598 = vmatprep.subr.mxu0 0.0
      %599 = vmatpush1.msra.mxu0 0.0
      %600 = vmatprep.subr.mxu0 0.0
      %601 = vmatpush1.msra.mxu0 0.0
      %602 = vmatprep.subr.mxu0 0.0
      %603 = vmatpush1.msra.mxu0 0.0
      %604 = vmatprep.subr.mxu0 0.0
      %605 = vmatpush1.msra.mxu0 0.0
      %606 = vmatprep.subr.mxu0 0.0
      %607 = vmatpush1.msra.mxu0 0.0
      %608 = vmatprep.subr.mxu0 0.0
      %609 = vmatpush1.msra.mxu0 0.0
      %610 = vmatprep.subr.mxu0 0.0
      %611 = vmatpush1.msra.mxu0 0.0
      %612 = vmatprep.subr.mxu0 0.0
      %613 = vmatpush1.msra.mxu0 0.0
      %614 = vmatprep.subr.mxu0 0.0
      %615 = vmatpush1.msra.mxu0 0.0
      %616 = vmatprep.subr.mxu0 0.0
      %617 = vmatpush1.msra.mxu0 0.0
      %618 = vmatprep.subr.mxu0 0.0
      %619 = vmatpush1.msra.mxu0 0.0
      %620 = vmatprep.subr.mxu0 0.0
      %621 = vmatpush1.msra.mxu0 0.0
      %622 = vmatprep.subr.mxu0 0.0
      %623 = vmatpush1.msra.mxu0 0.0
      %624 = vmatprep.subr.mxu0 0.0
      %625 = vmatpush1.msra.mxu0 0.0
      %626 = vmatprep.subr.mxu0 0.0
      %627 = vmatpush1.msra.mxu0 0.0
      %628 = vmatprep.subr.mxu0 0.0
      %629 = vmatpush1.msra.mxu0 0.0
      %630 = vmatprep.subr.mxu0 0.0
      %631 = vmatpush1.msra.mxu0 0.0
      %632 = vmatprep.mubr.f32.mxu0 0.0
      %633 = vmatmul.mubr.f32.gmra.mrb[0].mxu0 %v566
      %v634 = vpop.f32.mrb[0].mxu0
      %v635 = vadd.f32 0.0, %v634
      %v636 = vpop.f32.mrb[0].mxu0
      %637 = vdwg.mxu0
      %vm638 = vcmask 261120
      %v640 = vsel %vm638, %v556, 0
      %642 = vmatprep.subr.mxu0 0.0
      %643 = vmatpush1.msra.mxu0 %v557
      %644 = vmatprep.subr.mxu0 0.0
      %645 = vmatpush1.msra.mxu0 %v558
      %646 = vmatprep.subr.mxu0 0.0
      %647 = vmatpush1.msra.mxu0 %v559
      %648 = vmatprep.subr.mxu0 0.0
      %649 = vmatpush1.msra.mxu0 %v560
      %650 = vmatprep.subr.mxu0 0.0
      %651 = vmatpush1.msra.mxu0 0.0
      %652 = vmatprep.subr.mxu0 0.0
      %653 = vmatpush1.msra.mxu0 0.0
      %654 = vmatprep.subr.mxu0 0.0
      %655 = vmatpush1.msra.mxu0 0.0
      %656 = vmatprep.subr.mxu0 0.0
      %657 = vmatpush1.msra.mxu0 0.0
      %658 = vmatprep.subr.mxu0 0.0
      %659 = vmatpush1.msra.mxu0 0.0
      %660 = vmatprep.subr.mxu0 0.0
      %661 = vmatpush1.msra.mxu0 0.0
      %662 = vmatprep.subr.mxu0 0.0
      %663 = vmatpush1.msra.mxu0 0.0
      %664 = vmatprep.subr.mxu0 0.0
      %665 = vmatpush1.msra.mxu0 0.0
      %666 = vmatprep.subr.mxu0 0.0
      %667 = vmatpush1.msra.mxu0 0.0
      %668 = vmatprep.subr.mxu0 0.0
      %669 = vmatpush1.msra.mxu0 0.0
      %670 = vmatprep.subr.mxu0 0.0
      %671 = vmatpush1.msra.mxu0 0.0
      %672 = vmatprep.subr.mxu0 0.0
      %673 = vmatpush1.msra.mxu0 0.0
      %674 = vmatprep.subr.mxu0 0.0
      %675 = vmatpush1.msra.mxu0 0.0
      %676 = vmatprep.subr.mxu0 0.0
      %677 = vmatpush1.msra.mxu0 0.0
      %678 = vmatprep.subr.mxu0 0.0
      %679 = vmatpush1.msra.mxu0 0.0
      %680 = vmatprep.subr.mxu0 0.0
      %681 = vmatpush1.msra.mxu0 0.0
      %682 = vmatprep.subr.mxu0 0.0
      %683 = vmatpush1.msra.mxu0 0.0
      %684 = vmatprep.subr.mxu0 0.0
      %685 = vmatpush1.msra.mxu0 0.0
      %686 = vmatprep.subr.mxu0 0.0
      %687 = vmatpush1.msra.mxu0 0.0
      %688 = vmatprep.subr.mxu0 0.0
      %689 = vmatpush1.msra.mxu0 0.0
      %690 = vmatprep.subr.mxu0 0.0
      %691 = vmatpush1.msra.mxu0 0.0
      %692 = vmatprep.subr.mxu0 0.0
      %693 = vmatpush1.msra.mxu0 0.0
      %694 = vmatprep.subr.mxu0 0.0
      %695 = vmatpush1.msra.mxu0 0.0
      %696 = vmatprep.subr.mxu0 0.0
      %697 = vmatpush1.msra.mxu0 0.0
      %698 = vmatprep.subr.mxu0 0.0
      %699 = vmatpush1.msra.mxu0 0.0
      %700 = vmatprep.subr.mxu0 0.0
      %701 = vmatpush1.msra.mxu0 0.0
      %702 = vmatprep.subr.mxu0 0.0
      %703 = vmatpush1.msra.mxu0 0.0
      %704 = vmatprep.subr.mxu0 0.0
      %705 = vmatpush1.msra.mxu0 0.0
      %706 = vmatprep.mubr.f32.mxu0 0.0
      %707 = vmatmul.mubr.f32.gmra.mrb[0].mxu0 %v640
      %v708 = vpop.f32.mrb[0].mxu0
      %v709 = vadd.f32 %v635, %v708
      %v710 = vpop.f32.mrb[0].mxu0
      %711 = vdwg.mxu0
      %v712 = vadd.f32 %v546, %v547
      %v713 = vadd.f32 %v712, %v548
      %v714 = vadd.f32 %v713, %v549
      %v715 = vadd.f32 %v714, %v550
      %v716 = vadd.f32 %v715, %v551
      %v717 = vadd.f32 %v716, %v552
      %v718 = vadd.f32 %v717, %v553
      %v719 = vmul.f32 %v718, 0.125
      %vm720 = vcmask 64512
      %v722 = vsel %vm720, %v719, 0
      %724 = vmatprep.subr.mxu0 0.0
      %725 = vmatpush1.msra.mxu0 %v709
      %726 = vmatprep.subr.mxu0 0.0
      %727 = vmatpush1.msra.mxu0 0.0
      %728 = vmatprep.subr.mxu0 0.0
      %729 = vmatpush1.msra.mxu0 0.0
      %730 = vmatprep.subr.mxu0 0.0
      %731 = vmatpush1.msra.mxu0 0.0
      %732 = vmatprep.subr.mxu0 0.0
      %733 = vmatpush1.msra.mxu0 0.0
      %734 = vmatprep.subr.mxu0 0.0
      %735 = vmatpush1.msra.mxu0 0.0
      %736 = vmatprep.subr.mxu0 0.0
      %737 = vmatpush1.msra.mxu0 0.0
      %738 = vmatprep.subr.mxu0 0.0
      %739 = vmatpush1.msra.mxu0 0.0
      %740 = vmatprep.subr.mxu0 0.0
      %741 = vmatpush1.msra.mxu0 0.0
      %742 = vmatprep.subr.mxu0 0.0
      %743 = vmatpush1.msra.mxu0 0.0
      %744 = vmatprep.subr.mxu0 0.0
      %745 = vmatpush1.msra.mxu0 0.0
      %746 = vmatprep.subr.mxu0 0.0
      %747 = vmatpush1.msra.mxu0 0.0
      %748 = vmatprep.subr.mxu0 0.0
      %749 = vmatpush1.msra.mxu0 0.0
      %750 = vmatprep.subr.mxu0 0.0
      %751 = vmatpush1.msra.mxu0 0.0
      %752 = vmatprep.subr.mxu0 0.0
      %753 = vmatpush1.msra.mxu0 0.0
      %754 = vmatprep.subr.mxu0 0.0
      %755 = vmatpush1.msra.mxu0 0.0
      %756 = vmatprep.subr.mxu0 0.0
      %757 = vmatpush1.msra.mxu0 0.0
      %758 = vmatprep.subr.mxu0 0.0
      %759 = vmatpush1.msra.mxu0 0.0
      %760 = vmatprep.subr.mxu0 0.0
      %761 = vmatpush1.msra.mxu0 0.0
      %762 = vmatprep.subr.mxu0 0.0
      %763 = vmatpush1.msra.mxu0 0.0
      %764 = vmatprep.subr.mxu0 0.0
      %765 = vmatpush1.msra.mxu0 0.0
      %766 = vmatprep.subr.mxu0 0.0
      %767 = vmatpush1.msra.mxu0 0.0
      %768 = vmatprep.subr.mxu0 0.0
      %769 = vmatpush1.msra.mxu0 0.0
      %770 = vmatprep.subr.mxu0 0.0
      %771 = vmatpush1.msra.mxu0 0.0
      %772 = vmatprep.subr.mxu0 0.0
      %773 = vmatpush1.msra.mxu0 0.0
      %774 = vmatprep.subr.mxu0 0.0
      %775 = vmatpush1.msra.mxu0 0.0
      %776 = vmatprep.subr.mxu0 0.0
      %777 = vmatpush1.msra.mxu0 0.0
      %778 = vmatprep.subr.mxu0 0.0
      %779 = vmatpush1.msra.mxu0 0.0
      %780 = vmatprep.subr.mxu0 0.0
      %781 = vmatpush1.msra.mxu0 0.0
      %782 = vmatprep.subr.mxu0 0.0
      %783 = vmatpush1.msra.mxu0 0.0
      %784 = vmatprep.subr.mxu0 0.0
      %785 = vmatpush1.msra.mxu0 0.0
      %786 = vmatprep.subr.mxu0 0.0
      %787 = vmatpush1.msra.mxu0 0.0
      %788 = vmatprep.mubr.f32.mxu0 0.0
      %789 = vmatmul.mubr.f32.gmra.mrb[0].mxu0 %v722
      %v790 = vpop.f32.mrb[0].mxu0
      %v791 = vadd.f32 %v709, %v790
      %v792 = vpop.f32.mrb[0].mxu0
      %793 = vdwg.mxu0
      %v794 = vld [vmem:[%s528] sm:$0x1]
      %v795 = vmul.f32 %v794, 2.0
      %v797 = vlaneseq
      %v798 = vshrl.u32 %v797, 7
      %v799 = vsub.s32 0, %v798
      %v800 = vrot.slane %v795, %v799
      %v802 = vadd.f32 %v791, %v800
      %v803 = vmax.f32 %v802, 0.0
      %804 = vst.msk [vmem:[%s545] sm:$0xff] %vm564, %v803
      %v805 = vld [vmem:[%s7] sm:$0xff]
      %v807 = vsel %vm564, %v805, 0
      %v810 = vsel %vm564, %v803, 0
      %812 = vmatprep.subr.mxu0 0.0
      %813 = vmatpush1.xpose.msra.mxu0 %v810
      %814 = vmatprep.subr.mxu0 0.0
      %815 = vmatpush1.xpose.msra.mxu0 0.0
      %816 = vmatprep.subr.mxu0 0.0
      %817 = vmatpush1.xpose.msra.mxu0 0.0
      %818 = vmatprep.subr.mxu0 0.0
      %819 = vmatpush1.xpose.msra.mxu0 0.0
      %820 = vmatprep.subr.mxu0 0.0
      %821 = vmatpush1.xpose.msra.mxu0 0.0
      %822 = vmatprep.subr.mxu0 0.0
      %823 = vmatpush1.xpose.msra.mxu0 0.0
      %824 = vmatprep.subr.mxu0 0.0
      %825 = vmatpush1.xpose.msra.mxu0 0.0
      %826 = vmatprep.subr.mxu0 0.0
      %827 = vmatpush1.xpose.msra.mxu0 0.0
      %828 = vmatprep.subr.mxu0 0.0
      %829 = vmatpush1.xpose.msra.mxu0 0.0
      %830 = vmatprep.subr.mxu0 0.0
      %831 = vmatpush1.xpose.msra.mxu0 0.0
      %832 = vmatprep.subr.mxu0 0.0
      %833 = vmatpush1.xpose.msra.mxu0 0.0
      %834 = vmatprep.subr.mxu0 0.0
      %835 = vmatpush1.xpose.msra.mxu0 0.0
      %836 = vmatprep.subr.mxu0 0.0
      %837 = vmatpush1.xpose.msra.mxu0 0.0
      %838 = vmatprep.subr.mxu0 0.0
      %839 = vmatpush1.xpose.msra.mxu0 0.0
      %840 = vmatprep.subr.mxu0 0.0
      %841 = vmatpush1.xpose.msra.mxu0 0.0
      %842 = vmatprep.subr.mxu0 0.0
      %843 = vmatpush1.xpose.msra.mxu0 0.0
      %844 = vmatprep.subr.mxu0 0.0
      %845 = vmatpush1.xpose.msra.mxu0 0.0
      %846 = vmatprep.subr.mxu0 0.0
      %847 = vmatpush1.xpose.msra.mxu0 0.0
      %848 = vmatprep.subr.mxu0 0.0
      %849 = vmatpush1.xpose.msra.mxu0 0.0
      %850 = vmatprep.subr.mxu0 0.0
      %851 = vmatpush1.xpose.msra.mxu0 0.0
      %852 = vmatprep.subr.mxu0 0.0
      %853 = vmatpush1.xpose.msra.mxu0 0.0
      %854 = vmatprep.subr.mxu0 0.0
      %855 = vmatpush1.xpose.msra.mxu0 0.0
      %856 = vmatprep.subr.mxu0 0.0
      %857 = vmatpush1.xpose.msra.mxu0 0.0
      %858 = vmatprep.subr.mxu0 0.0
      %859 = vmatpush1.xpose.msra.mxu0 0.0
      %860 = vmatprep.subr.mxu0 0.0
      %861 = vmatpush1.xpose.msra.mxu0 0.0
      %862 = vmatprep.subr.mxu0 0.0
      %863 = vmatpush1.xpose.msra.mxu0 0.0
      %864 = vmatprep.subr.mxu0 0.0
      %865 = vmatpush1.xpose.msra.mxu0 0.0
      %866 = vmatprep.subr.mxu0 0.0
      %867 = vmatpush1.xpose.msra.mxu0 0.0
      %868 = vmatprep.subr.mxu0 0.0
      %869 = vmatpush1.xpose.msra.mxu0 0.0
      %870 = vmatprep.subr.mxu0 0.0
      %871 = vmatpush1.xpose.msra.mxu0 0.0
      %872 = vmatprep.subr.mxu0 0.0
      %873 = vmatpush1.xpose.msra.mxu0 0.0
      %874 = vmatprep.subr.mxu0 0.0
      %875 = vmatpush1.xpose.msra.mxu0 0.0
      %876 = vmatprep.mubr.f32.mxu0 0.0
      %877 = vmatmul.mubr.f32.gmra.mrb[0].mxu0 %v807
      %v878 = vpop.f32.mrb[0].mxu0
      %v879 = vadd.f32 0.0, %v878
      %v880 = vpop.f32.mrb[0].mxu0
      %881 = vdwg.mxu0
      %v882 = vld [vmem:[%s8] sm:$0xff]
      %v883 = vld [vmem:[%s8 + $0x8] sm:$0xff]
      %884 = vmatprep.subr.mxu0 0.0
      %885 = vmatpush1.msra.mxu0 %v882
      %886 = vmatprep.subr.mxu0 0.0
      %887 = vmatpush1.msra.mxu0 %v883
      %888 = vmatprep.subr.mxu0 0.0
      %889 = vmatpush1.msra.mxu0 0.0
      %890 = vmatprep.subr.mxu0 0.0
      %891 = vmatpush1.msra.mxu0 0.0
      %892 = vmatprep.subr.mxu0 0.0
      %893 = vmatpush1.msra.mxu0 0.0
      %894 = vmatprep.subr.mxu0 0.0
      %895 = vmatpush1.msra.mxu0 0.0
      %896 = vmatprep.subr.mxu0 0.0
      %897 = vmatpush1.msra.mxu0 0.0
      %898 = vmatprep.subr.mxu0 0.0
      %899 = vmatpush1.msra.mxu0 0.0
      %900 = vmatprep.subr.mxu0 0.0
      %901 = vmatpush1.msra.mxu0 0.0
      %902 = vmatprep.subr.mxu0 0.0
      %903 = vmatpush1.msra.mxu0 0.0
      %904 = vmatprep.subr.mxu0 0.0
      %905 = vmatpush1.msra.mxu0 0.0
      %906 = vmatprep.subr.mxu0 0.0
      %907 = vmatpush1.msra.mxu0 0.0
      %908 = vmatprep.subr.mxu0 0.0
      %909 = vmatpush1.msra.mxu0 0.0
      %910 = vmatprep.subr.mxu0 0.0
      %911 = vmatpush1.msra.mxu0 0.0
      %912 = vmatprep.subr.mxu0 0.0
      %913 = vmatpush1.msra.mxu0 0.0
      %914 = vmatprep.subr.mxu0 0.0
      %915 = vmatpush1.msra.mxu0 0.0
      %916 = vmatprep.subr.mxu0 0.0
      %917 = vmatpush1.msra.mxu0 0.0
      %918 = vmatprep.subr.mxu0 0.0
      %919 = vmatpush1.msra.mxu0 0.0
      %920 = vmatprep.subr.mxu0 0.0
      %921 = vmatpush1.msra.mxu0 0.0
      %922 = vmatprep.subr.mxu0 0.0
      %923 = vmatpush1.msra.mxu0 0.0
      %924 = vmatprep.subr.mxu0 0.0
      %925 = vmatpush1.msra.mxu0 0.0
      %926 = vmatprep.subr.mxu0 0.0
      %927 = vmatpush1.msra.mxu0 0.0
      %928 = vmatprep.subr.mxu0 0.0
      %929 = vmatpush1.msra.mxu0 0.0
      %930 = vmatprep.subr.mxu0 0.0
      %931 = vmatpush1.msra.mxu0 0.0
      %932 = vmatprep.subr.mxu0 0.0
      %933 = vmatpush1.msra.mxu0 0.0
      %934 = vmatprep.subr.mxu0 0.0
      %935 = vmatpush1.msra.mxu0 0.0
      %936 = vmatprep.subr.mxu0 0.0
      %937 = vmatpush1.msra.mxu0 0.0
      %938 = vmatprep.subr.mxu0 0.0
      %939 = vmatpush1.msra.mxu0 0.0
      %940 = vmatprep.subr.mxu0 0.0
      %941 = vmatpush1.msra.mxu0 0.0
      %942 = vmatprep.subr.mxu0 0.0
      %943 = vmatpush1.msra.mxu0 0.0
      %944 = vmatprep.subr.mxu0 0.0
      %945 = vmatpush1.msra.mxu0 0.0
      %946 = vmatprep.subr.mxu0 0.0
      %947 = vmatpush1.msra.mxu0 0.0
      %948 = vmatprep.mubr.f32.mxu0 0.0
      %949 = vmatmul.mubr.f32.gmra.mrb[0].mxu0 %v810
      %v950 = vpop.f32.mrb[0].mxu0
      %v951 = vadd.f32 0.0, %v950
      %v952 = vpop.f32.mrb[0].mxu0
      %953 = vdwg.mxu0
      %s955 = vtos %v554
      %v956 = vstv %s955
      %v958 = vmul.f32 %v956, %v546
      %v959 = vrot.slane %v554, 1
      %s960 = vtos %v959
      %v961 = vstv %s960
      %v963 = vmul.f32 %v961, %v547
      %v964 = vadd.f32 %v958, %v963
      %v965 = vrot.slane %v554, 2
      %s966 = vtos %v965
      %v967 = vstv %s966
      %v969 = vmul.f32 %v967, %v548
      %v970 = vadd.f32 %v964, %v969
      %v971 = vrot.slane %v554, 3
      %s972 = vtos %v971
      %v973 = vstv %s972
      %v975 = vmul.f32 %v973, %v549
      %v976 = vadd.f32 %v970, %v975
      %v977 = vrot.slane %v554, 4
      %s978 = vtos %v977
      %v979 = vstv %s978
      %v981 = vmul.f32 %v979, %v550
      %v982 = vadd.f32 %v976, %v981
      %v983 = vrot.slane %v554, 5
      %s984 = vtos %v983
      %v985 = vstv %s984
      %v987 = vmul.f32 %v985, %v551
      %v988 = vadd.f32 %v982, %v987
      %v989 = vrot.slane %v554, 6
      %s990 = vtos %v989
      %v991 = vstv %s990
      %v993 = vmul.f32 %v991, %v552
      %v994 = vadd.f32 %v988, %v993
      %v995 = vrot.slane %v554, 7
      %s996 = vtos %v995
      %v997 = vstv %s996
      %v999 = vmul.f32 %v997, %v553
      %v1000 = vadd.f32 %v994, %v999
      %v1001 = vlaneseq
      %v1002 = vshrl.u32 %v1001, 7
      %v1003 = vsub.s32 0, %v1002
      %v1004 = vrot.slane %v879, %v1003
      %v1005 = vadd.f32 %v1000, %v1004
      %1007 = vset.pattern.permute.xlu0 0
      %1008 = vperm.xlu0 %1007, %v951
      %v1009 = vpop.permute.xlu0 %1008
      %v1011 = vadd.f32 %v1005, %v1009
      %v1013 = vlaneseq
      %v1014 = vshrl.u32 %v1013, 7
      %v1015 = vsub.s32 0, %v1014
      %v1016 = vrot.slane %v555, %v1015
      %1017 = vset.pattern.permute.xlu0 0
      %1018 = vperm.xlu0 %1017, %v1016
      %v1019 = vpop.permute.xlu0 %1018
      %v1021 = vadd.f32 %v1011, %v1019
      %1022 = vst.msk [vmem:[%s537] sm:$0xff] %vm720, %v1021
      %1023 = vrot.lane.b32.xlu0 %v554, 127
      %v1024 = vpop.permute.xlu0 %1023
      %s1025 = vtos %v1024
      %v1026 = vstv %s1025
      %v1028 = vmul.f32 %v1026, %v546
      %1029 = vrot.lane.b32.xlu0 %v959, 127
      %v1030 = vpop.permute.xlu0 %1029
      %s1031 = vtos %v1030
      %v1032 = vstv %s1031
      %v1034 = vmul.f32 %v1032, %v547
      %v1035 = vadd.f32 %v1028, %v1034
      %1036 = vrot.lane.b32.xlu0 %v965, 127
      %v1037 = vpop.permute.xlu0 %1036
      %s1038 = vtos %v1037
      %v1039 = vstv %s1038
      %v1041 = vmul.f32 %v1039, %v548
      %v1042 = vadd.f32 %v1035, %v1041
      %1043 = vrot.lane.b32.xlu0 %v971, 127
      %v1044 = vpop.permute.xlu0 %1043
      %s1045 = vtos %v1044
      %v1046 = vstv %s1045
      %v1048 = vmul.f32 %v1046, %v549
      %v1049 = vadd.f32 %v1042, %v1048
      %1050 = vrot.lane.b32.xlu0 %v977, 127
      %v1051 = vpop.permute.xlu0 %1050
      %s1052 = vtos %v1051
      %v1053 = vstv %s1052
      %v1055 = vmul.f32 %v1053, %v550
      %v1056 = vadd.f32 %v1049, %v1055
      %1057 = vrot.lane.b32.xlu0 %v983, 127
      %v1058 = vpop.permute.xlu0 %1057
      %s1059 = vtos %v1058
      %v1060 = vstv %s1059
      %v1062 = vmul.f32 %v1060, %v551
      %v1063 = vadd.f32 %v1056, %v1062
      %1064 = vrot.lane.b32.xlu0 %v989, 127
      %v1065 = vpop.permute.xlu0 %1064
      %s1066 = vtos %v1065
      %v1067 = vstv %s1066
      %v1069 = vmul.f32 %v1067, %v552
      %v1070 = vadd.f32 %v1063, %v1069
      %1071 = vrot.lane.b32.xlu0 %v995, 127
      %v1072 = vpop.permute.xlu0 %1071
      %s1073 = vtos %v1072
      %v1074 = vstv %s1073
      %v1076 = vmul.f32 %v1074, %v553
      %v1077 = vadd.f32 %v1070, %v1076
      %v1078 = vlaneseq
      %v1079 = vshrl.u32 %v1078, 7
      %v1080 = vsub.s32 1, %v1079
      %v1081 = vrot.slane %v879, %v1080
      %v1082 = vadd.f32 %v1077, %v1081
      %1083 = vset.pattern.permute.xlu0 1
      %1084 = vperm.xlu0 %1083, %v951
      %v1085 = vpop.permute.xlu0 %1084
      %v1087 = vadd.f32 %v1082, %v1085
      %1088 = vset.pattern.permute.xlu0 1
      %1089 = vperm.xlu0 %1088, %v1016
      %v1090 = vpop.permute.xlu0 %1089
      %v1092 = vadd.f32 %v1087, %v1090
      %s1093 = scalar_lea.vmem %s537, 8
      %1094 = vst.msk [vmem:[%s1093] sm:$0xff] %vm720, %v1092
      %1095 = vrot.lane.b32.xlu0 %v554, 126
      %v1096 = vpop.permute.xlu0 %1095
      %s1097 = vtos %v1096
      %v1098 = vstv %s1097
      %v1100 = vmul.f32 %v1098, %v546
      %1101 = vrot.lane.b32.xlu0 %v959, 126
      %v1102 = vpop.permute.xlu0 %1101
      %s1103 = vtos %v1102
      %v1104 = vstv %s1103
      %v1106 = vmul.f32 %v1104, %v547
      %v1107 = vadd.f32 %v1100, %v1106
      %1108 = vrot.lane.b32.xlu0 %v965, 126
      %v1109 = vpop.permute.xlu0 %1108
      %s1110 = vtos %v1109
      %v1111 = vstv %s1110
      %v1113 = vmul.f32 %v1111, %v548
      %v1114 = vadd.f32 %v1107, %v1113
      %1115 = vrot.lane.b32.xlu0 %v971, 126
      %v1116 = vpop.permute.xlu0 %1115
      %s1117 = vtos %v1116
      %v1118 = vstv %s1117
      %v1120 = vmul.f32 %v1118, %v549
      %v1121 = vadd.f32 %v1114, %v1120
      %1122 = vrot.lane.b32.xlu0 %v977, 126
      %v1123 = vpop.permute.xlu0 %1122
      %s1124 = vtos %v1123
      %v1125 = vstv %s1124
      %v1127 = vmul.f32 %v1125, %v550
      %v1128 = vadd.f32 %v1121, %v1127
      %1129 = vrot.lane.b32.xlu0 %v983, 126
      %v1130 = vpop.permute.xlu0 %1129
      %s1131 = vtos %v1130
      %v1132 = vstv %s1131
      %v1134 = vmul.f32 %v1132, %v551
      %v1135 = vadd.f32 %v1128, %v1134
      %1136 = vrot.lane.b32.xlu0 %v989, 126
      %v1137 = vpop.permute.xlu0 %1136
      %s1138 = vtos %v1137
      %v1139 = vstv %s1138
      %v1141 = vmul.f32 %v1139, %v552
      %v1142 = vadd.f32 %v1135, %v1141
      %1143 = vrot.lane.b32.xlu0 %v995, 126
      %v1144 = vpop.permute.xlu0 %1143
      %s1145 = vtos %v1144
      %v1146 = vstv %s1145
      %v1148 = vmul.f32 %v1146, %v553
      %v1149 = vadd.f32 %v1142, %v1148
      %v1150 = vlaneseq
      %v1151 = vshrl.u32 %v1150, 7
      %v1152 = vsub.s32 2, %v1151
      %v1153 = vrot.slane %v879, %v1152
      %v1154 = vadd.f32 %v1149, %v1153
      %1155 = vset.pattern.permute.xlu0 2
      %1156 = vperm.xlu0 %1155, %v951
      %v1157 = vpop.permute.xlu0 %1156
      %v1159 = vadd.f32 %v1154, %v1157
      %1160 = vset.pattern.permute.xlu0 2
      %1161 = vperm.xlu0 %1160, %v1016
      %v1162 = vpop.permute.xlu0 %1161
      %v1164 = vadd.f32 %v1159, %v1162
      %s1165 = scalar_lea.vmem %s537, 16
      %1166 = vst.msk [vmem:[%s1165] sm:$0xff] %vm720, %v1164
      %1167 = vrot.lane.b32.xlu0 %v554, 125
      %v1168 = vpop.permute.xlu0 %1167
      %s1169 = vtos %v1168
      %v1170 = vstv %s1169
      %v1172 = vmul.f32 %v1170, %v546
      %1173 = vrot.lane.b32.xlu0 %v959, 125
      %v1174 = vpop.permute.xlu0 %1173
      %s1175 = vtos %v1174
      %v1176 = vstv %s1175
      %v1178 = vmul.f32 %v1176, %v547
      %v1179 = vadd.f32 %v1172, %v1178
      %1180 = vrot.lane.b32.xlu0 %v965, 125
      %v1181 = vpop.permute.xlu0 %1180
      %s1182 = vtos %v1181
      %v1183 = vstv %s1182
      %v1185 = vmul.f32 %v1183, %v548
      %v1186 = vadd.f32 %v1179, %v1185
      %1187 = vrot.lane.b32.xlu0 %v971, 125
      %v1188 = vpop.permute.xlu0 %1187
      %s1189 = vtos %v1188
      %v1190 = vstv %s1189
      %v1192 = vmul.f32 %v1190, %v549
      %v1193 = vadd.f32 %v1186, %v1192
      %1194 = vrot.lane.b32.xlu0 %v977, 125
      %v1195 = vpop.permute.xlu0 %1194
      %s1196 = vtos %v1195
      %v1197 = vstv %s1196
      %v1199 = vmul.f32 %v1197, %v550
      %v1200 = vadd.f32 %v1193, %v1199
      %1201 = vrot.lane.b32.xlu0 %v983, 125
      %v1202 = vpop.permute.xlu0 %1201
      %s1203 = vtos %v1202
      %v1204 = vstv %s1203
      %v1206 = vmul.f32 %v1204, %v551
      %v1207 = vadd.f32 %v1200, %v1206
      %1208 = vrot.lane.b32.xlu0 %v989, 125
      %v1209 = vpop.permute.xlu0 %1208
      %s1210 = vtos %v1209
      %v1211 = vstv %s1210
      %v1213 = vmul.f32 %v1211, %v552
      %v1214 = vadd.f32 %v1207, %v1213
      %1215 = vrot.lane.b32.xlu0 %v995, 125
      %v1216 = vpop.permute.xlu0 %1215
      %s1217 = vtos %v1216
      %v1218 = vstv %s1217
      %v1220 = vmul.f32 %v1218, %v553
      %v1221 = vadd.f32 %v1214, %v1220
      %v1222 = vlaneseq
      %v1223 = vshrl.u32 %v1222, 7
      %v1224 = vsub.s32 3, %v1223
      %v1225 = vrot.slane %v879, %v1224
      %v1226 = vadd.f32 %v1221, %v1225
      %1227 = vset.pattern.permute.xlu0 3
      %1228 = vperm.xlu0 %1227, %v951
      %v1229 = vpop.permute.xlu0 %1228
      %v1231 = vadd.f32 %v1226, %v1229
      %1232 = vset.pattern.permute.xlu0 3
      %1233 = vperm.xlu0 %1232, %v1016
      %v1234 = vpop.permute.xlu0 %1233
      %v1236 = vadd.f32 %v1231, %v1234
      %s1237 = scalar_lea.vmem %s537, 24
      %1238 = vst.msk [vmem:[%s1237] sm:$0xff] %vm720, %v1236
      %1239 = vrot.lane.b32.xlu0 %v554, 124
      %v1240 = vpop.permute.xlu0 %1239
      %s1241 = vtos %v1240
      %v1242 = vstv %s1241
      %v1244 = vmul.f32 %v1242, %v546
      %1245 = vrot.lane.b32.xlu0 %v959, 124
      %v1246 = vpop.permute.xlu0 %1245
      %s1247 = vtos %v1246
      %v1248 = vstv %s1247
      %v1250 = vmul.f32 %v1248, %v547
      %v1251 = vadd.f32 %v1244, %v1250
      %1252 = vrot.lane.b32.xlu0 %v965, 124
      %v1253 = vpop.permute.xlu0 %1252
      %s1254 = vtos %v1253
      %v1255 = vstv %s1254
      %v1257 = vmul.f32 %v1255, %v548
      %v1258 = vadd.f32 %v1251, %v1257
      %1259 = vrot.lane.b32.xlu0 %v971, 124
      %v1260 = vpop.permute.xlu0 %1259
      %s1261 = vtos %v1260
      %v1262 = vstv %s1261
      %v1264 = vmul.f32 %v1262, %v549
      %v1265 = vadd.f32 %v1258, %v1264
      %1266 = vrot.lane.b32.xlu0 %v977, 124
      %v1267 = vpop.permute.xlu0 %1266
      %s1268 = vtos %v1267
      %v1269 = vstv %s1268
      %v1271 = vmul.f32 %v1269, %v550
      %v1272 = vadd.f32 %v1265, %v1271
      %1273 = vrot.lane.b32.xlu0 %v983, 124
      %v1274 = vpop.permute.xlu0 %1273
      %s1275 = vtos %v1274
      %v1276 = vstv %s1275
      %v1278 = vmul.f32 %v1276, %v551
      %v1279 = vadd.f32 %v1272, %v1278
      %1280 = vrot.lane.b32.xlu0 %v989, 124
      %v1281 = vpop.permute.xlu0 %1280
      %s1282 = vtos %v1281
      %v1283 = vstv %s1282
      %v1285 = vmul.f32 %v1283, %v552
      %v1286 = vadd.f32 %v1279, %v1285
      %1287 = vrot.lane.b32.xlu0 %v995, 124
      %v1288 = vpop.permute.xlu0 %1287
      %s1289 = vtos %v1288
      %v1290 = vstv %s1289
      %v1292 = vmul.f32 %v1290, %v553
      %v1293 = vadd.f32 %v1286, %v1292
      %v1294 = vlaneseq
      %v1295 = vshrl.u32 %v1294, 7
      %v1296 = vsub.s32 4, %v1295
      %v1297 = vrot.slane %v879, %v1296
      %v1298 = vadd.f32 %v1293, %v1297
      %1299 = vset.pattern.permute.xlu0 4
      %1300 = vperm.xlu0 %1299, %v951
      %v1301 = vpop.permute.xlu0 %1300
      %v1303 = vadd.f32 %v1298, %v1301
      %1304 = vset.pattern.permute.xlu0 4
      %1305 = vperm.xlu0 %1304, %v1016
      %v1306 = vpop.permute.xlu0 %1305
      %v1308 = vadd.f32 %v1303, %v1306
      %s1309 = scalar_lea.vmem %s537, 32
      %1310 = vst.msk [vmem:[%s1309] sm:$0xff] %vm720, %v1308
      %1311 = vrot.lane.b32.xlu0 %v554, 123
      %v1312 = vpop.permute.xlu0 %1311
      %s1313 = vtos %v1312
      %v1314 = vstv %s1313
      %v1316 = vmul.f32 %v1314, %v546
      %1317 = vrot.lane.b32.xlu0 %v959, 123
      %v1318 = vpop.permute.xlu0 %1317
      %s1319 = vtos %v1318
      %v1320 = vstv %s1319
      %v1322 = vmul.f32 %v1320, %v547
      %v1323 = vadd.f32 %v1316, %v1322
      %1324 = vrot.lane.b32.xlu0 %v965, 123
      %v1325 = vpop.permute.xlu0 %1324
      %s1326 = vtos %v1325
      %v1327 = vstv %s1326
      %v1329 = vmul.f32 %v1327, %v548
      %v1330 = vadd.f32 %v1323, %v1329
      %1331 = vrot.lane.b32.xlu0 %v971, 123
      %v1332 = vpop.permute.xlu0 %1331
      %s1333 = vtos %v1332
      %v1334 = vstv %s1333
      %v1336 = vmul.f32 %v1334, %v549
      %v1337 = vadd.f32 %v1330, %v1336
      %1338 = vrot.lane.b32.xlu0 %v977, 123
      %v1339 = vpop.permute.xlu0 %1338
      %s1340 = vtos %v1339
      %v1341 = vstv %s1340
      %v1343 = vmul.f32 %v1341, %v550
      %v1344 = vadd.f32 %v1337, %v1343
      %1345 = vrot.lane.b32.xlu0 %v983, 123
      %v1346 = vpop.permute.xlu0 %1345
      %s1347 = vtos %v1346
      %v1348 = vstv %s1347
      %v1350 = vmul.f32 %v1348, %v551
      %v1351 = vadd.f32 %v1344, %v1350
      %1352 = vrot.lane.b32.xlu0 %v989, 123
      %v1353 = vpop.permute.xlu0 %1352
      %s1354 = vtos %v1353
      %v1355 = vstv %s1354
      %v1357 = vmul.f32 %v1355, %v552
      %v1358 = vadd.f32 %v1351, %v1357
      %1359 = vrot.lane.b32.xlu0 %v995, 123
      %v1360 = vpop.permute.xlu0 %1359
      %s1361 = vtos %v1360
      %v1362 = vstv %s1361
      %v1364 = vmul.f32 %v1362, %v553
      %v1365 = vadd.f32 %v1358, %v1364
      %v1366 = vlaneseq
      %v1367 = vshrl.u32 %v1366, 7
      %v1368 = vsub.s32 5, %v1367
      %v1369 = vrot.slane %v879, %v1368
      %v1370 = vadd.f32 %v1365, %v1369
      %1371 = vset.pattern.permute.xlu0 5
      %1372 = vperm.xlu0 %1371, %v951
      %v1373 = vpop.permute.xlu0 %1372
      %v1375 = vadd.f32 %v1370, %v1373
      %1376 = vset.pattern.permute.xlu0 5
      %1377 = vperm.xlu0 %1376, %v1016
      %v1378 = vpop.permute.xlu0 %1377
      %v1380 = vadd.f32 %v1375, %v1378
      %s1381 = scalar_lea.vmem %s537, 40
      %1382 = vst.msk [vmem:[%s1381] sm:$0xff] %vm720, %v1380
      %1383 = vrot.lane.b32.xlu0 %v554, 122
      %v1384 = vpop.permute.xlu0 %1383
      %s1385 = vtos %v1384
      %v1386 = vstv %s1385
      %v1388 = vmul.f32 %v1386, %v546
      %1389 = vrot.lane.b32.xlu0 %v959, 122
      %v1390 = vpop.permute.xlu0 %1389
      %s1391 = vtos %v1390
      %v1392 = vstv %s1391
      %v1394 = vmul.f32 %v1392, %v547
      %v1395 = vadd.f32 %v1388, %v1394
      %1396 = vrot.lane.b32.xlu0 %v965, 122
      %v1397 = vpop.permute.xlu0 %1396
      %s1398 = vtos %v1397
      %v1399 = vstv %s1398
      %v1401 = vmul.f32 %v1399, %v548
      %v1402 = vadd.f32 %v1395, %v1401
      %1403 = vrot.lane.b32.xlu0 %v971, 122
      %v1404 = vpop.permute.xlu0 %1403
      %s1405 = vtos %v1404
      %v1406 = vstv %s1405
      %v1408 = vmul.f32 %v1406, %v549
      %v1409 = vadd.f32 %v1402, %v1408
      %1410 = vrot.lane.b32.xlu0 %v977, 122
      %v1411 = vpop.permute.xlu0 %1410
      %s1412 = vtos %v1411
      %v1413 = vstv %s1412
      %v1415 = vmul.f32 %v1413, %v550
      %v1416 = vadd.f32 %v1409, %v1415
      %1417 = vrot.lane.b32.xlu0 %v983, 122
      %v1418 = vpop.permute.xlu0 %1417
      %s1419 = vtos %v1418
      %v1420 = vstv %s1419
      %v1422 = vmul.f32 %v1420, %v551
      %v1423 = vadd.f32 %v1416, %v1422
      %1424 = vrot.lane.b32.xlu0 %v989, 122
      %v1425 = vpop.permute.xlu0 %1424
      %s1426 = vtos %v1425
      %v1427 = vstv %s1426
      %v1429 = vmul.f32 %v1427, %v552
      %v1430 = vadd.f32 %v1423, %v1429
      %1431 = vrot.lane.b32.xlu0 %v995, 122
      %v1432 = vpop.permute.xlu0 %1431
      %s1433 = vtos %v1432
      %v1434 = vstv %s1433
      %v1436 = vmul.f32 %v1434, %v553
      %v1437 = vadd.f32 %v1430, %v1436
      %v1438 = vlaneseq
      %v1439 = vshrl.u32 %v1438, 7
      %v1440 = vsub.s32 6, %v1439
      %v1441 = vrot.slane %v879, %v1440
      %v1442 = vadd.f32 %v1437, %v1441
      %1443 = vset.pattern.permute.xlu0 6
      %1444 = vperm.xlu0 %1443, %v951
      %v1445 = vpop.permute.xlu0 %1444
      %v1447 = vadd.f32 %v1442, %v1445
      %1448 = vset.pattern.permute.xlu0 6
      %1449 = vperm.xlu0 %1448, %v1016
      %v1450 = vpop.permute.xlu0 %1449
      %v1452 = vadd.f32 %v1447, %v1450
      %s1453 = scalar_lea.vmem %s537, 48
      %1454 = vst.msk [vmem:[%s1453] sm:$0xff] %vm720, %v1452
      %1455 = vrot.lane.b32.xlu0 %v554, 121
      %v1456 = vpop.permute.xlu0 %1455
      %s1457 = vtos %v1456
      %v1458 = vstv %s1457
      %v1460 = vmul.f32 %v1458, %v546
      %1461 = vrot.lane.b32.xlu0 %v959, 121
      %v1462 = vpop.permute.xlu0 %1461
      %s1463 = vtos %v1462
      %v1464 = vstv %s1463
      %v1466 = vmul.f32 %v1464, %v547
      %v1467 = vadd.f32 %v1460, %v1466
      %1468 = vrot.lane.b32.xlu0 %v965, 121
      %v1469 = vpop.permute.xlu0 %1468
      %s1470 = vtos %v1469
      %v1471 = vstv %s1470
      %v1473 = vmul.f32 %v1471, %v548
      %v1474 = vadd.f32 %v1467, %v1473
      %1475 = vrot.lane.b32.xlu0 %v971, 121
      %v1476 = vpop.permute.xlu0 %1475
      %s1477 = vtos %v1476
      %v1478 = vstv %s1477
      %v1480 = vmul.f32 %v1478, %v549
      %v1481 = vadd.f32 %v1474, %v1480
      %1482 = vrot.lane.b32.xlu0 %v977, 121
      %v1483 = vpop.permute.xlu0 %1482
      %s1484 = vtos %v1483
      %v1485 = vstv %s1484
      %v1487 = vmul.f32 %v1485, %v550
      %v1488 = vadd.f32 %v1481, %v1487
      %1489 = vrot.lane.b32.xlu0 %v983, 121
      %v1490 = vpop.permute.xlu0 %1489
      %s1491 = vtos %v1490
      %v1492 = vstv %s1491
      %v1494 = vmul.f32 %v1492, %v551
      %v1495 = vadd.f32 %v1488, %v1494
      %1496 = vrot.lane.b32.xlu0 %v989, 121
      %v1497 = vpop.permute.xlu0 %1496
      %s1498 = vtos %v1497
      %v1499 = vstv %s1498
      %v1501 = vmul.f32 %v1499, %v552
      %v1502 = vadd.f32 %v1495, %v1501
      %1503 = vrot.lane.b32.xlu0 %v995, 121
      %v1504 = vpop.permute.xlu0 %1503
      %s1505 = vtos %v1504
      %v1506 = vstv %s1505
      %v1508 = vmul.f32 %v1506, %v553
      %v1509 = vadd.f32 %v1502, %v1508
      %v1510 = vlaneseq
      %v1511 = vshrl.u32 %v1510, 7
      %v1512 = vsub.s32 7, %v1511
      %v1513 = vrot.slane %v879, %v1512
      %v1514 = vadd.f32 %v1509, %v1513
      %1515 = vset.pattern.permute.xlu0 7
      %1516 = vperm.xlu0 %1515, %v951
      %v1517 = vpop.permute.xlu0 %1516
      %v1519 = vadd.f32 %v1514, %v1517
      %1520 = vset.pattern.permute.xlu0 7
      %1521 = vperm.xlu0 %1520, %v1016
      %v1522 = vpop.permute.xlu0 %1521
      %v1524 = vadd.f32 %v1519, %v1522
      %s1525 = scalar_lea.vmem %s537, 56
      %1526 = vst.msk [vmem:[%s1525] sm:$0xff] %vm720, %v1524
      %p1527 = scmp.lt.s32.totalorder %s27, 1
      %s1528 = scalar_select %p1527, %s27, 1
      %p1529 = scmp.lt.s32.totalorder %s28, 1
      %s1530 = scalar_select %p1529, %s28, 1
      %s1531 = smul.addr %s1530, 8
      %s1532 = smul.addr %s1528, 16
      %s1533 = sadd.s32 %s1531, %s1532
      %s1534 = smul.addr %s1533, 8
      %s1535 = scalar_lea.vmem %s10, %s1534
      %p1536 = scmp.lt.s32.totalorder %s27, 1
      %s1537 = scalar_select %p1536, %s27, 1
      %p1538 = scmp.lt.s32.totalorder %s28, 1
      %s1539 = scalar_select %p1538, %s28, 1
      %s1540 = smul.addr %s1537, 2
      %s1541 = sadd.s32 %s1539, %s1540
      %s1542 = smul.addr %s1541, 8
      %s1543 = scalar_lea.vmem %s11, %s1542
      // Predicated region
      $region61: #{_lambda_.4} parent=59 // pred_check
        %p1544 = pneg %p299
      $region62: #{_lambda_.4} parent=59 // pred_check_branch
        %1546 = sbr.rel (%p1544) target = $region64
      $region63: #{_lambda_.4} parent=59 // pred_region
        _
      $region64: #{_lambda_.4} parent=59 // pred_fallthru
        _
      // Predicated region
      $region65: #{_lambda_.4} parent=59 // pred_check
        %p1547 = pneg %p327
      $region66: #{_lambda_.4} parent=59 // pred_check_branch
        %1549 = sbr.rel (%p1547) target = $region68
      $region67: #{_lambda_.4} parent=59 // pred_region
        _
      $region68: #{_lambda_.4} parent=59 // pred_fallthru
        _
    $region60: #{_lambda_.4} parent=5 // pred_fallthru
      _
    %p1550 = scmp.le.s32.totalorder 2, %s18
    // Predicated region
    $region69: #{_lambda_.4} parent=5 // pred_check
      %p1551 = pneg %p1550
    $region70: #{_lambda_.4} parent=5 // pred_check_branch
      %1553 = sbr.rel (%p1551) target = $region72
    $region71: #{_lambda_.4} parent=5 // pred_region
      %s1554 = ssub.s32 %s18, 2
      // Predicated region
      $region73: #{_lambda_.4} parent=71 // pred_check
        %p1555 = pneg %p305
      $region74: #{_lambda_.4} parent=71 // pred_check_branch
        %1557 = sbr.rel (%p1555) target = $region76
      $region75: #{_lambda_.4} parent=71 // pred_region
        %p1558 = scmp.lt.s32.totalorder %s29, 1
        %s1559 = scalar_select %p1558, %s29, 1
        %p1560 = scmp.lt.s32.totalorder %s30, 1
        %s1561 = scalar_select %p1560, %s30, 1
        %s1562 = smul.addr %s1561, 8
        %s1563 = smul.addr %s1559, 16
        %s1564 = sadd.s32 %s1562, %s1563
        %s1565 = smul.addr %s1564, 8
        %s1566 = scalar_lea.vmem %s10, %s1565
      $region76: #{_lambda_.4} parent=71 // pred_fallthru
        _
      // Predicated region
      $region77: #{_lambda_.4} parent=71 // pred_check
        %p1567 = pneg %p333
      $region78: #{_lambda_.4} parent=71 // pred_check_branch
        %1569 = sbr.rel (%p1567) target = $region80
      $region79: #{_lambda_.4} parent=71 // pred_region
        %p1570 = scmp.lt.s32.totalorder %s29, 1
        %s1571 = scalar_select %p1570, %s29, 1
        %p1572 = scmp.lt.s32.totalorder %s30, 1
        %s1573 = scalar_select %p1572, %s30, 1
        %s1574 = smul.addr %s1571, 2
        %s1575 = sadd.s32 %s1573, %s1574
        %s1576 = smul.addr %s1575, 8
        %s1577 = scalar_lea.vmem %s11, %s1576
      $region80: #{_lambda_.4} parent=71 // pred_fallthru
        _
    $region72: #{_lambda_.4} parent=5 // pred_fallthru
      _
  $region6: #{_lambda_.4} parent=0 // loop_footer
    %s22 = sadd.s32 1, %s18
  $region7: #{_lambda_.4} parent=0 // loop_footer_branch
    %17 = sbr.rel target = $region3
  $region8: #{_lambda_.4} parent=0 // loop_exit
    _

</llo_original>
